<compile_context>
chip_gen: v5e
topology: v5e:2x2
jax: 0.10.0
libtpu: 0.0.40
codegen_flags: <defaults>
</compile_context>

<pallas_src>
import functools

import jax
import jax.numpy as jnp
from jax import lax
from jax.experimental import pallas as pl
from jax.experimental.pallas import tpu as pltpu


def _resblock_kernel(x_ref, mask_ref, w1_ref, w2_ref, w3_ref, wsc_ref,
                     b1_ref, b2_ref, b3_ref, o_ref, pad_ref,
                     *, H, W, align, extra):
    """One image per grid step.  Flat padded layout: (H+2)*(W+2) rows x C."""
    Wp2 = W + 2
    L = H * Wp2                      # rows of the flattened conv-output grid
    Lp = (H + 2) * Wp2               # rows of the flattened padded image
    Hp = (H + 2) // 2                # pooled height  (== H//2 + 1)
    Wpool = (W + 2) // 2             # pooled width   (== W//2 + 1)
    Cout = o_ref.shape[-1]
    base = align                     # sublane-alignment offset of the scratch
    f32 = jnp.float32

    mask = mask_ref[...]             # (L, 1) f32: 1 on valid columns, 0 on junk
    mask_b = mask > 0.5

    def im2col(window):
        # 9 contiguous windows of the flat padded image (tap (ky,kx) starts at
        # ky*(W+2)+kx), concatenated on the lane/channel axis -> (L, 9*C).
        return jnp.concatenate(
            [window(ky * Wp2 + kx) for ky in range(3) for kx in range(3)],
            axis=1)

    x_win = lambda off: x_ref[0, pl.ds(off, L), :]           # input (bf16)
    p_win = lambda off: pad_ref[pl.ds(base + off, L), :]     # scratch (bf16)

    # Zero only the border frame of the scratch padded image (top row + (1,0);
    # bottom row + EXTRA tail rows).  The interior is fully overwritten by the
    # masked hand-off stores below; the masked stores also keep the left/right
    # border columns at zero.
    pad_ref[pl.ds(base, W + 3), :] = jnp.zeros((W + 3, Cout), jnp.bfloat16)
    pad_ref[pl.ds(base + Lp - Wp2, Wp2 + extra), :] = jnp.zeros(
        (Wp2 + extra, Cout), jnp.bfloat16)

    def store_padded(y):
        # Single sublane-aligned store of the conv output into the interior of
        # the padded scratch image (junk columns are zeroed -> they become the
        # zero padding border of the next conv).
        pad_ref[pl.ds(base + W + 3, L), :] = (y * mask).astype(jnp.bfloat16)

    # conv1 + bn1 (BN scale folded into w1, additive shift b1)
    y = jnp.dot(im2col(x_win), w1_ref[...],
                preferred_element_type=f32) + b1_ref[...]
    store_padded(y)

    # conv2 + bn2
    y = jnp.dot(im2col(p_win), w2_ref[...],
                preferred_element_type=f32) + b2_ref[...]
    store_padded(y)

    # conv3 + bn3
    y = jnp.dot(im2col(p_win), w3_ref[...],
                preferred_element_type=f32) + b3_ref[...]

    # 1x1 shortcut conv (= center-tap window of the input) + residual add,
    # computed right before the add to keep its live range short.
    sc = jnp.dot(x_win(Wp2 + 1), wsc_ref[...], preferred_element_type=f32)
    r = y + sc                                               # (L, Cout) f32

    # MaxPool2d(kernel=2, stride=2, padding=1) with -inf padding, vectorized.
    r = jnp.where(mask_b, r, -jnp.inf)                       # junk cols -> -inf
    pool_in = jnp.concatenate(
        [jnp.full((W + 3, Cout), -jnp.inf, f32),
         r,
         jnp.full((W + 1, Cout), -jnp.inf, f32)], axis=0)    # (Lp, Cout)
    v = pool_in.reshape(Hp, 2, Wp2, Cout)
    rowmax = jnp.maximum(v[:, 0], v[:, 1])                   # (Hp, W+2, Cout)
    c = rowmax.reshape(Hp, Wpool, 2, Cout)
    o_ref[0] = jnp.maximum(c[:, :, 0, :], c[:, :, 1, :]).astype(o_ref.dtype)

    # nn.Dropout(0.1): identity in eval mode (no-op).
    # TODO(synk): train-mode dropout / batch-statistics BatchNorm not implemented.


def resblock_forward(x_nchw, params):
    """ResBlock forward via the Pallas kernel.  Input/output are NCHW."""
    N, Cin, H, W = x_nchw.shape
    Cout = params["w1"].shape[0]
    assert H % 2 == 0 and W % 2 == 0, "even spatial dims expected"
    Wp2 = W + 2
    L = H * Wp2
    Lp = (H + 2) * Wp2
    EXTRA = 8                         # tail rows so the last im2col windows stay in-bounds
    ALIGN = (-(W + 3)) % 16           # makes the interior hand-off store sublane-aligned
    Hp, Wp = H // 2 + 1, W // 2 + 1
    eps = 1e-5

    # ---- host-side layout plumbing (pure XLA, outside the kernel) ----------
    # NCHW -> NHWC, zero-pad spatial by 1, flatten (H+2, W+2), cast to bf16.
    x_nhwc = jnp.transpose(x_nchw, (0, 2, 3, 1)).astype(jnp.float32)
    x_pad = jnp.pad(x_nhwc, ((0, 0), (1, 1), (1, 1), (0, 0)))
    x_flat = x_pad.reshape(N, Lp, Cin)
    x_flat = jnp.pad(x_flat, ((0, 0), (0, EXTRA), (0, 0))).astype(jnp.bfloat16)

    def fold_w(w, g, v):
        # (Cout, Cin, 3, 3) -> (9*Cin, Cout), tap-major / channel-minor rows,
        # with the eval-mode BN scale folded into the output channels.
        s = g / jnp.sqrt(v + eps)
        wt = jnp.transpose(w, (2, 3, 1, 0)).reshape(9 * w.shape[1], w.shape[0])
        return (wt * s[None, :]).astype(jnp.bfloat16)

    def bn_shift(g, b, m, v):
        s = g / jnp.sqrt(v + eps)
        return (b - m * s).reshape(1, Cout).astype(jnp.float32)

    w1 = fold_w(params["w1"], params["g1"], params["v1"])
    w2 = fold_w(params["w2"], params["g2"], params["v2"])
    w3 = fold_w(params["w3"], params["g3"], params["v3"])
    wsc = params["wsc"][:, :, 0, 0].T.astype(jnp.bfloat16)   # (Cin, Cout)
    b1 = bn_shift(params["g1"], params["b1"], params["m1"], params["v1"])
    b2 = bn_shift(params["g2"], params["b2"], params["m2"], params["v2"])
    b3 = bn_shift(params["g3"], params["b3"], params["m3"], params["v3"])

    # 1 on valid output columns of the flattened (H, W+2) grid, 0 on the junk.
    mask = (jnp.arange(L, dtype=jnp.int32) % Wp2 < W).astype(jnp.float32)
    mask = mask.reshape(L, 1)

    kernel = functools.partial(_resblock_kernel, H=H, W=W,
                               align=ALIGN, extra=EXTRA)

    out_nhwc = pl.pallas_call(
        kernel,
        out_shape=jax.ShapeDtypeStruct((N, Hp, Wp, Cout), jnp.float32),
        grid_spec=pltpu.PrefetchScalarGridSpec(
            num_scalar_prefetch=0,
            grid=(N,),
            in_specs=[
                pl.BlockSpec((1, Lp + EXTRA, Cin), lambda n: (n, 0, 0)),  # x (flat, padded)
                pl.BlockSpec((L, 1), lambda n: (0, 0)),                   # column mask
                pl.BlockSpec((9 * Cin, Cout), lambda n: (0, 0)),          # w1 (BN-folded)
                pl.BlockSpec((9 * Cout, Cout), lambda n: (0, 0)),         # w2
                pl.BlockSpec((9 * Cout, Cout), lambda n: (0, 0)),         # w3
                pl.BlockSpec((Cin, Cout), lambda n: (0, 0)),              # shortcut 1x1
                pl.BlockSpec((1, Cout), lambda n: (0, 0)),                # bn1 shift
                pl.BlockSpec((1, Cout), lambda n: (0, 0)),                # bn2 shift
                pl.BlockSpec((1, Cout), lambda n: (0, 0)),                # bn3 shift
            ],
            out_specs=pl.BlockSpec((1, Hp, Wp, Cout), lambda n: (n, 0, 0, 0)),
            scratch_shapes=[
                # single flat padded activation buffer, reused by conv2/conv3
                pltpu.VMEM((ALIGN + Lp + EXTRA, Cout), jnp.bfloat16),
            ],
        ),
        compiler_params=pltpu.CompilerParams(
            dimension_semantics=("parallel",),      # shard batch across TCs (v7x)
            vmem_limit_bytes=48 * 1024 * 1024,      # fits v7x's 64 MiB physical VMEM
        ),
    )(x_flat, mask, w1, w2, w3, wsc, b1, b2, b3)

    return jnp.transpose(out_nhwc, (0, 3, 1, 2))             # back to NCHW


def resblock_reference(x_nchw, params):
    """Pure-JAX f32 reference (same eval-mode semantics) for verification."""
    eps = 1e-5
    x = jnp.transpose(x_nchw, (0, 2, 3, 1)).astype(jnp.float32)  # NHWC

    def conv(x, w, pad):
        w_hwio = jnp.transpose(w, (2, 3, 1, 0))
        return lax.conv_general_dilated(
            x, w_hwio, (1, 1), ((pad, pad), (pad, pad)),
            dimension_numbers=("NHWC", "HWIO", "NHWC"))

    def bn(x, g, b, m, v):
        return (x - m) / jnp.sqrt(v + eps) * g + b

    sc = conv(x, params["wsc"], 0)
    y = bn(conv(x, params["w1"], 1), params["g1"], params["b1"], params["m1"], params["v1"])
    y = bn(conv(y, params["w2"], 1), params["g2"], params["b2"], params["m2"], params["v2"])
    y = bn(conv(y, params["w3"], 1), params["g3"], params["b3"], params["m3"], params["v3"])
    y = y + sc
    y = lax.reduce_window(y, -jnp.inf, lax.max, (1, 2, 2, 1), (1, 2, 2, 1),
                          ((0, 0), (1, 1), (1, 1), (0, 0)))
    return jnp.transpose(y, (0, 3, 1, 2))


if __name__ == "__main__":
    key = jax.random.PRNGKey(0)
    N, Cin, Cout, H, W = 2, 4, 8, 16, 16
    ks = jax.random.split(key, 17)

    def bn_params(k0, k1, k2, k3):
        return (jax.random.uniform(k0, (Cout,), jnp.float32, 0.5, 1.5),   # gamma
                0.1 * jax.random.normal(k1, (Cout,), jnp.float32),        # beta
                0.1 * jax.random.normal(k2, (Cout,), jnp.float32),        # running_mean
                jax.random.uniform(k3, (Cout,), jnp.float32, 0.5, 1.5))   # running_var

    g1, b1, m1, v1 = bn_params(ks[4], ks[5], ks[6], ks[7])
    g2, b2, m2, v2 = bn_params(ks[8], ks[9], ks[10], ks[11])
    g3, b3, m3, v3 = bn_params(ks[12], ks[13], ks[14], ks[15])

    params = {
        "w1": 0.1 * jax.random.normal(ks[0], (Cout, Cin, 3, 3), jnp.float32),
        "w2": 0.1 * jax.random.normal(ks[1], (Cout, Cout, 3, 3), jnp.float32),
        "w3": 0.1 * jax.random.normal(ks[2], (Cout, Cout, 3, 3), jnp.float32),
        "wsc": 0.1 * jax.random.normal(ks[3], (Cout, Cin, 1, 1), jnp.float32),
        "g1": g1, "b1": b1, "m1": m1, "v1": v1,
        "g2": g2, "b2": b2, "m2": m2, "v2": v2,
        "g3": g3, "b3": b3, "m3": m3, "v3": v3,
    }
    x = jax.random.normal(ks[16], (N, Cin, H, W), jnp.float32)

    out = jax.block_until_ready(resblock_forward(x, params))
    ref = jax.block_until_ready(resblock_reference(x, params))

    assert out.shape == (N, Cout, 9, 9), out.shape
    err = float(jnp.max(jnp.abs(out - ref)))
    # bf16 matmul operands with f32 accumulation -> loosen the f32 tolerance.
    assert err < 6e-2, f"max abs err {err}"
    print("KERNEL_OK")
</pallas_src>

<mosaic_0001>
module attributes {stable_mosaic.version = 11 : i64} {
  func.func @_resblock_kernel(%arg0: i32, %arg1: memref<1x332x4xbf16, #tpu.memory_space<vmem>>, %arg2: memref<288x1xf32, #tpu.memory_space<vmem>>, %arg3: memref<36x8xbf16, #tpu.memory_space<vmem>>, %arg4: memref<72x8xbf16, #tpu.memory_space<vmem>>, %arg5: memref<72x8xbf16, #tpu.memory_space<vmem>>, %arg6: memref<4x8xbf16, #tpu.memory_space<vmem>>, %arg7: memref<1x8xf32, #tpu.memory_space<vmem>>, %arg8: memref<1x8xf32, #tpu.memory_space<vmem>>, %arg9: memref<1x8xf32, #tpu.memory_space<vmem>>, %arg10: memref<1x9x9x8xf32, #tpu.memory_space<vmem>>, %arg11: memref<345x8xbf16, #tpu.memory_space<vmem>>) attributes {dimension_semantics = [#tpu.dimension_semantics<parallel>], iteration_bounds = array<i64: 2>, scalar_prefetch = 0 : i64, scratch_operands = 1 : i64, tpu.core_type = #tpu.core_type<tc>, window_params = [{transform_indices = @transform_0, window_bounds = array<i64: 1, 332, 4>}, {pipeline_mode = #tpu.pipeline_mode<synchronous>, transform_indices = @transform_1, window_bounds = array<i64: 288, 1>}, {pipeline_mode = #tpu.pipeline_mode<synchronous>, transform_indices = @transform_2, window_bounds = array<i64: 36, 8>}, {pipeline_mode = #tpu.pipeline_mode<synchronous>, transform_indices = @transform_3, window_bounds = array<i64: 72, 8>}, {pipeline_mode = #tpu.pipeline_mode<synchronous>, transform_indices = @transform_4, window_bounds = array<i64: 72, 8>}, {pipeline_mode = #tpu.pipeline_mode<synchronous>, transform_indices = @transform_5, window_bounds = array<i64: 4, 8>}, {pipeline_mode = #tpu.pipeline_mode<synchronous>, transform_indices = @transform_6, window_bounds = array<i64: 1, 8>}, {pipeline_mode = #tpu.pipeline_mode<synchronous>, transform_indices = @transform_7, window_bounds = array<i64: 1, 8>}, {pipeline_mode = #tpu.pipeline_mode<synchronous>, transform_indices = @transform_8, window_bounds = array<i64: 1, 8>}, {transform_indices = @transform_9, window_bounds = array<i64: 1, 9, 9, 8>}]} {
    %c0 = arith.constant 0 : index
    %c0_0 = arith.constant 0 : index
    %0 = vector.load %arg2[%c0, %c0_0] : memref<288x1xf32, #tpu.memory_space<vmem>>, vector<288x1xf32>
    %cst = arith.constant 5.000000e-01 : f32
    %1 = vector.broadcast %cst : f32 to vector<288x1xf32>
    %2 = arith.cmpf ogt, %0, %1 : vector<288x1xf32>
    %cst_1 = arith.constant 0.000000e+00 : bf16
    %3 = vector.broadcast %cst_1 : bf16 to vector<19x8xbf16>
    %c13 = arith.constant 13 : index
    %c0_2 = arith.constant 0 : index
    %4 = vector.load %arg11[%c13, %c0_2] : memref<345x8xbf16, #tpu.memory_space<vmem>>, vector<19x8xbf16>
    tpu.vector_store %arg11[%c13, %c0_2], %3 {strides = array<i32>} : memref<345x8xbf16, #tpu.memory_space<vmem>>, vector<19x8xbf16>,
    %cst_3 = arith.constant 0.000000e+00 : bf16
    %5 = vector.broadcast %cst_3 : bf16 to vector<26x8xbf16>
    %c319 = arith.constant 319 : index
    %c0_4 = arith.constant 0 : index
    %6 = vector.load %arg11[%c319, %c0_4] : memref<345x8xbf16, #tpu.memory_space<vmem>>, vector<26x8xbf16>
    tpu.vector_store %arg11[%c319, %c0_4], %5 {strides = array<i32>} : memref<345x8xbf16, #tpu.memory_space<vmem>>, vector<26x8xbf16>,
    %c0_5 = arith.constant 0 : index
    %c0_6 = arith.constant 0 : index
    %c0_7 = arith.constant 0 : index
    %7 = vector.load %arg1[%c0_5, %c0_6, %c0_7] : memref<1x332x4xbf16, #tpu.memory_space<vmem>>, vector<1x288x4xbf16>
    %8 = vector.shape_cast %7 : vector<1x288x4xbf16> to vector<288x4xbf16>
    %c0_8 = arith.constant 0 : index
    %c1 = arith.constant 1 : index
    %c0_9 = arith.constant 0 : index
    %9 = vector.load %arg1[%c0_8, %c1, %c0_9] : memref<1x332x4xbf16, #tpu.memory_space<vmem>>, vector<1x288x4xbf16>
    %10 = vector.shape_cast %9 : vector<1x288x4xbf16> to vector<288x4xbf16>
    %c0_10 = arith.constant 0 : index
    %c2 = arith.constant 2 : index
    %c0_11 = arith.constant 0 : index
    %11 = vector.load %arg1[%c0_10, %c2, %c0_11] : memref<1x332x4xbf16, #tpu.memory_space<vmem>>, vector<1x288x4xbf16>
    %12 = vector.shape_cast %11 : vector<1x288x4xbf16> to vector<288x4xbf16>
    %c0_12 = arith.constant 0 : index
    %c18 = arith.constant 18 : index
    %c0_13 = arith.constant 0 : index
    %13 = vector.load %arg1[%c0_12, %c18, %c0_13] : memref<1x332x4xbf16, #tpu.memory_space<vmem>>, vector<1x288x4xbf16>
    %14 = vector.shape_cast %13 : vector<1x288x4xbf16> to vector<288x4xbf16>
    %c0_14 = arith.constant 0 : index
    %c19 = arith.constant 19 : index
    %c0_15 = arith.constant 0 : index
    %15 = vector.load %arg1[%c0_14, %c19, %c0_15] : memref<1x332x4xbf16, #tpu.memory_space<vmem>>, vector<1x288x4xbf16>
    %16 = vector.shape_cast %15 : vector<1x288x4xbf16> to vector<288x4xbf16>
    %c0_16 = arith.constant 0 : index
    %c20 = arith.constant 20 : index
    %c0_17 = arith.constant 0 : index
    %17 = vector.load %arg1[%c0_16, %c20, %c0_17] : memref<1x332x4xbf16, #tpu.memory_space<vmem>>, vector<1x288x4xbf16>
    %18 = vector.shape_cast %17 : vector<1x288x4xbf16> to vector<288x4xbf16>
    %c0_18 = arith.constant 0 : index
    %c36 = arith.constant 36 : index
    %c0_19 = arith.constant 0 : index
    %19 = vector.load %arg1[%c0_18, %c36, %c0_19] : memref<1x332x4xbf16, #tpu.memory_space<vmem>>, vector<1x288x4xbf16>
    %20 = vector.shape_cast %19 : vector<1x288x4xbf16> to vector<288x4xbf16>
    %c0_20 = arith.constant 0 : index
    %c37 = arith.constant 37 : index
    %c0_21 = arith.constant 0 : index
    %21 = vector.load %arg1[%c0_20, %c37, %c0_21] : memref<1x332x4xbf16, #tpu.memory_space<vmem>>, vector<1x288x4xbf16>
    %22 = vector.shape_cast %21 : vector<1x288x4xbf16> to vector<288x4xbf16>
    %c0_22 = arith.constant 0 : index
    %c38 = arith.constant 38 : index
    %c0_23 = arith.constant 0 : index
    %23 = vector.load %arg1[%c0_22, %c38, %c0_23] : memref<1x332x4xbf16, #tpu.memory_space<vmem>>, vector<1x288x4xbf16>
    %24 = vector.shape_cast %23 : vector<1x288x4xbf16> to vector<288x4xbf16>
    %25 = tpu.concatenate %8, %10, %12, %14, %16, %18, %20, %22, %24 in 1 : vector<288x4xbf16>, vector<288x4xbf16>, vector<288x4xbf16>, vector<288x4xbf16>, vector<288x4xbf16>, vector<288x4xbf16>, vector<288x4xbf16>, vector<288x4xbf16>, vector<288x4xbf16> -> vector<288x36xbf16>
    %c0_24 = arith.constant 0 : index
    %c0_25 = arith.constant 0 : index
    %26 = vector.load %arg3[%c0_24, %c0_25] : memref<36x8xbf16, #tpu.memory_space<vmem>>, vector<36x8xbf16>
    %cst_26 = arith.constant dense<0.000000e+00> : vector<288x8xf32>
    %27 = tpu.matmul %25, %26, %cst_26 {dimension_numbers = #tpu.dot_dimension_numbers<[1], [0], [0], [1], [0, 0, 1, 1], [], []>} : vector<288x36xbf16>, vector<36x8xbf16>, vector<288x8xf32> -> vector<288x8xf32>
    %c0_27 = arith.constant 0 : index
    %c0_28 = arith.constant 0 : index
    %28 = vector.load %arg7[%c0_27, %c0_28] : memref<1x8xf32, #tpu.memory_space<vmem>>, vector<1x8xf32>
    %29 = vector.broadcast %28 : vector<1x8xf32> to vector<288x8xf32>
    %30 = arith.addf %27, %29 : vector<288x8xf32>
    %31 = vector.broadcast %0 : vector<288x1xf32> to vector<288x8xf32>
    %32 = arith.mulf %30, %31 : vector<288x8xf32>
    %33 = arith.truncf %32 : vector<288x8xf32> to vector<288x8xbf16>
    %c32 = arith.constant 32 : index
    %c0_29 = arith.constant 0 : index
    %34 = vector.load %arg11[%c32, %c0_29] : memref<345x8xbf16, #tpu.memory_space<vmem>>, vector<288x8xbf16>
    tpu.vector_store %arg11[%c32, %c0_29], %33 {strides = array<i32>} : memref<345x8xbf16, #tpu.memory_space<vmem>>, vector<288x8xbf16>,
    %c13_30 = arith.constant 13 : index
    %c0_31 = arith.constant 0 : index
    %35 = vector.load %arg11[%c13_30, %c0_31] : memref<345x8xbf16, #tpu.memory_space<vmem>>, vector<288x8xbf16>
    %c14 = arith.constant 14 : index
    %c0_32 = arith.constant 0 : index
    %36 = vector.load %arg11[%c14, %c0_32] : memref<345x8xbf16, #tpu.memory_space<vmem>>, vector<288x8xbf16>
    %c15 = arith.constant 15 : index
    %c0_33 = arith.constant 0 : index
    %37 = vector.load %arg11[%c15, %c0_33] : memref<345x8xbf16, #tpu.memory_space<vmem>>, vector<288x8xbf16>
    %c31 = arith.constant 31 : index
    %c0_34 = arith.constant 0 : index
    %38 = vector.load %arg11[%c31, %c0_34] : memref<345x8xbf16, #tpu.memory_space<vmem>>, vector<288x8xbf16>
    %c32_35 = arith.constant 32 : index
    %c0_36 = arith.constant 0 : index
    %39 = vector.load %arg11[%c32_35, %c0_36] : memref<345x8xbf16, #tpu.memory_space<vmem>>, vector<288x8xbf16>
    %c33 = arith.constant 33 : index
    %c0_37 = arith.constant 0 : index
    %40 = vector.load %arg11[%c33, %c0_37] : memref<345x8xbf16, #tpu.memory_space<vmem>>, vector<288x8xbf16>
    %c49 = arith.constant 49 : index
    %c0_38 = arith.constant 0 : index
    %41 = vector.load %arg11[%c49, %c0_38] : memref<345x8xbf16, #tpu.memory_space<vmem>>, vector<288x8xbf16>
    %c50 = arith.constant 50 : index
    %c0_39 = arith.constant 0 : index
    %42 = vector.load %arg11[%c50, %c0_39] : memref<345x8xbf16, #tpu.memory_space<vmem>>, vector<288x8xbf16>
    %c51 = arith.constant 51 : index
    %c0_40 = arith.constant 0 : index
    %43 = vector.load %arg11[%c51, %c0_40] : memref<345x8xbf16, #tpu.memory_space<vmem>>, vector<288x8xbf16>
    %44 = tpu.concatenate %35, %36, %37, %38, %39, %40, %41, %42, %43 in 1 : vector<288x8xbf16>, vector<288x8xbf16>, vector<288x8xbf16>, vector<288x8xbf16>, vector<288x8xbf16>, vector<288x8xbf16>, vector<288x8xbf16>, vector<288x8xbf16>, vector<288x8xbf16> -> vector<288x72xbf16>
    %c0_41 = arith.constant 0 : index
    %c0_42 = arith.constant 0 : index
    %45 = vector.load %arg4[%c0_41, %c0_42] : memref<72x8xbf16, #tpu.memory_space<vmem>>, vector<72x8xbf16>
    %cst_43 = arith.constant dense<0.000000e+00> : vector<288x8xf32>
    %46 = tpu.matmul %44, %45, %cst_43 {dimension_numbers = #tpu.dot_dimension_numbers<[1], [0], [0], [1], [0, 0, 1, 1], [], []>} : vector<288x72xbf16>, vector<72x8xbf16>, vector<288x8xf32> -> vector<288x8xf32>
    %c0_44 = arith.constant 0 : index
    %c0_45 = arith.constant 0 : index
    %47 = vector.load %arg8[%c0_44, %c0_45] : memref<1x8xf32, #tpu.memory_space<vmem>>, vector<1x8xf32>
    %48 = vector.broadcast %47 : vector<1x8xf32> to vector<288x8xf32>
    %49 = arith.addf %46, %48 : vector<288x8xf32>
    %50 = vector.broadcast %0 : vector<288x1xf32> to vector<288x8xf32>
    %51 = arith.mulf %49, %50 : vector<288x8xf32>
    %52 = arith.truncf %51 : vector<288x8xf32> to vector<288x8xbf16>
    %c32_46 = arith.constant 32 : index
    %c0_47 = arith.constant 0 : index
    %53 = vector.load %arg11[%c32_46, %c0_47] : memref<345x8xbf16, #tpu.memory_space<vmem>>, vector<288x8xbf16>
    tpu.vector_store %arg11[%c32_46, %c0_47], %52 {strides = array<i32>} : memref<345x8xbf16, #tpu.memory_space<vmem>>, vector<288x8xbf16>,
    %c13_48 = arith.constant 13 : index
    %c0_49 = arith.constant 0 : index
    %54 = vector.load %arg11[%c13_48, %c0_49] : memref<345x8xbf16, #tpu.memory_space<vmem>>, vector<288x8xbf16>
    %c14_50 = arith.constant 14 : index
    %c0_51 = arith.constant 0 : index
    %55 = vector.load %arg11[%c14_50, %c0_51] : memref<345x8xbf16, #tpu.memory_space<vmem>>, vector<288x8xbf16>
    %c15_52 = arith.constant 15 : index
    %c0_53 = arith.constant 0 : index
    %56 = vector.load %arg11[%c15_52, %c0_53] : memref<345x8xbf16, #tpu.memory_space<vmem>>, vector<288x8xbf16>
    %c31_54 = arith.constant 31 : index
    %c0_55 = arith.constant 0 : index
    %57 = vector.load %arg11[%c31_54, %c0_55] : memref<345x8xbf16, #tpu.memory_space<vmem>>, vector<288x8xbf16>
    %c32_56 = arith.constant 32 : index
    %c0_57 = arith.constant 0 : index
    %58 = vector.load %arg11[%c32_56, %c0_57] : memref<345x8xbf16, #tpu.memory_space<vmem>>, vector<288x8xbf16>
    %c33_58 = arith.constant 33 : index
    %c0_59 = arith.constant 0 : index
    %59 = vector.load %arg11[%c33_58, %c0_59] : memref<345x8xbf16, #tpu.memory_space<vmem>>, vector<288x8xbf16>
    %c49_60 = arith.constant 49 : index
    %c0_61 = arith.constant 0 : index
    %60 = vector.load %arg11[%c49_60, %c0_61] : memref<345x8xbf16, #tpu.memory_space<vmem>>, vector<288x8xbf16>
    %c50_62 = arith.constant 50 : index
    %c0_63 = arith.constant 0 : index
    %61 = vector.load %arg11[%c50_62, %c0_63] : memref<345x8xbf16, #tpu.memory_space<vmem>>, vector<288x8xbf16>
    %c51_64 = arith.constant 51 : index
    %c0_65 = arith.constant 0 : index
    %62 = vector.load %arg11[%c51_64, %c0_65] : memref<345x8xbf16, #tpu.memory_space<vmem>>, vector<288x8xbf16>
    %63 = tpu.concatenate %54, %55, %56, %57, %58, %59, %60, %61, %62 in 1 : vector<288x8xbf16>, vector<288x8xbf16>, vector<288x8xbf16>, vector<288x8xbf16>, vector<288x8xbf16>, vector<288x8xbf16>, vector<288x8xbf16>, vector<288x8xbf16>, vector<288x8xbf16> -> vector<288x72xbf16>
    %c0_66 = arith.constant 0 : index
    %c0_67 = arith.constant 0 : index
    %64 = vector.load %arg5[%c0_66, %c0_67] : memref<72x8xbf16, #tpu.memory_space<vmem>>, vector<72x8xbf16>
    %cst_68 = arith.constant dense<0.000000e+00> : vector<288x8xf32>
    %65 = tpu.matmul %63, %64, %cst_68 {dimension_numbers = #tpu.dot_dimension_numbers<[1], [0], [0], [1], [0, 0, 1, 1], [], []>} : vector<288x72xbf16>, vector<72x8xbf16>, vector<288x8xf32> -> vector<288x8xf32>
    %c0_69 = arith.constant 0 : index
    %c0_70 = arith.constant 0 : index
    %66 = vector.load %arg9[%c0_69, %c0_70] : memref<1x8xf32, #tpu.memory_space<vmem>>, vector<1x8xf32>
    %67 = vector.broadcast %66 : vector<1x8xf32> to vector<288x8xf32>
    %68 = arith.addf %65, %67 : vector<288x8xf32>
    %c0_71 = arith.constant 0 : index
    %c19_72 = arith.constant 19 : index
    %c0_73 = arith.constant 0 : index
    %69 = vector.load %arg1[%c0_71, %c19_72, %c0_73] : memref<1x332x4xbf16, #tpu.memory_space<vmem>>, vector<1x288x4xbf16>
    %70 = vector.shape_cast %69 : vector<1x288x4xbf16> to vector<288x4xbf16>
    %c0_74 = arith.constant 0 : index
    %c0_75 = arith.constant 0 : index
    %71 = vector.load %arg6[%c0_74, %c0_75] : memref<4x8xbf16, #tpu.memory_space<vmem>>, vector<4x8xbf16>
    %cst_76 = arith.constant dense<0.000000e+00> : vector<288x8xf32>
    %72 = tpu.matmul %70, %71, %cst_76 {dimension_numbers = #tpu.dot_dimension_numbers<[1], [0], [0], [1], [0, 0, 1, 1], [], []>} : vector<288x4xbf16>, vector<4x8xbf16>, vector<288x8xf32> -> vector<288x8xf32>
    %73 = arith.addf %68, %72 : vector<288x8xf32>
    %cst_77 = arith.constant 0xFF800000 : f32
    %74 = vector.shape_cast %2 : vector<288x1xi1> to vector<288x1xi1>
    %75 = vector.broadcast %74 : vector<288x1xi1> to vector<288x8xi1>
    %76 = vector.broadcast %cst_77 : f32 to vector<288x8xf32>
    %77 = arith.select %75, %73, %76 : vector<288x8xi1>, vector<288x8xf32>
    %cst_78 = arith.constant 0xFF800000 : f32
    %78 = vector.broadcast %cst_78 : f32 to vector<19x8xf32>
    %cst_79 = arith.constant 0xFF800000 : f32
    %79 = vector.broadcast %cst_79 : f32 to vector<17x8xf32>
    %80 = tpu.concatenate %78, %77, %79 in 0 : vector<19x8xf32>, vector<288x8xf32>, vector<17x8xf32> -> vector<324x8xf32>
    %81 = vector.shape_cast %80 : vector<324x8xf32> to vector<9x2x18x8xf32>
    %82 = vector.extract_strided_slice %81 {offsets = [0, 0, 0, 0], sizes = [9, 1, 18, 8], strides = [1, 1, 1, 1]} : vector<9x2x18x8xf32> to vector<9x1x18x8xf32>
    %83 = vector.shape_cast %82 : vector<9x1x18x8xf32> to vector<9x18x8xf32>
    %84 = vector.extract_strided_slice %81 {offsets = [0, 1, 0, 0], sizes = [9, 1, 18, 8], strides = [1, 1, 1, 1]} : vector<9x2x18x8xf32> to vector<9x1x18x8xf32>
    %85 = vector.shape_cast %84 : vector<9x1x18x8xf32> to vector<9x18x8xf32>
    %86 = arith.maximumf %83, %85 : vector<9x18x8xf32>
    %87 = vector.shape_cast %86 : vector<9x18x8xf32> to vector<9x9x2x8xf32>
    %88 = vector.extract_strided_slice %87 {offsets = [0, 0, 0, 0], sizes = [9, 9, 1, 8], strides = [1, 1, 1, 1]} : vector<9x9x2x8xf32> to vector<9x9x1x8xf32>
    %89 = vector.shape_cast %88 : vector<9x9x1x8xf32> to vector<9x9x8xf32>
    %90 = vector.extract_strided_slice %87 {offsets = [0, 0, 1, 0], sizes = [9, 9, 1, 8], strides = [1, 1, 1, 1]} : vector<9x9x2x8xf32> to vector<9x9x1x8xf32>
    %91 = vector.shape_cast %90 : vector<9x9x1x8xf32> to vector<9x9x8xf32>
    %92 = arith.maximumf %89, %91 : vector<9x9x8xf32>
    %c0_80 = arith.constant 0 : index
    %c0_81 = arith.constant 0 : index
    %c0_82 = arith.constant 0 : index
    %c0_83 = arith.constant 0 : index
    %93 = vector.load %arg10[%c0_80, %c0_81, %c0_82, %c0_83] : memref<1x9x9x8xf32, #tpu.memory_space<vmem>>, vector<1x9x9x8xf32>
    %94 = vector.shape_cast %93 : vector<1x9x9x8xf32> to vector<9x9x8xf32>
    %95 = vector.shape_cast %92 : vector<9x9x8xf32> to vector<1x9x9x8xf32>
    tpu.vector_store %arg10[%c0_80, %c0_81, %c0_82, %c0_83], %95 {strides = array<i32>} : memref<1x9x9x8xf32, #tpu.memory_space<vmem>>, vector<1x9x9x8xf32>,
    return
  }
  func.func @transform_0(%arg0: i32) -> (i32, i32, i32) {
    %c0_i32 = arith.constant 0 : i32
    %c0_i32_0 = arith.constant 0 : i32
    %c0_i32_1 = arith.constant 0 : i32
    return %arg0, %c0_i32, %c0_i32_0 : i32, i32, i32
  }
  func.func @transform_1(%arg0: i32) -> (i32, i32) {
    %c0_i32 = arith.constant 0 : i32
    %c0_i32_0 = arith.constant 0 : i32
    %c0_i32_1 = arith.constant 0 : i32
    return %c0_i32, %c0_i32_0 : i32, i32
  }
  func.func @transform_2(%arg0: i32) -> (i32, i32) {
    %c0_i32 = arith.constant 0 : i32
    %c0_i32_0 = arith.constant 0 : i32
    %c0_i32_1 = arith.constant 0 : i32
    return %c0_i32, %c0_i32_0 : i32, i32
  }
  func.func @transform_3(%arg0: i32) -> (i32, i32) {
    %c0_i32 = arith.constant 0 : i32
    %c0_i32_0 = arith.constant 0 : i32
    %c0_i32_1 = arith.constant 0 : i32
    return %c0_i32, %c0_i32_0 : i32, i32
  }
  func.func @transform_4(%arg0: i32) -> (i32, i32) {
    %c0_i32 = arith.constant 0 : i32
    %c0_i32_0 = arith.constant 0 : i32
    %c0_i32_1 = arith.constant 0 : i32
    return %c0_i32, %c0_i32_0 : i32, i32
  }
  func.func @transform_5(%arg0: i32) -> (i32, i32) {
    %c0_i32 = arith.constant 0 : i32
    %c0_i32_0 = arith.constant 0 : i32
    %c0_i32_1 = arith.constant 0 : i32
    return %c0_i32, %c0_i32_0 : i32, i32
  }
  func.func @transform_6(%arg0: i32) -> (i32, i32) {
    %c0_i32 = arith.constant 0 : i32
    %c0_i32_0 = arith.constant 0 : i32
    %c0_i32_1 = arith.constant 0 : i32
    return %c0_i32, %c0_i32_0 : i32, i32
  }
  func.func @transform_7(%arg0: i32) -> (i32, i32) {
    %c0_i32 = arith.constant 0 : i32
    %c0_i32_0 = arith.constant 0 : i32
    %c0_i32_1 = arith.constant 0 : i32
    return %c0_i32, %c0_i32_0 : i32, i32
  }
  func.func @transform_8(%arg0: i32) -> (i32, i32) {
    %c0_i32 = arith.constant 0 : i32
    %c0_i32_0 = arith.constant 0 : i32
    %c0_i32_1 = arith.constant 0 : i32
    return %c0_i32, %c0_i32_0 : i32, i32
  }
  func.func @transform_9(%arg0: i32) -> (i32, i32, i32, i32) {
    %c0_i32 = arith.constant 0 : i32
    %c0_i32_0 = arith.constant 0 : i32
    %c0_i32_1 = arith.constant 0 : i32
    %c0_i32_2 = arith.constant 0 : i32
    return %arg0, %c0_i32, %c0_i32_0, %c0_i32_1 : i32, i32, i32, i32
  }
}

</mosaic_0001>

<llo_original>
// kernel: tpu_custom_call.1
$region0: #{tpu_custom_call.1}
  #allocation0 [shape = 'u32[]', space=smem, size = 0x4, offset = 0x4, fixed_abs, tag = 'smem constant byte address 0x4 - core index']
  #allocation1 [shape = 'u32[72,128]{1,0:T(1,128)}', space=vmem, size = 0x9000, scoped, tag = 'internal scratch']
  #allocation2 [shape = 'bf16[345,8]{1,0:T(8,128)(2,1)}', space=vmem, size = 0x16000, scoped, tag = 'scratch operand']
  %s0 = inlined_call_operand.vmem [shape: bf16[2,332,4], index: 0, kind: input, shape index: {}]
  %s1 = inlined_call_operand.vmem [shape: f32[288,1], index: 1, kind: input, shape index: {}]
  %s2 = inlined_call_operand.vmem [shape: bf16[36,8], index: 2, kind: input, shape index: {}]
  %s3 = inlined_call_operand.vmem [shape: bf16[72,8], index: 3, kind: input, shape index: {}]
  %s4 = inlined_call_operand.vmem [shape: bf16[72,8], index: 4, kind: input, shape index: {}]
  %s5 = inlined_call_operand.vmem [shape: bf16[4,8], index: 5, kind: input, shape index: {}]
  %s6 = inlined_call_operand.vmem [shape: f32[1,8], index: 6, kind: input, shape index: {}]
  %s7 = inlined_call_operand.vmem [shape: f32[1,8], index: 7, kind: input, shape index: {}]
  %s8 = inlined_call_operand.vmem [shape: f32[1,8], index: 8, kind: input, shape index: {}]
  %s9 = inlined_call_operand.vmem [shape: f32[2,9,9,8], index: 9, kind: output, shape index: {}]
  %s10 = sld [smem:[#allocation0]]
  $region69: #{tpu_custom_call.1} parent=0
    _
  %s12 = ssub.s32 1, %s10
  %s13 = scalar_select 0, %s12, %s10
  loop: start=0, step=1, limit=4
  $region2: #{tpu_custom_call.1} parent=0 // loop_pre_header
    _
  $region3: #{tpu_custom_call.1} parent=0 // loop_header
    %s15 = sphi 0, %s19
    %p16 = scmp.ge.s32.totalorder %s15, 4
    %s25 = sphi 0, %s27
    %s28 = sphi 0, %s25
    %s29 = sphi 0, %s28
    %s45 = sphi 0, %s29
    %s49 = sphi 0, %s49
    %s51 = sphi 0, %s49
    %s52 = sphi 0, %s51
    %s66 = sphi 0, %s52
    %s70 = sphi 0, %s70
    %s72 = sphi 0, %s70
    %s73 = sphi 0, %s72
    %s87 = sphi 0, %s73
    %s91 = sphi 0, %s91
    %s93 = sphi 0, %s91
    %s94 = sphi 0, %s93
    %s108 = sphi 0, %s94
    %s112 = sphi 0, %s112
    %s114 = sphi 0, %s112
    %s115 = sphi 0, %s114
    %s129 = sphi 0, %s115
    %s133 = sphi 0, %s133
    %s135 = sphi 0, %s133
    %s136 = sphi 0, %s135
    %s150 = sphi 0, %s136
    %s154 = sphi 0, %s154
    %s156 = sphi 0, %s154
    %s157 = sphi 0, %s156
    %s171 = sphi 0, %s157
    %s175 = sphi 0, %s175
    %s177 = sphi 0, %s175
    %s178 = sphi 0, %s177
    %s192 = sphi 0, %s178
    %s196 = sphi 0, %s196
    %s198 = sphi 0, %s196
    %s199 = sphi 0, %s198
    %s213 = sphi 0, %s199
    %s219 = sphi 0, %s221
    %s222 = sphi 0, %s219
    %s223 = sphi 0, %s222
    %s239 = sphi 0, %s223
  $region4: #{tpu_custom_call.1} parent=0 // loop_header_branch
    %18 = sbr.rel (%p16) target = $region8
  $region5: #{tpu_custom_call.1} parent=0 // loop_body
    %s20 = ssub.s32 %s15, 1
    %s21 = ssub.s32 %s15, 2
    %s22 = sadd.s32 %s15, 1
    %s23 = ssub.s32 %s15, %s22
    %p24 = scmp.eq.s32.totalorder %s23, 0
    %s26 = sadd.s32 %s25, 1
    %s27 = scalar_select %p24, %s25, %s26
    %p30 = pneg %p24
    %p31 = scmp.eq.s32.totalorder %s15, 1
    %p32 = por %p30, %p31
    %p33 = scmp.ne.s32.totalorder %s25, %s28
    %p34 = scmp.eq.s32.totalorder %s15, 0
    %p35 = por %p33, %p34
    %p36 = scmp.ne.s32.totalorder %s25, %s28
    %p37 = scmp.eq.s32.totalorder %s20, 1
    %p38 = por %p36, %p37
    %p39 = scmp.ne.s32.totalorder %s28, %s29
    %p40 = scmp.eq.s32.totalorder %s20, 0
    %p41 = por %p39, %p40
    %p42 = scmp.ne.s32.totalorder %s28, %s29
    %p43 = scmp.eq.s32.totalorder %s21, 1
    %p44 = por %p42, %p43
    %p46 = scmp.ne.s32.totalorder %s29, %s45
    %p47 = scmp.eq.s32.totalorder %s21, 0
    %p48 = por %p46, %p47
    %s50 = sadd.s32 %s49, 1
    %p53 = scmp.eq.s32.totalorder %s15, 1
    %p54 = scmp.ne.s32.totalorder %s49, %s51
    %p55 = scmp.eq.s32.totalorder %s15, 0
    %p56 = por %p54, %p55
    %p57 = scmp.ne.s32.totalorder %s49, %s51
    %p58 = scmp.eq.s32.totalorder %s20, 1
    %p59 = por %p57, %p58
    %p60 = scmp.ne.s32.totalorder %s51, %s52
    %p61 = scmp.eq.s32.totalorder %s20, 0
    %p62 = por %p60, %p61
    %p63 = scmp.ne.s32.totalorder %s51, %s52
    %p64 = scmp.eq.s32.totalorder %s21, 1
    %p65 = por %p63, %p64
    %p67 = scmp.ne.s32.totalorder %s52, %s66
    %p68 = scmp.eq.s32.totalorder %s21, 0
    %p69 = por %p67, %p68
    %s71 = sadd.s32 %s70, 1
    %p74 = scmp.eq.s32.totalorder %s15, 1
    %p75 = scmp.ne.s32.totalorder %s70, %s72
    %p76 = scmp.eq.s32.totalorder %s15, 0
    %p77 = por %p75, %p76
    %p78 = scmp.ne.s32.totalorder %s70, %s72
    %p79 = scmp.eq.s32.totalorder %s20, 1
    %p80 = por %p78, %p79
    %p81 = scmp.ne.s32.totalorder %s72, %s73
    %p82 = scmp.eq.s32.totalorder %s20, 0
    %p83 = por %p81, %p82
    %p84 = scmp.ne.s32.totalorder %s72, %s73
    %p85 = scmp.eq.s32.totalorder %s21, 1
    %p86 = por %p84, %p85
    %p88 = scmp.ne.s32.totalorder %s73, %s87
    %p89 = scmp.eq.s32.totalorder %s21, 0
    %p90 = por %p88, %p89
    %s92 = sadd.s32 %s91, 1
    %p95 = scmp.eq.s32.totalorder %s15, 1
    %p96 = scmp.ne.s32.totalorder %s91, %s93
    %p97 = scmp.eq.s32.totalorder %s15, 0
    %p98 = por %p96, %p97
    %p99 = scmp.ne.s32.totalorder %s91, %s93
    %p100 = scmp.eq.s32.totalorder %s20, 1
    %p101 = por %p99, %p100
    %p102 = scmp.ne.s32.totalorder %s93, %s94
    %p103 = scmp.eq.s32.totalorder %s20, 0
    %p104 = por %p102, %p103
    %p105 = scmp.ne.s32.totalorder %s93, %s94
    %p106 = scmp.eq.s32.totalorder %s21, 1
    %p107 = por %p105, %p106
    %p109 = scmp.ne.s32.totalorder %s94, %s108
    %p110 = scmp.eq.s32.totalorder %s21, 0
    %p111 = por %p109, %p110
    %s113 = sadd.s32 %s112, 1
    %p116 = scmp.eq.s32.totalorder %s15, 1
    %p117 = scmp.ne.s32.totalorder %s112, %s114
    %p118 = scmp.eq.s32.totalorder %s15, 0
    %p119 = por %p117, %p118
    %p120 = scmp.ne.s32.totalorder %s112, %s114
    %p121 = scmp.eq.s32.totalorder %s20, 1
    %p122 = por %p120, %p121
    %p123 = scmp.ne.s32.totalorder %s114, %s115
    %p124 = scmp.eq.s32.totalorder %s20, 0
    %p125 = por %p123, %p124
    %p126 = scmp.ne.s32.totalorder %s114, %s115
    %p127 = scmp.eq.s32.totalorder %s21, 1
    %p128 = por %p126, %p127
    %p130 = scmp.ne.s32.totalorder %s115, %s129
    %p131 = scmp.eq.s32.totalorder %s21, 0
    %p132 = por %p130, %p131
    %s134 = sadd.s32 %s133, 1
    %p137 = scmp.eq.s32.totalorder %s15, 1
    %p138 = scmp.ne.s32.totalorder %s133, %s135
    %p139 = scmp.eq.s32.totalorder %s15, 0
    %p140 = por %p138, %p139
    %p141 = scmp.ne.s32.totalorder %s133, %s135
    %p142 = scmp.eq.s32.totalorder %s20, 1
    %p143 = por %p141, %p142
    %p144 = scmp.ne.s32.totalorder %s135, %s136
    %p145 = scmp.eq.s32.totalorder %s20, 0
    %p146 = por %p144, %p145
    %p147 = scmp.ne.s32.totalorder %s135, %s136
    %p148 = scmp.eq.s32.totalorder %s21, 1
    %p149 = por %p147, %p148
    %p151 = scmp.ne.s32.totalorder %s136, %s150
    %p152 = scmp.eq.s32.totalorder %s21, 0
    %p153 = por %p151, %p152
    %s155 = sadd.s32 %s154, 1
    %p158 = scmp.eq.s32.totalorder %s15, 1
    %p159 = scmp.ne.s32.totalorder %s154, %s156
    %p160 = scmp.eq.s32.totalorder %s15, 0
    %p161 = por %p159, %p160
    %p162 = scmp.ne.s32.totalorder %s154, %s156
    %p163 = scmp.eq.s32.totalorder %s20, 1
    %p164 = por %p162, %p163
    %p165 = scmp.ne.s32.totalorder %s156, %s157
    %p166 = scmp.eq.s32.totalorder %s20, 0
    %p167 = por %p165, %p166
    %p168 = scmp.ne.s32.totalorder %s156, %s157
    %p169 = scmp.eq.s32.totalorder %s21, 1
    %p170 = por %p168, %p169
    %p172 = scmp.ne.s32.totalorder %s157, %s171
    %p173 = scmp.eq.s32.totalorder %s21, 0
    %p174 = por %p172, %p173
    %s176 = sadd.s32 %s175, 1
    %p179 = scmp.eq.s32.totalorder %s15, 1
    %p180 = scmp.ne.s32.totalorder %s175, %s177
    %p181 = scmp.eq.s32.totalorder %s15, 0
    %p182 = por %p180, %p181
    %p183 = scmp.ne.s32.totalorder %s175, %s177
    %p184 = scmp.eq.s32.totalorder %s20, 1
    %p185 = por %p183, %p184
    %p186 = scmp.ne.s32.totalorder %s177, %s178
    %p187 = scmp.eq.s32.totalorder %s20, 0
    %p188 = por %p186, %p187
    %p189 = scmp.ne.s32.totalorder %s177, %s178
    %p190 = scmp.eq.s32.totalorder %s21, 1
    %p191 = por %p189, %p190
    %p193 = scmp.ne.s32.totalorder %s178, %s192
    %p194 = scmp.eq.s32.totalorder %s21, 0
    %p195 = por %p193, %p194
    %s197 = sadd.s32 %s196, 1
    %p200 = scmp.eq.s32.totalorder %s15, 1
    %p201 = scmp.ne.s32.totalorder %s196, %s198
    %p202 = scmp.eq.s32.totalorder %s15, 0
    %p203 = por %p201, %p202
    %p204 = scmp.ne.s32.totalorder %s196, %s198
    %p205 = scmp.eq.s32.totalorder %s20, 1
    %p206 = por %p204, %p205
    %p207 = scmp.ne.s32.totalorder %s198, %s199
    %p208 = scmp.eq.s32.totalorder %s20, 0
    %p209 = por %p207, %p208
    %p210 = scmp.ne.s32.totalorder %s198, %s199
    %p211 = scmp.eq.s32.totalorder %s21, 1
    %p212 = por %p210, %p211
    %p214 = scmp.ne.s32.totalorder %s199, %s213
    %p215 = scmp.eq.s32.totalorder %s21, 0
    %p216 = por %p214, %p215
    %s217 = ssub.s32 %s15, %s22
    %p218 = scmp.eq.s32.totalorder %s217, 0
    %s220 = sadd.s32 %s219, 1
    %s221 = scalar_select %p218, %s219, %s220
    %p224 = pneg %p218
    %p225 = scmp.eq.s32.totalorder %s15, 1
    %p226 = por %p224, %p225
    %p227 = scmp.ne.s32.totalorder %s219, %s222
    %p228 = scmp.eq.s32.totalorder %s15, 0
    %p229 = por %p227, %p228
    %p230 = scmp.ne.s32.totalorder %s219, %s222
    %p231 = scmp.eq.s32.totalorder %s20, 1
    %p232 = por %p230, %p231
    %p233 = scmp.ne.s32.totalorder %s222, %s223
    %p234 = scmp.eq.s32.totalorder %s20, 0
    %p235 = por %p233, %p234
    %p236 = scmp.ne.s32.totalorder %s222, %s223
    %p237 = scmp.eq.s32.totalorder %s21, 1
    %p238 = por %p236, %p237
    %p240 = scmp.ne.s32.totalorder %s223, %s239
    %p241 = scmp.eq.s32.totalorder %s21, 0
    %p242 = por %p240, %p241
    %p243 = scmp.le.s32.totalorder 1, %s15
    %p244 = scmp.lt.s32.totalorder %s15, 3
    %p245 = pnand %p243, %p244
    %p246 = pneg %p245
    // Predicated region
    $region9: #{tpu_custom_call.1} parent=5 // pred_check
      _
    $region10: #{tpu_custom_call.1} parent=5 // pred_check_branch
      %248 = sbr.rel (%p245) target = $region12
    $region11: #{tpu_custom_call.1} parent=5 // pred_region
      %s249 = ssub.s32 %s15, 1
      // Predicated region
      $region13: #{tpu_custom_call.1} parent=11 // pred_check
        %p250 = pneg %p62
      $region14: #{tpu_custom_call.1} parent=11 // pred_check_branch
        %252 = sbr.rel (%p250) target = $region16
      $region15: #{tpu_custom_call.1} parent=11 // pred_region
        _
      $region16: #{tpu_custom_call.1} parent=11 // pred_fallthru
        _
      // Predicated region
      $region17: #{tpu_custom_call.1} parent=11 // pred_check
        %p253 = pneg %p83
      $region18: #{tpu_custom_call.1} parent=11 // pred_check_branch
        %255 = sbr.rel (%p253) target = $region20
      $region19: #{tpu_custom_call.1} parent=11 // pred_region
        _
      $region20: #{tpu_custom_call.1} parent=11 // pred_fallthru
        _
      // Predicated region
      $region21: #{tpu_custom_call.1} parent=11 // pred_check
        %p256 = pneg %p104
      $region22: #{tpu_custom_call.1} parent=11 // pred_check_branch
        %258 = sbr.rel (%p256) target = $region24
      $region23: #{tpu_custom_call.1} parent=11 // pred_region
        _
      $region24: #{tpu_custom_call.1} parent=11 // pred_fallthru
        _
      // Predicated region
      $region25: #{tpu_custom_call.1} parent=11 // pred_check
        %p259 = pneg %p125
      $region26: #{tpu_custom_call.1} parent=11 // pred_check_branch
        %261 = sbr.rel (%p259) target = $region28
      $region27: #{tpu_custom_call.1} parent=11 // pred_region
        _
      $region28: #{tpu_custom_call.1} parent=11 // pred_fallthru
        _
      // Predicated region
      $region29: #{tpu_custom_call.1} parent=11 // pred_check
        %p262 = pneg %p146
      $region30: #{tpu_custom_call.1} parent=11 // pred_check_branch
        %264 = sbr.rel (%p262) target = $region32
      $region31: #{tpu_custom_call.1} parent=11 // pred_region
        _
      $region32: #{tpu_custom_call.1} parent=11 // pred_fallthru
        _
      // Predicated region
      $region33: #{tpu_custom_call.1} parent=11 // pred_check
        %p265 = pneg %p167
      $region34: #{tpu_custom_call.1} parent=11 // pred_check_branch
        %267 = sbr.rel (%p265) target = $region36
      $region35: #{tpu_custom_call.1} parent=11 // pred_region
        _
      $region36: #{tpu_custom_call.1} parent=11 // pred_fallthru
        _
      // Predicated region
      $region37: #{tpu_custom_call.1} parent=11 // pred_check
        %p268 = pneg %p188
      $region38: #{tpu_custom_call.1} parent=11 // pred_check_branch
        %270 = sbr.rel (%p268) target = $region40
      $region39: #{tpu_custom_call.1} parent=11 // pred_region
        _
      $region40: #{tpu_custom_call.1} parent=11 // pred_fallthru
        _
      // Predicated region
      $region41: #{tpu_custom_call.1} parent=11 // pred_check
        %p271 = pneg %p209
      $region42: #{tpu_custom_call.1} parent=11 // pred_check_branch
        %273 = sbr.rel (%p271) target = $region44
      $region43: #{tpu_custom_call.1} parent=11 // pred_region
        _
      $region44: #{tpu_custom_call.1} parent=11 // pred_fallthru
        _
    $region12: #{tpu_custom_call.1} parent=5 // pred_fallthru
      _
    %p274 = scmp.lt.s32.totalorder %s15, 2
    // Predicated region
    $region45: #{tpu_custom_call.1} parent=5 // pred_check
      %p275 = pneg %p274
    $region46: #{tpu_custom_call.1} parent=5 // pred_check_branch
      %277 = sbr.rel (%p275) target = $region48
    $region47: #{tpu_custom_call.1} parent=5 // pred_region
      // Predicated region
      $region49: #{tpu_custom_call.1} parent=47 // pred_check
        %p278 = pneg %p35
      $region50: #{tpu_custom_call.1} parent=47 // pred_check_branch
        %280 = sbr.rel (%p278) target = $region52
      $region51: #{tpu_custom_call.1} parent=47 // pred_region
        %p281 = scmp.lt.s32.totalorder %s15, 1
        %s282 = scalar_select %p281, %s15, 1
        %s283 = smul.addr %s282, 42
        %s284 = smul.addr %s283, 4
        %s285 = scalar_lea.vmem %s0, %s284
      $region52: #{tpu_custom_call.1} parent=47 // pred_fallthru
        _
    $region48: #{tpu_custom_call.1} parent=5 // pred_fallthru
      _
    %p286 = scmp.le.s32.totalorder 1, %s15
    %p287 = scmp.lt.s32.totalorder %s15, 3
    %p288 = pnand %p286, %p287
    %p289 = pneg %p288
    // Predicated region
    $region53: #{tpu_custom_call.1} parent=5 // pred_check
      _
    $region54: #{tpu_custom_call.1} parent=5 // pred_check_branch
      %291 = sbr.rel (%p288) target = $region56
    $region55: #{tpu_custom_call.1} parent=5 // pred_region
      %s292 = ssub.s32 %s15, 1
      %p293 = scmp.lt.s32.totalorder %s20, 1
      %s294 = scalar_select %p293, %s20, 1
      %s295 = smul.addr %s294, 42
      %s296 = smul.addr %s295, 4
      %s297 = scalar_lea.vmem %s0, %s296
      %p298 = pneg %p41
      %p299 = pneg %p38
      %p300 = pneg %p62
      %p301 = pneg %p59
      %p302 = pneg %p83
      %p303 = pneg %p80
      %p304 = pneg %p104
      %p305 = pneg %p101
      %p306 = pneg %p125
      %p307 = pneg %p122
      %p308 = pneg %p146
      %p309 = pneg %p143
      %p310 = pneg %p167
      %p311 = pneg %p164
      %p312 = pneg %p188
      %p313 = pneg %p185
      %p314 = pneg %p209
      %p315 = pneg %p206
      %p316 = pneg %p235
      %p317 = pneg %p232
      %p318 = scmp.lt.s32.totalorder %s20, 1
      %s319 = scalar_select %p318, %s20, 1
      %s320 = smul.addr %s319, 18
      %s321 = smul.addr %s320, 8
      %s322 = scalar_lea.vmem %s9, %s321
      %p323 = scmp.lt.s32.totalorder %s20, 1
      %s324 = scalar_select %p323, %s20, 1
      %s325 = smul.addr %s324, 42
      %s326 = smul.addr %s325, 4
      %s327 = scalar_lea.vmem %s0, %s326
      %p328 = scmp.lt.s32.totalorder %s20, 1
      %s329 = scalar_select %p328, %s20, 1
      %s330 = smul.addr %s329, 18
      %s331 = smul.addr %s330, 8
      %s332 = scalar_lea.vmem %s9, %s331
      %v334 = vld [vmem:[%s1] sm:$0xff]
      %v335 = vld [vmem:[%s1 + $0x8] sm:$0xff]
      %v336 = vld [vmem:[%s1 + $0x10] sm:$0xff]
      %v337 = vld [vmem:[%s1 + $0x18] sm:$0xff]
      %v338 = vld [vmem:[%s1 + $0x20] sm:$0xff]
      %v339 = vld [vmem:[%s1 + $0x28] sm:$0xff]
      %v340 = vld [vmem:[%s1 + $0x30] sm:$0xff]
      %v341 = vld [vmem:[%s1 + $0x38] sm:$0xff]
      %v342 = vld [vmem:[%s1 + $0x40] sm:$0xff]
      %v343 = vld [vmem:[%s1 + $0x48] sm:$0xff]
      %v344 = vld [vmem:[%s1 + $0x50] sm:$0xff]
      %v345 = vld [vmem:[%s1 + $0x58] sm:$0xff]
      %v346 = vld [vmem:[%s1 + $0x60] sm:$0xff]
      %v347 = vld [vmem:[%s1 + $0x68] sm:$0xff]
      %v348 = vld [vmem:[%s1 + $0x70] sm:$0xff]
      %v349 = vld [vmem:[%s1 + $0x78] sm:$0xff]
      %v350 = vld [vmem:[%s1 + $0x80] sm:$0xff]
      %v351 = vld [vmem:[%s1 + $0x88] sm:$0xff]
      %v352 = vld [vmem:[%s1 + $0x90] sm:$0xff]
      %v353 = vld [vmem:[%s1 + $0x98] sm:$0xff]
      %v354 = vld [vmem:[%s1 + $0xa0] sm:$0xff]
      %v355 = vld [vmem:[%s1 + $0xa8] sm:$0xff]
      %v356 = vld [vmem:[%s1 + $0xb0] sm:$0xff]
      %v357 = vld [vmem:[%s1 + $0xb8] sm:$0xff]
      %v358 = vld [vmem:[%s1 + $0xc0] sm:$0xff]
      %v359 = vld [vmem:[%s1 + $0xc8] sm:$0xff]
      %v360 = vld [vmem:[%s1 + $0xd0] sm:$0xff]
      %v361 = vld [vmem:[%s1 + $0xd8] sm:$0xff]
      %v362 = vld [vmem:[%s1 + $0xe0] sm:$0xff]
      %v363 = vld [vmem:[%s1 + $0xe8] sm:$0xff]
      %v364 = vld [vmem:[%s1 + $0xf0] sm:$0xff]
      %v365 = vld [vmem:[%s1 + $0xf8] sm:$0xff]
      %v366 = vld [vmem:[%s1 + $0x100] sm:$0xff]
      %v367 = vld [vmem:[%s1 + $0x108] sm:$0xff]
      %v368 = vld [vmem:[%s1 + $0x110] sm:$0xff]
      %v369 = vld [vmem:[%s1 + $0x118] sm:$0xff]
      %vm370 = vcmp.gt.f32.partialorder %v334, 0.5
      %vm371 = vcmp.gt.f32.partialorder %v335, 0.5
      %vm372 = vcmp.gt.f32.partialorder %v336, 0.5
      %vm373 = vcmp.gt.f32.partialorder %v337, 0.5
      %vm374 = vcmp.gt.f32.partialorder %v338, 0.5
      %vm375 = vcmp.gt.f32.partialorder %v339, 0.5
      %vm376 = vcmp.gt.f32.partialorder %v340, 0.5
      %vm377 = vcmp.gt.f32.partialorder %v341, 0.5
      %vm378 = vcmp.gt.f32.partialorder %v342, 0.5
      %vm379 = vcmp.gt.f32.partialorder %v343, 0.5
      %vm380 = vcmp.gt.f32.partialorder %v344, 0.5
      %vm381 = vcmp.gt.f32.partialorder %v345, 0.5
      %vm382 = vcmp.gt.f32.partialorder %v346, 0.5
      %vm383 = vcmp.gt.f32.partialorder %v347, 0.5
      %vm384 = vcmp.gt.f32.partialorder %v348, 0.5
      %vm385 = vcmp.gt.f32.partialorder %v349, 0.5
      %vm386 = vcmp.gt.f32.partialorder %v350, 0.5
      %vm387 = vcmp.gt.f32.partialorder %v351, 0.5
      %vm388 = vcmp.gt.f32.partialorder %v352, 0.5
      %vm389 = vcmp.gt.f32.partialorder %v353, 0.5
      %vm390 = vcmp.gt.f32.partialorder %v354, 0.5
      %vm391 = vcmp.gt.f32.partialorder %v355, 0.5
      %vm392 = vcmp.gt.f32.partialorder %v356, 0.5
      %vm393 = vcmp.gt.f32.partialorder %v357, 0.5
      %vm394 = vcmp.gt.f32.partialorder %v358, 0.5
      %vm395 = vcmp.gt.f32.partialorder %v359, 0.5
      %vm396 = vcmp.gt.f32.partialorder %v360, 0.5
      %vm397 = vcmp.gt.f32.partialorder %v361, 0.5
      %vm398 = vcmp.gt.f32.partialorder %v362, 0.5
      %vm399 = vcmp.gt.f32.partialorder %v363, 0.5
      %vm400 = vcmp.gt.f32.partialorder %v364, 0.5
      %vm401 = vcmp.gt.f32.partialorder %v365, 0.5
      %vm402 = vcmp.gt.f32.partialorder %v366, 0.5
      %vm403 = vcmp.gt.f32.partialorder %v367, 0.5
      %vm404 = vcmp.gt.f32.partialorder %v368, 0.5
      %vm405 = vcmp.gt.f32.partialorder %v369, 0.5
      %vm406 = vcmask 60418
      %vm407 = vsmask.f32 7946
      %vm408 = vmand %vm406, %vm407
      %v409 = vld [vmem:[#allocation2 + $0x4] sm:$0xc]
      %v410 = vsel %vm408, 0, %v409
      %411 = vst [vmem:[#allocation2 + $0x4] sm:$0xc] %v410
      %vm412 = vcmask 60416
      %413 = vst.msk [vmem:[#allocation2 + $0x8] sm:$0xf] %vm412, 0
      %414 = vst.msk [vmem:[#allocation2 + $0xc] sm:$0xf] %vm412, 0
      %vm415 = vcmask 60419
      %vm416 = vsmask.f32 7950
      %vm417 = vmand %vm415, %vm416
      %v418 = vld [vmem:[#allocation2 + $0x9c] sm:$0x8]
      %v419 = vsel %vm417, 0, %v418
      %420 = vst [vmem:[#allocation2 + $0x9c] sm:$0x8] %v419
      %421 = vst.msk [vmem:[#allocation2 + $0xa0] sm:$0xf] %vm412, 0
      %422 = vst.msk [vmem:[#allocation2 + $0xa4] sm:$0xf] %vm412, 0
      %423 = vst.msk [vmem:[#allocation2 + $0xa8] sm:$0xf] %vm412, 0
      %vm424 = vcmask 57344
      %vm425 = vsmask.f32 256
      %vm426 = vmand %vm424, %vm425
      %v427 = vld [vmem:[#allocation2 + $0xac] sm:$0x1]
      %v428 = vsel %vm426, 0, %v427
      %429 = vst [vmem:[#allocation2 + $0xac] sm:$0x1] %v428
      %v430 = vld [vmem:[%s327] sm:$0xf]
      %v431 = vld [vmem:[%s327 + $0x4] sm:$0xf]
      %v432 = vld [vmem:[%s327 + $0x8] sm:$0xf]
      %v433 = vld [vmem:[%s327 + $0xc] sm:$0xf]
      %v434 = vld [vmem:[%s327 + $0x10] sm:$0xf]
      %v435 = vld [vmem:[%s327 + $0x14] sm:$0xf]
      %v436 = vld [vmem:[%s327 + $0x18] sm:$0xf]
      %v437 = vld [vmem:[%s327 + $0x1c] sm:$0xf]
      %v438 = vld [vmem:[%s327 + $0x20] sm:$0xf]
      %v439 = vld [vmem:[%s327 + $0x24] sm:$0xf]
      %v440 = vld [vmem:[%s327 + $0x28] sm:$0xf]
      %v441 = vld [vmem:[%s327 + $0x2c] sm:$0xf]
      %v442 = vld [vmem:[%s327 + $0x30] sm:$0xf]
      %v443 = vld [vmem:[%s327 + $0x34] sm:$0xf]
      %v444 = vld [vmem:[%s327 + $0x38] sm:$0xf]
      %v445 = vld [vmem:[%s327 + $0x3c] sm:$0xf]
      %v446 = vld [vmem:[%s327 + $0x40] sm:$0xf]
      %v447 = vld [vmem:[%s327 + $0x44] sm:$0xf]
      %v448 = vld [vmem:[%s327 + $0x48] sm:$0xf]
      %v449 = vld [vmem:[%s327 + $0x4c] sm:$0xf]
      %v450 = vld [vmem:[%s327 + $0x50] sm:$0xf]
      %v451 = vld [vmem:[%s327 + $0x54] sm:$0xf]
      %v452 = vld [vmem:[%s327 + $0x58] sm:$0xf]
      %v453 = vld [vmem:[%s327 + $0x5c] sm:$0xf]
      %v454 = vld [vmem:[%s327 + $0x60] sm:$0xf]
      %v455 = vld [vmem:[%s327 + $0x64] sm:$0xf]
      %v456 = vld [vmem:[%s327 + $0x68] sm:$0xf]
      %v457 = vld [vmem:[%s327 + $0x6c] sm:$0xf]
      %v458 = vld [vmem:[%s327 + $0x70] sm:$0xf]
      %v459 = vld [vmem:[%s327 + $0x74] sm:$0xf]
      %v460 = vld [vmem:[%s327 + $0x78] sm:$0xf]
      %v461 = vld [vmem:[%s327 + $0x7c] sm:$0xf]
      %v462 = vld [vmem:[%s327 + $0x80] sm:$0xf]
      %v463 = vld [vmem:[%s327 + $0x84] sm:$0xf]
      %v464 = vld [vmem:[%s327 + $0x88] sm:$0xf]
      %v465 = vld [vmem:[%s327 + $0x8c] sm:$0xf]
      %v466 = vld [vmem:[%s327 + $0x90] sm:$0x1]
      %v467 = vld [vmem:[%s327] sm:$0xe]
      %v468 = vld [vmem:[%s327 + $0x8] sm:$0xe]
      %v469 = vld [vmem:[%s327 + $0x90] sm:$0xf]
      %v470 = vld [vmem:[%s327 + $0x94] sm:$0xf]
      %v471 = vld [vmem:[%s327 + $0x98] sm:$0x1]
      %v472 = vld [vmem:[%s327 + $0x98] sm:$0x3]
      %v473 = vld [vmem:[%s327 + $0x8] sm:$0xc]
      %v474 = vld [vmem:[%s327 + $0x10] sm:$0xc]
      %v475 = vld [vmem:[%s327 + $0x98] sm:$0xf]
      %v476 = vld [vmem:[%s327 + $0x9c] sm:$0xf]
      %v477 = vld [vmem:[%s327 + $0xa0] sm:$0x3]
      %v478 = vld [vmem:[%s327 + $0xa0] sm:$0x7]
      %v479 = vld [vmem:[%s327 + $0x10] sm:$0x8]
      %v516 = vunpack.c.l.b16 %v430
      %v517 = vunpack.c.l.b16 %v431
      %v518 = vunpack.c.l.b16 %v432
      %v519 = vunpack.c.l.b16 %v433
      %v520 = vunpack.c.l.b16 %v434
      %v521 = vunpack.c.l.b16 %v435
      %v522 = vunpack.c.l.b16 %v436
      %v523 = vunpack.c.l.b16 %v437
      %v524 = vunpack.c.l.b16 %v438
      %v525 = vunpack.c.l.b16 %v439
      %v526 = vunpack.c.l.b16 %v440
      %v527 = vunpack.c.l.b16 %v441
      %v528 = vunpack.c.l.b16 %v442
      %v529 = vunpack.c.l.b16 %v443
      %v530 = vunpack.c.l.b16 %v444
      %v531 = vunpack.c.l.b16 %v445
      %v532 = vunpack.c.l.b16 %v446
      %v533 = vunpack.c.l.b16 %v447
      %v534 = vunpack.c.l.b16 %v448
      %v535 = vunpack.c.l.b16 %v449
      %v536 = vunpack.c.l.b16 %v450
      %v537 = vunpack.c.l.b16 %v451
      %v538 = vunpack.c.l.b16 %v452
      %v539 = vunpack.c.l.b16 %v453
      %v540 = vunpack.c.l.b16 %v454
      %v541 = vunpack.c.l.b16 %v455
      %v542 = vunpack.c.l.b16 %v456
      %v543 = vunpack.c.l.b16 %v457
      %v544 = vunpack.c.l.b16 %v458
      %v545 = vunpack.c.l.b16 %v459
      %v546 = vunpack.c.l.b16 %v460
      %v547 = vunpack.c.l.b16 %v461
      %v548 = vunpack.c.l.b16 %v462
      %v549 = vunpack.c.l.b16 %v463
      %v550 = vunpack.c.l.b16 %v464
      %v551 = vunpack.c.l.b16 %v465
      %v552 = vpack.c.b16 %v517, %v516
      %v553 = vpack.c.b16 %v519, %v518
      %v554 = vpack.c.b16 %v521, %v520
      %v555 = vpack.c.b16 %v523, %v522
      %v556 = vpack.c.b16 %v525, %v524
      %v557 = vpack.c.b16 %v527, %v526
      %v558 = vpack.c.b16 %v529, %v528
      %v559 = vpack.c.b16 %v531, %v530
      %v560 = vpack.c.b16 %v533, %v532
      %v561 = vpack.c.b16 %v535, %v534
      %v562 = vpack.c.b16 %v537, %v536
      %v563 = vpack.c.b16 %v539, %v538
      %v564 = vpack.c.b16 %v541, %v540
      %v565 = vpack.c.b16 %v543, %v542
      %v566 = vpack.c.b16 %v545, %v544
      %v567 = vpack.c.b16 %v547, %v546
      %v568 = vpack.c.b16 %v549, %v548
      %v569 = vpack.c.b16 %v551, %v550
      %v571 = vunpack.c.l.b16 %v466
      %v572 = vpack.c.b16 %v571, %v571
      %vm573 = vsmask.f32 7424
      %v575 = vshrl.u32 %v552, 16
      %v577 = vshll.u32 %v552, 16
      %v579 = vrot.slane %v577, 1
      %v580 = vor.u32 %v575, %v579
      %v582 = vshll.u32 %v553, 16
      %v584 = vrot.slane %v582, 1
      %v585 = vsel %vm573, %v580, %v584
      %v586 = vshrl.u32 %v553, 16
      %v588 = vor.u32 %v586, %v584
      %v590 = vshll.u32 %v554, 16
      %v592 = vrot.slane %v590, 1
      %v593 = vsel %vm573, %v588, %v592
      %v594 = vshrl.u32 %v554, 16
      %v596 = vor.u32 %v594, %v592
      %v598 = vshll.u32 %v555, 16
      %v600 = vrot.slane %v598, 1
      %v601 = vsel %vm573, %v596, %v600
      %v602 = vshrl.u32 %v555, 16
      %v604 = vor.u32 %v602, %v600
      %v606 = vshll.u32 %v556, 16
      %v608 = vrot.slane %v606, 1
      %v609 = vsel %vm573, %v604, %v608
      %v610 = vshrl.u32 %v556, 16
      %v612 = vor.u32 %v610, %v608
      %v614 = vshll.u32 %v557, 16
      %v616 = vrot.slane %v614, 1
      %v617 = vsel %vm573, %v612, %v616
      %v618 = vshrl.u32 %v557, 16
      %v620 = vor.u32 %v618, %v616
      %v622 = vshll.u32 %v558, 16
      %v624 = vrot.slane %v622, 1
      %v625 = vsel %vm573, %v620, %v624
      %v626 = vshrl.u32 %v558, 16
      %v628 = vor.u32 %v626, %v624
      %v630 = vshll.u32 %v559, 16
      %v632 = vrot.slane %v630, 1
      %v633 = vsel %vm573, %v628, %v632
      %v634 = vshrl.u32 %v559, 16
      %v636 = vor.u32 %v634, %v632
      %v638 = vshll.u32 %v560, 16
      %v640 = vrot.slane %v638, 1
      %v641 = vsel %vm573, %v636, %v640
      %v642 = vshrl.u32 %v560, 16
      %v644 = vor.u32 %v642, %v640
      %v646 = vshll.u32 %v561, 16
      %v648 = vrot.slane %v646, 1
      %v649 = vsel %vm573, %v644, %v648
      %v650 = vshrl.u32 %v561, 16
      %v652 = vor.u32 %v650, %v648
      %v654 = vshll.u32 %v562, 16
      %v656 = vrot.slane %v654, 1
      %v657 = vsel %vm573, %v652, %v656
      %v658 = vshrl.u32 %v562, 16
      %v660 = vor.u32 %v658, %v656
      %v662 = vshll.u32 %v563, 16
      %v664 = vrot.slane %v662, 1
      %v665 = vsel %vm573, %v660, %v664
      %v666 = vshrl.u32 %v563, 16
      %v668 = vor.u32 %v666, %v664
      %v670 = vshll.u32 %v564, 16
      %v672 = vrot.slane %v670, 1
      %v673 = vsel %vm573, %v668, %v672
      %v674 = vshrl.u32 %v564, 16
      %v676 = vor.u32 %v674, %v672
      %v678 = vshll.u32 %v565, 16
      %v680 = vrot.slane %v678, 1
      %v681 = vsel %vm573, %v676, %v680
      %v682 = vshrl.u32 %v565, 16
      %v684 = vor.u32 %v682, %v680
      %v686 = vshll.u32 %v566, 16
      %v688 = vrot.slane %v686, 1
      %v689 = vsel %vm573, %v684, %v688
      %v690 = vshrl.u32 %v566, 16
      %v692 = vor.u32 %v690, %v688
      %v694 = vshll.u32 %v567, 16
      %v696 = vrot.slane %v694, 1
      %v697 = vsel %vm573, %v692, %v696
      %v698 = vshrl.u32 %v567, 16
      %v700 = vor.u32 %v698, %v696
      %v702 = vshll.u32 %v568, 16
      %v704 = vrot.slane %v702, 1
      %v705 = vsel %vm573, %v700, %v704
      %v706 = vshrl.u32 %v568, 16
      %v708 = vor.u32 %v706, %v704
      %v710 = vshll.u32 %v569, 16
      %v712 = vrot.slane %v710, 1
      %v713 = vsel %vm573, %v708, %v712
      %v714 = vshrl.u32 %v569, 16
      %v716 = vor.u32 %v714, %v712
      %v718 = vshll.u32 %v572, 16
      %v720 = vrot.slane %v718, 1
      %v721 = vsel %vm573, %v716, %v720
      %722 = vrot.lane.b32.xlu0 %v585, 4
      %v723 = vpop.permute.xlu0 %722
      %724 = vrot.lane.b32.xlu0 %v593, 4
      %v725 = vpop.permute.xlu0 %724
      %726 = vrot.lane.b32.xlu0 %v601, 4
      %v727 = vpop.permute.xlu0 %726
      %728 = vrot.lane.b32.xlu0 %v609, 4
      %v729 = vpop.permute.xlu0 %728
      %730 = vrot.lane.b32.xlu0 %v617, 4
      %v731 = vpop.permute.xlu0 %730
      %732 = vrot.lane.b32.xlu0 %v625, 4
      %v733 = vpop.permute.xlu0 %732
      %734 = vrot.lane.b32.xlu0 %v633, 4
      %v735 = vpop.permute.xlu0 %734
      %736 = vrot.lane.b32.xlu0 %v641, 4
      %v737 = vpop.permute.xlu0 %736
      %738 = vrot.lane.b32.xlu0 %v649, 4
      %v739 = vpop.permute.xlu0 %738
      %740 = vrot.lane.b32.xlu0 %v657, 4
      %v741 = vpop.permute.xlu0 %740
      %742 = vrot.lane.b32.xlu0 %v665, 4
      %v743 = vpop.permute.xlu0 %742
      %744 = vrot.lane.b32.xlu0 %v673, 4
      %v745 = vpop.permute.xlu0 %744
      %746 = vrot.lane.b32.xlu0 %v681, 4
      %v747 = vpop.permute.xlu0 %746
      %748 = vrot.lane.b32.xlu0 %v689, 4
      %v749 = vpop.permute.xlu0 %748
      %750 = vrot.lane.b32.xlu0 %v697, 4
      %v751 = vpop.permute.xlu0 %750
      %752 = vrot.lane.b32.xlu0 %v705, 4
      %v753 = vpop.permute.xlu0 %752
      %754 = vrot.lane.b32.xlu0 %v713, 4
      %v755 = vpop.permute.xlu0 %754
      %756 = vrot.lane.b32.xlu0 %v721, 4
      %v757 = vpop.permute.xlu0 %756
      %v759 = vunpack.c.l.b16 %v467
      %v760 = vpack.c.b16 %v517, %v759
      %vm761 = vcmask 1046528
      %v762 = vrot.slane %v760, 1
      %v763 = vrot.slane %v553, 1
      %v764 = vsel %vm761, %v762, %v763
      %v765 = vrot.slane %v554, 1
      %v766 = vsel %vm761, %v763, %v765
      %v767 = vrot.slane %v555, 1
      %v768 = vsel %vm761, %v765, %v767
      %v769 = vrot.slane %v556, 1
      %v770 = vsel %vm761, %v767, %v769
      %v771 = vrot.slane %v557, 1
      %v772 = vsel %vm761, %v769, %v771
      %v773 = vrot.slane %v558, 1
      %v774 = vsel %vm761, %v771, %v773
      %v775 = vrot.slane %v559, 1
      %v776 = vsel %vm761, %v773, %v775
      %v777 = vrot.slane %v560, 1
      %v778 = vsel %vm761, %v775, %v777
      %v779 = vrot.slane %v561, 1
      %v780 = vsel %vm761, %v777, %v779
      %v781 = vrot.slane %v562, 1
      %v782 = vsel %vm761, %v779, %v781
      %v783 = vrot.slane %v563, 1
      %v784 = vsel %vm761, %v781, %v783
      %v785 = vrot.slane %v564, 1
      %v786 = vsel %vm761, %v783, %v785
      %v787 = vrot.slane %v565, 1
      %v788 = vsel %vm761, %v785, %v787
      %v789 = vrot.slane %v566, 1
      %v790 = vsel %vm761, %v787, %v789
      %v791 = vrot.slane %v567, 1
      %v792 = vsel %vm761, %v789, %v791
      %v793 = vrot.slane %v568, 1
      %v794 = vsel %vm761, %v791, %v793
      %v795 = vrot.slane %v569, 1
      %v796 = vsel %vm761, %v793, %v795
      %v797 = vrot.slane %v572, 1
      %v798 = vsel %vm761, %v795, %v797
      %799 = vrot.lane.b32.xlu0 %v764, 8
      %v800 = vpop.permute.xlu0 %799
      %801 = vrot.lane.b32.xlu0 %v766, 8
      %v802 = vpop.permute.xlu0 %801
      %803 = vrot.lane.b32.xlu0 %v768, 8
      %v804 = vpop.permute.xlu0 %803
      %805 = vrot.lane.b32.xlu0 %v770, 8
      %v806 = vpop.permute.xlu0 %805
      %807 = vrot.lane.b32.xlu0 %v772, 8
      %v808 = vpop.permute.xlu0 %807
      %809 = vrot.lane.b32.xlu0 %v774, 8
      %v810 = vpop.permute.xlu0 %809
      %811 = vrot.lane.b32.xlu0 %v776, 8
      %v812 = vpop.permute.xlu0 %811
      %813 = vrot.lane.b32.xlu0 %v778, 8
      %v814 = vpop.permute.xlu0 %813
      %815 = vrot.lane.b32.xlu0 %v780, 8
      %v816 = vpop.permute.xlu0 %815
      %817 = vrot.lane.b32.xlu0 %v782, 8
      %v818 = vpop.permute.xlu0 %817
      %819 = vrot.lane.b32.xlu0 %v784, 8
      %v820 = vpop.permute.xlu0 %819
      %821 = vrot.lane.b32.xlu0 %v786, 8
      %v822 = vpop.permute.xlu0 %821
      %823 = vrot.lane.b32.xlu0 %v788, 8
      %v824 = vpop.permute.xlu0 %823
      %825 = vrot.lane.b32.xlu0 %v790, 8
      %v826 = vpop.permute.xlu0 %825
      %827 = vrot.lane.b32.xlu0 %v792, 8
      %v828 = vpop.permute.xlu0 %827
      %829 = vrot.lane.b32.xlu0 %v794, 8
      %v830 = vpop.permute.xlu0 %829
      %831 = vrot.lane.b32.xlu0 %v796, 8
      %v832 = vpop.permute.xlu0 %831
      %833 = vrot.lane.b32.xlu0 %v798, 8
      %v834 = vpop.permute.xlu0 %833
      %v839 = vunpack.c.l.b16 %v468
      %v840 = vunpack.c.l.b16 %v469
      %v841 = vunpack.c.l.b16 %v470
      %v842 = vunpack.c.l.b16 %v471
      %v843 = vpack.c.b16 %v519, %v839
      %v844 = vpack.c.b16 %v841, %v840
      %v845 = vpack.c.b16 %v842, %v842
      %v846 = vrot.slane %v843, 1
      %v847 = vsel %vm761, %v846, %v765
      %v848 = vrot.slane %v844, 1
      %v849 = vsel %vm761, %v795, %v848
      %v850 = vrot.slane %v845, 1
      %v851 = vsel %vm761, %v848, %v850
      %852 = vrot.lane.b32.xlu0 %v847, 12
      %v853 = vpop.permute.xlu0 %852
      %854 = vrot.lane.b32.xlu0 %v768, 12
      %v855 = vpop.permute.xlu0 %854
      %856 = vrot.lane.b32.xlu0 %v770, 12
      %v857 = vpop.permute.xlu0 %856
      %858 = vrot.lane.b32.xlu0 %v772, 12
      %v859 = vpop.permute.xlu0 %858
      %860 = vrot.lane.b32.xlu0 %v774, 12
      %v861 = vpop.permute.xlu0 %860
      %862 = vrot.lane.b32.xlu0 %v776, 12
      %v863 = vpop.permute.xlu0 %862
      %864 = vrot.lane.b32.xlu0 %v778, 12
      %v865 = vpop.permute.xlu0 %864
      %866 = vrot.lane.b32.xlu0 %v780, 12
      %v867 = vpop.permute.xlu0 %866
      %868 = vrot.lane.b32.xlu0 %v782, 12
      %v869 = vpop.permute.xlu0 %868
      %870 = vrot.lane.b32.xlu0 %v784, 12
      %v871 = vpop.permute.xlu0 %870
      %872 = vrot.lane.b32.xlu0 %v786, 12
      %v873 = vpop.permute.xlu0 %872
      %874 = vrot.lane.b32.xlu0 %v788, 12
      %v875 = vpop.permute.xlu0 %874
      %876 = vrot.lane.b32.xlu0 %v790, 12
      %v877 = vpop.permute.xlu0 %876
      %878 = vrot.lane.b32.xlu0 %v792, 12
      %v879 = vpop.permute.xlu0 %878
      %880 = vrot.lane.b32.xlu0 %v794, 12
      %v881 = vpop.permute.xlu0 %880
      %882 = vrot.lane.b32.xlu0 %v796, 12
      %v883 = vpop.permute.xlu0 %882
      %884 = vrot.lane.b32.xlu0 %v849, 12
      %v885 = vpop.permute.xlu0 %884
      %886 = vrot.lane.b32.xlu0 %v851, 12
      %v887 = vpop.permute.xlu0 %886
      %v889 = vunpack.c.l.b16 %v472
      %v890 = vpack.c.b16 %v889, %v889
      %vm891 = vsmask.f32 6400
      %v893 = vshrl.u32 %v843, 16
      %v895 = vrot.slane %v893, 1
      %v896 = vshll.u32 %v843, 16
      %v898 = vrot.slane %v896, 2
      %v899 = vor.u32 %v895, %v898
      %v900 = vrot.slane %v594, 1
      %v901 = vrot.slane %v590, 2
      %v902 = vor.u32 %v900, %v901
      %v903 = vsel %vm891, %v899, %v902
      %v904 = vrot.slane %v602, 1
      %v905 = vrot.slane %v598, 2
      %v906 = vor.u32 %v904, %v905
      %v907 = vsel %vm891, %v902, %v906
      %v908 = vrot.slane %v610, 1
      %v909 = vrot.slane %v606, 2
      %v910 = vor.u32 %v908, %v909
      %v911 = vsel %vm891, %v906, %v910
      %v912 = vrot.slane %v618, 1
      %v913 = vrot.slane %v614, 2
      %v914 = vor.u32 %v912, %v913
      %v915 = vsel %vm891, %v910, %v914
      %v916 = vrot.slane %v626, 1
      %v917 = vrot.slane %v622, 2
      %v918 = vor.u32 %v916, %v917
      %v919 = vsel %vm891, %v914, %v918
      %v920 = vrot.slane %v634, 1
      %v921 = vrot.slane %v630, 2
      %v922 = vor.u32 %v920, %v921
      %v923 = vsel %vm891, %v918, %v922
      %v924 = vrot.slane %v642, 1
      %v925 = vrot.slane %v638, 2
      %v926 = vor.u32 %v924, %v925
      %v927 = vsel %vm891, %v922, %v926
      %v928 = vrot.slane %v650, 1
      %v929 = vrot.slane %v646, 2
      %v930 = vor.u32 %v928, %v929
      %v931 = vsel %vm891, %v926, %v930
      %v932 = vrot.slane %v658, 1
      %v933 = vrot.slane %v654, 2
      %v934 = vor.u32 %v932, %v933
      %v935 = vsel %vm891, %v930, %v934
      %v936 = vrot.slane %v666, 1
      %v937 = vrot.slane %v662, 2
      %v938 = vor.u32 %v936, %v937
      %v939 = vsel %vm891, %v934, %v938
      %v940 = vrot.slane %v674, 1
      %v941 = vrot.slane %v670, 2
      %v942 = vor.u32 %v940, %v941
      %v943 = vsel %vm891, %v938, %v942
      %v944 = vrot.slane %v682, 1
      %v945 = vrot.slane %v678, 2
      %v946 = vor.u32 %v944, %v945
      %v947 = vsel %vm891, %v942, %v946
      %v948 = vrot.slane %v690, 1
      %v949 = vrot.slane %v686, 2
      %v950 = vor.u32 %v948, %v949
      %v951 = vsel %vm891, %v946, %v950
      %v952 = vrot.slane %v698, 1
      %v953 = vrot.slane %v694, 2
      %v954 = vor.u32 %v952, %v953
      %v955 = vsel %vm891, %v950, %v954
      %v956 = vrot.slane %v706, 1
      %v957 = vrot.slane %v702, 2
      %v958 = vor.u32 %v956, %v957
      %v959 = vsel %vm891, %v954, %v958
      %v960 = vrot.slane %v714, 1
      %v961 = vrot.slane %v710, 2
      %v962 = vor.u32 %v960, %v961
      %v963 = vsel %vm891, %v958, %v962
      %v965 = vshrl.u32 %v844, 16
      %v967 = vrot.slane %v965, 1
      %v968 = vshll.u32 %v844, 16
      %v970 = vrot.slane %v968, 2
      %v971 = vor.u32 %v967, %v970
      %v972 = vsel %vm891, %v962, %v971
      %v974 = vshrl.u32 %v890, 16
      %v976 = vrot.slane %v974, 1
      %v977 = vshll.u32 %v890, 16
      %v979 = vrot.slane %v977, 2
      %v980 = vor.u32 %v976, %v979
      %v981 = vsel %vm891, %v971, %v980
      %982 = vrot.lane.b32.xlu0 %v903, 16
      %v983 = vpop.permute.xlu0 %982
      %984 = vrot.lane.b32.xlu0 %v907, 16
      %v985 = vpop.permute.xlu0 %984
      %986 = vrot.lane.b32.xlu0 %v911, 16
      %v987 = vpop.permute.xlu0 %986
      %988 = vrot.lane.b32.xlu0 %v915, 16
      %v989 = vpop.permute.xlu0 %988
      %990 = vrot.lane.b32.xlu0 %v919, 16
      %v991 = vpop.permute.xlu0 %990
      %992 = vrot.lane.b32.xlu0 %v923, 16
      %v993 = vpop.permute.xlu0 %992
      %994 = vrot.lane.b32.xlu0 %v927, 16
      %v995 = vpop.permute.xlu0 %994
      %996 = vrot.lane.b32.xlu0 %v931, 16
      %v997 = vpop.permute.xlu0 %996
      %998 = vrot.lane.b32.xlu0 %v935, 16
      %v999 = vpop.permute.xlu0 %998
      %1000 = vrot.lane.b32.xlu0 %v939, 16
      %v1001 = vpop.permute.xlu0 %1000
      %1002 = vrot.lane.b32.xlu0 %v943, 16
      %v1003 = vpop.permute.xlu0 %1002
      %1004 = vrot.lane.b32.xlu0 %v947, 16
      %v1005 = vpop.permute.xlu0 %1004
      %1006 = vrot.lane.b32.xlu0 %v951, 16
      %v1007 = vpop.permute.xlu0 %1006
      %1008 = vrot.lane.b32.xlu0 %v955, 16
      %v1009 = vpop.permute.xlu0 %1008
      %1010 = vrot.lane.b32.xlu0 %v959, 16
      %v1011 = vpop.permute.xlu0 %1010
      %1012 = vrot.lane.b32.xlu0 %v963, 16
      %v1013 = vpop.permute.xlu0 %1012
      %1014 = vrot.lane.b32.xlu0 %v972, 16
      %v1015 = vpop.permute.xlu0 %1014
      %1016 = vrot.lane.b32.xlu0 %v981, 16
      %v1017 = vpop.permute.xlu0 %1016
      %v1019 = vunpack.c.l.b16 %v473
      %v1020 = vpack.c.b16 %v519, %v1019
      %vm1021 = vcmask 1045504
      %v1022 = vrot.slane %v1020, 2
      %v1023 = vrot.slane %v554, 2
      %v1024 = vsel %vm1021, %v1022, %v1023
      %v1025 = vrot.slane %v555, 2
      %v1026 = vsel %vm1021, %v1023, %v1025
      %v1027 = vrot.slane %v556, 2
      %v1028 = vsel %vm1021, %v1025, %v1027
      %v1029 = vrot.slane %v557, 2
      %v1030 = vsel %vm1021, %v1027, %v1029
      %v1031 = vrot.slane %v558, 2
      %v1032 = vsel %vm1021, %v1029, %v1031
      %v1033 = vrot.slane %v559, 2
      %v1034 = vsel %vm1021, %v1031, %v1033
      %v1035 = vrot.slane %v560, 2
      %v1036 = vsel %vm1021, %v1033, %v1035
      %v1037 = vrot.slane %v561, 2
      %v1038 = vsel %vm1021, %v1035, %v1037
      %v1039 = vrot.slane %v562, 2
      %v1040 = vsel %vm1021, %v1037, %v1039
      %v1041 = vrot.slane %v563, 2
      %v1042 = vsel %vm1021, %v1039, %v1041
      %v1043 = vrot.slane %v564, 2
      %v1044 = vsel %vm1021, %v1041, %v1043
      %v1045 = vrot.slane %v565, 2
      %v1046 = vsel %vm1021, %v1043, %v1045
      %v1047 = vrot.slane %v566, 2
      %v1048 = vsel %vm1021, %v1045, %v1047
      %v1049 = vrot.slane %v567, 2
      %v1050 = vsel %vm1021, %v1047, %v1049
      %v1051 = vrot.slane %v568, 2
      %v1052 = vsel %vm1021, %v1049, %v1051
      %v1053 = vrot.slane %v569, 2
      %v1054 = vsel %vm1021, %v1051, %v1053
      %v1055 = vrot.slane %v844, 2
      %v1056 = vsel %vm1021, %v1053, %v1055
      %v1057 = vrot.slane %v890, 2
      %v1058 = vsel %vm1021, %v1055, %v1057
      %1059 = vrot.lane.b32.xlu0 %v1024, 20
      %v1060 = vpop.permute.xlu0 %1059
      %1061 = vrot.lane.b32.xlu0 %v1026, 20
      %v1062 = vpop.permute.xlu0 %1061
      %1063 = vrot.lane.b32.xlu0 %v1028, 20
      %v1064 = vpop.permute.xlu0 %1063
      %1065 = vrot.lane.b32.xlu0 %v1030, 20
      %v1066 = vpop.permute.xlu0 %1065
      %1067 = vrot.lane.b32.xlu0 %v1032, 20
      %v1068 = vpop.permute.xlu0 %1067
      %1069 = vrot.lane.b32.xlu0 %v1034, 20
      %v1070 = vpop.permute.xlu0 %1069
      %1071 = vrot.lane.b32.xlu0 %v1036, 20
      %v1072 = vpop.permute.xlu0 %1071
      %1073 = vrot.lane.b32.xlu0 %v1038, 20
      %v1074 = vpop.permute.xlu0 %1073
      %1075 = vrot.lane.b32.xlu0 %v1040, 20
      %v1076 = vpop.permute.xlu0 %1075
      %1077 = vrot.lane.b32.xlu0 %v1042, 20
      %v1078 = vpop.permute.xlu0 %1077
      %1079 = vrot.lane.b32.xlu0 %v1044, 20
      %v1080 = vpop.permute.xlu0 %1079
      %1081 = vrot.lane.b32.xlu0 %v1046, 20
      %v1082 = vpop.permute.xlu0 %1081
      %1083 = vrot.lane.b32.xlu0 %v1048, 20
      %v1084 = vpop.permute.xlu0 %1083
      %1085 = vrot.lane.b32.xlu0 %v1050, 20
      %v1086 = vpop.permute.xlu0 %1085
      %1087 = vrot.lane.b32.xlu0 %v1052, 20
      %v1088 = vpop.permute.xlu0 %1087
      %1089 = vrot.lane.b32.xlu0 %v1054, 20
      %v1090 = vpop.permute.xlu0 %1089
      %1091 = vrot.lane.b32.xlu0 %v1056, 20
      %v1092 = vpop.permute.xlu0 %1091
      %1093 = vrot.lane.b32.xlu0 %v1058, 20
      %v1094 = vpop.permute.xlu0 %1093
      %v1099 = vunpack.c.l.b16 %v474
      %v1100 = vunpack.c.l.b16 %v475
      %v1101 = vunpack.c.l.b16 %v476
      %v1102 = vunpack.c.l.b16 %v477
      %v1103 = vpack.c.b16 %v521, %v1099
      %v1104 = vpack.c.b16 %v1101, %v1100
      %v1105 = vpack.c.b16 %v1102, %v1102
      %v1106 = vrot.slane %v1103, 2
      %v1107 = vsel %vm1021, %v1106, %v1025
      %v1108 = vrot.slane %v1104, 2
      %v1109 = vsel %vm1021, %v1055, %v1108
      %v1110 = vrot.slane %v1105, 2
      %v1111 = vsel %vm1021, %v1108, %v1110
      %1112 = vrot.lane.b32.xlu0 %v1107, 24
      %v1113 = vpop.permute.xlu0 %1112
      %1114 = vrot.lane.b32.xlu0 %v1028, 24
      %v1115 = vpop.permute.xlu0 %1114
      %1116 = vrot.lane.b32.xlu0 %v1030, 24
      %v1117 = vpop.permute.xlu0 %1116
      %1118 = vrot.lane.b32.xlu0 %v1032, 24
      %v1119 = vpop.permute.xlu0 %1118
      %1120 = vrot.lane.b32.xlu0 %v1034, 24
      %v1121 = vpop.permute.xlu0 %1120
      %1122 = vrot.lane.b32.xlu0 %v1036, 24
      %v1123 = vpop.permute.xlu0 %1122
      %1124 = vrot.lane.b32.xlu0 %v1038, 24
      %v1125 = vpop.permute.xlu0 %1124
      %1126 = vrot.lane.b32.xlu0 %v1040, 24
      %v1127 = vpop.permute.xlu0 %1126
      %1128 = vrot.lane.b32.xlu0 %v1042, 24
      %v1129 = vpop.permute.xlu0 %1128
      %1130 = vrot.lane.b32.xlu0 %v1044, 24
      %v1131 = vpop.permute.xlu0 %1130
      %1132 = vrot.lane.b32.xlu0 %v1046, 24
      %v1133 = vpop.permute.xlu0 %1132
      %1134 = vrot.lane.b32.xlu0 %v1048, 24
      %v1135 = vpop.permute.xlu0 %1134
      %1136 = vrot.lane.b32.xlu0 %v1050, 24
      %v1137 = vpop.permute.xlu0 %1136
      %1138 = vrot.lane.b32.xlu0 %v1052, 24
      %v1139 = vpop.permute.xlu0 %1138
      %1140 = vrot.lane.b32.xlu0 %v1054, 24
      %v1141 = vpop.permute.xlu0 %1140
      %1142 = vrot.lane.b32.xlu0 %v1056, 24
      %v1143 = vpop.permute.xlu0 %1142
      %1144 = vrot.lane.b32.xlu0 %v1109, 24
      %v1145 = vpop.permute.xlu0 %1144
      %1146 = vrot.lane.b32.xlu0 %v1111, 24
      %v1147 = vpop.permute.xlu0 %1146
      %v1149 = vunpack.c.l.b16 %v478
      %v1150 = vpack.c.b16 %v1149, %v1149
      %vm1151 = vsmask.f32 5376
      %v1153 = vshrl.u32 %v1103, 16
      %v1155 = vrot.slane %v1153, 2
      %v1156 = vshll.u32 %v1103, 16
      %v1158 = vrot.slane %v1156, 3
      %v1159 = vor.u32 %v1155, %v1158
      %v1160 = vrot.slane %v602, 2
      %v1161 = vrot.slane %v598, 3
      %v1162 = vor.u32 %v1160, %v1161
      %v1163 = vsel %vm1151, %v1159, %v1162
      %v1164 = vrot.slane %v610, 2
      %v1165 = vrot.slane %v606, 3
      %v1166 = vor.u32 %v1164, %v1165
      %v1167 = vsel %vm1151, %v1162, %v1166
      %v1168 = vrot.slane %v618, 2
      %v1169 = vrot.slane %v614, 3
      %v1170 = vor.u32 %v1168, %v1169
      %v1171 = vsel %vm1151, %v1166, %v1170
      %v1172 = vrot.slane %v626, 2
      %v1173 = vrot.slane %v622, 3
      %v1174 = vor.u32 %v1172, %v1173
      %v1175 = vsel %vm1151, %v1170, %v1174
      %v1176 = vrot.slane %v634, 2
      %v1177 = vrot.slane %v630, 3
      %v1178 = vor.u32 %v1176, %v1177
      %v1179 = vsel %vm1151, %v1174, %v1178
      %v1180 = vrot.slane %v642, 2
      %v1181 = vrot.slane %v638, 3
      %v1182 = vor.u32 %v1180, %v1181
      %v1183 = vsel %vm1151, %v1178, %v1182
      %v1184 = vrot.slane %v650, 2
      %v1185 = vrot.slane %v646, 3
      %v1186 = vor.u32 %v1184, %v1185
      %v1187 = vsel %vm1151, %v1182, %v1186
      %v1188 = vrot.slane %v658, 2
      %v1189 = vrot.slane %v654, 3
      %v1190 = vor.u32 %v1188, %v1189
      %v1191 = vsel %vm1151, %v1186, %v1190
      %v1192 = vrot.slane %v666, 2
      %v1193 = vrot.slane %v662, 3
      %v1194 = vor.u32 %v1192, %v1193
      %v1195 = vsel %vm1151, %v1190, %v1194
      %v1196 = vrot.slane %v674, 2
      %v1197 = vrot.slane %v670, 3
      %v1198 = vor.u32 %v1196, %v1197
      %v1199 = vsel %vm1151, %v1194, %v1198
      %v1200 = vrot.slane %v682, 2
      %v1201 = vrot.slane %v678, 3
      %v1202 = vor.u32 %v1200, %v1201
      %v1203 = vsel %vm1151, %v1198, %v1202
      %v1204 = vrot.slane %v690, 2
      %v1205 = vrot.slane %v686, 3
      %v1206 = vor.u32 %v1204, %v1205
      %v1207 = vsel %vm1151, %v1202, %v1206
      %v1208 = vrot.slane %v698, 2
      %v1209 = vrot.slane %v694, 3
      %v1210 = vor.u32 %v1208, %v1209
      %v1211 = vsel %vm1151, %v1206, %v1210
      %v1212 = vrot.slane %v706, 2
      %v1213 = vrot.slane %v702, 3
      %v1214 = vor.u32 %v1212, %v1213
      %v1215 = vsel %vm1151, %v1210, %v1214
      %v1216 = vrot.slane %v714, 2
      %v1217 = vrot.slane %v710, 3
      %v1218 = vor.u32 %v1216, %v1217
      %v1219 = vsel %vm1151, %v1214, %v1218
      %v1220 = vrot.slane %v965, 2
      %v1221 = vrot.slane %v968, 3
      %v1222 = vor.u32 %v1220, %v1221
      %v1223 = vsel %vm1151, %v1218, %v1222
      %v1225 = vshrl.u32 %v1104, 16
      %v1227 = vrot.slane %v1225, 2
      %v1228 = vshll.u32 %v1104, 16
      %v1230 = vrot.slane %v1228, 3
      %v1231 = vor.u32 %v1227, %v1230
      %v1232 = vsel %vm1151, %v1222, %v1231
      %v1234 = vshrl.u32 %v1150, 16
      %v1236 = vrot.slane %v1234, 2
      %v1237 = vshll.u32 %v1150, 16
      %v1239 = vrot.slane %v1237, 3
      %v1240 = vor.u32 %v1236, %v1239
      %v1241 = vsel %vm1151, %v1231, %v1240
      %1242 = vrot.lane.b32.xlu0 %v1163, 28
      %v1243 = vpop.permute.xlu0 %1242
      %1244 = vrot.lane.b32.xlu0 %v1167, 28
      %v1245 = vpop.permute.xlu0 %1244
      %1246 = vrot.lane.b32.xlu0 %v1171, 28
      %v1247 = vpop.permute.xlu0 %1246
      %1248 = vrot.lane.b32.xlu0 %v1175, 28
      %v1249 = vpop.permute.xlu0 %1248
      %1250 = vrot.lane.b32.xlu0 %v1179, 28
      %v1251 = vpop.permute.xlu0 %1250
      %1252 = vrot.lane.b32.xlu0 %v1183, 28
      %v1253 = vpop.permute.xlu0 %1252
      %1254 = vrot.lane.b32.xlu0 %v1187, 28
      %v1255 = vpop.permute.xlu0 %1254
      %1256 = vrot.lane.b32.xlu0 %v1191, 28
      %v1257 = vpop.permute.xlu0 %1256
      %1258 = vrot.lane.b32.xlu0 %v1195, 28
      %v1259 = vpop.permute.xlu0 %1258
      %1260 = vrot.lane.b32.xlu0 %v1199, 28
      %v1261 = vpop.permute.xlu0 %1260
      %1262 = vrot.lane.b32.xlu0 %v1203, 28
      %v1263 = vpop.permute.xlu0 %1262
      %1264 = vrot.lane.b32.xlu0 %v1207, 28
      %v1265 = vpop.permute.xlu0 %1264
      %1266 = vrot.lane.b32.xlu0 %v1211, 28
      %v1267 = vpop.permute.xlu0 %1266
      %1268 = vrot.lane.b32.xlu0 %v1215, 28
      %v1269 = vpop.permute.xlu0 %1268
      %1270 = vrot.lane.b32.xlu0 %v1219, 28
      %v1271 = vpop.permute.xlu0 %1270
      %1272 = vrot.lane.b32.xlu0 %v1223, 28
      %v1273 = vpop.permute.xlu0 %1272
      %1274 = vrot.lane.b32.xlu0 %v1232, 28
      %v1275 = vpop.permute.xlu0 %1274
      %1276 = vrot.lane.b32.xlu0 %v1241, 28
      %v1277 = vpop.permute.xlu0 %1276
      %v1279 = vunpack.c.l.b16 %v479
      %v1280 = vpack.c.b16 %v521, %v1279
      %vm1281 = vcmask 1044480
      %v1282 = vrot.slane %v1280, 3
      %v1283 = vrot.slane %v555, 3
      %v1284 = vsel %vm1281, %v1282, %v1283
      %v1285 = vrot.slane %v556, 3
      %v1286 = vsel %vm1281, %v1283, %v1285
      %v1287 = vrot.slane %v557, 3
      %v1288 = vsel %vm1281, %v1285, %v1287
      %v1289 = vrot.slane %v558, 3
      %v1290 = vsel %vm1281, %v1287, %v1289
      %v1291 = vrot.slane %v559, 3
      %v1292 = vsel %vm1281, %v1289, %v1291
      %v1293 = vrot.slane %v560, 3
      %v1294 = vsel %vm1281, %v1291, %v1293
      %v1295 = vrot.slane %v561, 3
      %v1296 = vsel %vm1281, %v1293, %v1295
      %v1297 = vrot.slane %v562, 3
      %v1298 = vsel %vm1281, %v1295, %v1297
      %v1299 = vrot.slane %v563, 3
      %v1300 = vsel %vm1281, %v1297, %v1299
      %v1301 = vrot.slane %v564, 3
      %v1302 = vsel %vm1281, %v1299, %v1301
      %v1303 = vrot.slane %v565, 3
      %v1304 = vsel %vm1281, %v1301, %v1303
      %v1305 = vrot.slane %v566, 3
      %v1306 = vsel %vm1281, %v1303, %v1305
      %v1307 = vrot.slane %v567, 3
      %v1308 = vsel %vm1281, %v1305, %v1307
      %v1309 = vrot.slane %v568, 3
      %v1310 = vsel %vm1281, %v1307, %v1309
      %v1311 = vrot.slane %v569, 3
      %v1312 = vsel %vm1281, %v1309, %v1311
      %v1313 = vrot.slane %v844, 3
      %v1314 = vsel %vm1281, %v1311, %v1313
      %v1315 = vrot.slane %v1104, 3
      %v1316 = vsel %vm1281, %v1313, %v1315
      %v1317 = vrot.slane %v1150, 3
      %v1318 = vsel %vm1281, %v1315, %v1317
      %1319 = vrot.lane.b32.xlu0 %v1284, 32
      %v1320 = vpop.permute.xlu0 %1319
      %1321 = vrot.lane.b32.xlu0 %v1286, 32
      %v1322 = vpop.permute.xlu0 %1321
      %1323 = vrot.lane.b32.xlu0 %v1288, 32
      %v1324 = vpop.permute.xlu0 %1323
      %1325 = vrot.lane.b32.xlu0 %v1290, 32
      %v1326 = vpop.permute.xlu0 %1325
      %1327 = vrot.lane.b32.xlu0 %v1292, 32
      %v1328 = vpop.permute.xlu0 %1327
      %1329 = vrot.lane.b32.xlu0 %v1294, 32
      %v1330 = vpop.permute.xlu0 %1329
      %1331 = vrot.lane.b32.xlu0 %v1296, 32
      %v1332 = vpop.permute.xlu0 %1331
      %1333 = vrot.lane.b32.xlu0 %v1298, 32
      %v1334 = vpop.permute.xlu0 %1333
      %1335 = vrot.lane.b32.xlu0 %v1300, 32
      %v1336 = vpop.permute.xlu0 %1335
      %1337 = vrot.lane.b32.xlu0 %v1302, 32
      %v1338 = vpop.permute.xlu0 %1337
      %1339 = vrot.lane.b32.xlu0 %v1304, 32
      %v1340 = vpop.permute.xlu0 %1339
      %1341 = vrot.lane.b32.xlu0 %v1306, 32
      %v1342 = vpop.permute.xlu0 %1341
      %1343 = vrot.lane.b32.xlu0 %v1308, 32
      %v1344 = vpop.permute.xlu0 %1343
      %1345 = vrot.lane.b32.xlu0 %v1310, 32
      %v1346 = vpop.permute.xlu0 %1345
      %1347 = vrot.lane.b32.xlu0 %v1312, 32
      %v1348 = vpop.permute.xlu0 %1347
      %1349 = vrot.lane.b32.xlu0 %v1314, 32
      %v1350 = vpop.permute.xlu0 %1349
      %1351 = vrot.lane.b32.xlu0 %v1316, 32
      %v1352 = vpop.permute.xlu0 %1351
      %1353 = vrot.lane.b32.xlu0 %v1318, 32
      %v1354 = vpop.permute.xlu0 %1353
      %vm1355 = vcmask 31744
      %v1357 = vsel %vm1355, %v552, %v723
      %v1359 = vsel %vm1355, %v553, %v725
      %v1361 = vsel %vm1355, %v554, %v727
      %v1363 = vsel %vm1355, %v555, %v729
      %v1365 = vsel %vm1355, %v556, %v731
      %v1367 = vsel %vm1355, %v557, %v733
      %v1369 = vsel %vm1355, %v558, %v735
      %v1371 = vsel %vm1355, %v559, %v737
      %v1373 = vsel %vm1355, %v560, %v739
      %v1375 = vsel %vm1355, %v561, %v741
      %v1377 = vsel %vm1355, %v562, %v743
      %v1379 = vsel %vm1355, %v563, %v745
      %v1381 = vsel %vm1355, %v564, %v747
      %v1383 = vsel %vm1355, %v565, %v749
      %v1385 = vsel %vm1355, %v566, %v751
      %v1387 = vsel %vm1355, %v567, %v753
      %v1389 = vsel %vm1355, %v568, %v755
      %v1391 = vsel %vm1355, %v569, %v757
      %vm1392 = vcmask 64512
      %v1394 = vsel %vm1392, %v1357, %v800
      %v1396 = vsel %vm1392, %v1359, %v802
      %v1398 = vsel %vm1392, %v1361, %v804
      %v1400 = vsel %vm1392, %v1363, %v806
      %v1402 = vsel %vm1392, %v1365, %v808
      %v1404 = vsel %vm1392, %v1367, %v810
      %v1406 = vsel %vm1392, %v1369, %v812
      %v1408 = vsel %vm1392, %v1371, %v814
      %v1410 = vsel %vm1392, %v1373, %v816
      %v1412 = vsel %vm1392, %v1375, %v818
      %v1414 = vsel %vm1392, %v1377, %v820
      %v1416 = vsel %vm1392, %v1379, %v822
      %v1418 = vsel %vm1392, %v1381, %v824
      %v1420 = vsel %vm1392, %v1383, %v826
      %v1422 = vsel %vm1392, %v1385, %v828
      %v1424 = vsel %vm1392, %v1387, %v830
      %v1426 = vsel %vm1392, %v1389, %v832
      %v1428 = vsel %vm1392, %v1391, %v834
      %vm1429 = vcmask 97280
      %v1431 = vsel %vm1429, %v1394, %v853
      %v1433 = vsel %vm1429, %v1396, %v855
      %v1435 = vsel %vm1429, %v1398, %v857
      %v1437 = vsel %vm1429, %v1400, %v859
      %v1439 = vsel %vm1429, %v1402, %v861
      %v1441 = vsel %vm1429, %v1404, %v863
      %v1443 = vsel %vm1429, %v1406, %v865
      %v1445 = vsel %vm1429, %v1408, %v867
      %v1447 = vsel %vm1429, %v1410, %v869
      %v1449 = vsel %vm1429, %v1412, %v871
      %v1451 = vsel %vm1429, %v1414, %v873
      %v1453 = vsel %vm1429, %v1416, %v875
      %v1455 = vsel %vm1429, %v1418, %v877
      %v1457 = vsel %vm1429, %v1420, %v879
      %v1459 = vsel %vm1429, %v1422, %v881
      %v1461 = vsel %vm1429, %v1424, %v883
      %v1463 = vsel %vm1429, %v1426, %v885
      %v1465 = vsel %vm1429, %v1428, %v887
      %vm1466 = vcmask 130048
      %v1468 = vsel %vm1466, %v1431, %v983
      %v1470 = vsel %vm1466, %v1433, %v985
      %v1472 = vsel %vm1466, %v1435, %v987
      %v1474 = vsel %vm1466, %v1437, %v989
      %v1476 = vsel %vm1466, %v1439, %v991
      %v1478 = vsel %vm1466, %v1441, %v993
      %v1480 = vsel %vm1466, %v1443, %v995
      %v1482 = vsel %vm1466, %v1445, %v997
      %v1484 = vsel %vm1466, %v1447, %v999
      %v1486 = vsel %vm1466, %v1449, %v1001
      %v1488 = vsel %vm1466, %v1451, %v1003
      %v1490 = vsel %vm1466, %v1453, %v1005
      %v1492 = vsel %vm1466, %v1455, %v1007
      %v1494 = vsel %vm1466, %v1457, %v1009
      %v1496 = vsel %vm1466, %v1459, %v1011
      %v1498 = vsel %vm1466, %v1461, %v1013
      %v1500 = vsel %vm1466, %v1463, %v1015
      %v1502 = vsel %vm1466, %v1465, %v1017
      %vm1503 = vcmask 162816
      %v1505 = vsel %vm1503, %v1468, %v1060
      %v1507 = vsel %vm1503, %v1470, %v1062
      %v1509 = vsel %vm1503, %v1472, %v1064
      %v1511 = vsel %vm1503, %v1474, %v1066
      %v1513 = vsel %vm1503, %v1476, %v1068
      %v1515 = vsel %vm1503, %v1478, %v1070
      %v1517 = vsel %vm1503, %v1480, %v1072
      %v1519 = vsel %vm1503, %v1482, %v1074
      %v1521 = vsel %vm1503, %v1484, %v1076
      %v1523 = vsel %vm1503, %v1486, %v1078
      %v1525 = vsel %vm1503, %v1488, %v1080
      %v1527 = vsel %vm1503, %v1490, %v1082
      %v1529 = vsel %vm1503, %v1492, %v1084
      %v1531 = vsel %vm1503, %v1494, %v1086
      %v1533 = vsel %vm1503, %v1496, %v1088
      %v1535 = vsel %vm1503, %v1498, %v1090
      %v1537 = vsel %vm1503, %v1500, %v1092
      %v1539 = vsel %vm1503, %v1502, %v1094
      %vm1540 = vcmask 195584
      %v1542 = vsel %vm1540, %v1505, %v1113
      %v1544 = vsel %vm1540, %v1507, %v1115
      %v1546 = vsel %vm1540, %v1509, %v1117
      %v1548 = vsel %vm1540, %v1511, %v1119
      %v1550 = vsel %vm1540, %v1513, %v1121
      %v1552 = vsel %vm1540, %v1515, %v1123
      %v1554 = vsel %vm1540, %v1517, %v1125
      %v1556 = vsel %vm1540, %v1519, %v1127
      %v1558 = vsel %vm1540, %v1521, %v1129
      %v1560 = vsel %vm1540, %v1523, %v1131
      %v1562 = vsel %vm1540, %v1525, %v1133
      %v1564 = vsel %vm1540, %v1527, %v1135
      %v1566 = vsel %vm1540, %v1529, %v1137
      %v1568 = vsel %vm1540, %v1531, %v1139
      %v1570 = vsel %vm1540, %v1533, %v1141
      %v1572 = vsel %vm1540, %v1535, %v1143
      %v1574 = vsel %vm1540, %v1537, %v1145
      %v1576 = vsel %vm1540, %v1539, %v1147
      %vm1577 = vcmask 228352
      %v1579 = vsel %vm1577, %v1542, %v1243
      %v1581 = vsel %vm1577, %v1544, %v1245
      %v1583 = vsel %vm1577, %v1546, %v1247
      %v1585 = vsel %vm1577, %v1548, %v1249
      %v1587 = vsel %vm1577, %v1550, %v1251
      %v1589 = vsel %vm1577, %v1552, %v1253
      %v1591 = vsel %vm1577, %v1554, %v1255
      %v1593 = vsel %vm1577, %v1556, %v1257
      %v1595 = vsel %vm1577, %v1558, %v1259
      %v1597 = vsel %vm1577, %v1560, %v1261
      %v1599 = vsel %vm1577, %v1562, %v1263
      %v1601 = vsel %vm1577, %v1564, %v1265
      %v1603 = vsel %vm1577, %v1566, %v1267
      %v1605 = vsel %vm1577, %v1568, %v1269
      %v1607 = vsel %vm1577, %v1570, %v1271
      %v1609 = vsel %vm1577, %v1572, %v1273
      %v1611 = vsel %vm1577, %v1574, %v1275
      %v1613 = vsel %vm1577, %v1576, %v1277
      %vm1614 = vcmask 261120
      %v1616 = vsel %vm1614, %v1579, %v1320
      %v1618 = vsel %vm1614, %v1581, %v1322
      %v1620 = vsel %vm1614, %v1583, %v1324
      %v1622 = vsel %vm1614, %v1585, %v1326
      %v1624 = vsel %vm1614, %v1587, %v1328
      %v1626 = vsel %vm1614, %v1589, %v1330
      %v1628 = vsel %vm1614, %v1591, %v1332
      %v1630 = vsel %vm1614, %v1593, %v1334
      %v1632 = vsel %vm1614, %v1595, %v1336
      %v1634 = vsel %vm1614, %v1597, %v1338
      %v1636 = vsel %vm1614, %v1599, %v1340
      %v1638 = vsel %vm1614, %v1601, %v1342
      %v1640 = vsel %vm1614, %v1603, %v1344
      %v1642 = vsel %vm1614, %v1605, %v1346
      %v1644 = vsel %vm1614, %v1607, %v1348
      %v1646 = vsel %vm1614, %v1609, %v1350
      %v1648 = vsel %vm1614, %v1611, %v1352
      %v1650 = vsel %vm1614, %v1613, %v1354
      %v1651 = vld [vmem:[%s2] sm:$0xf]
      %v1652 = vld [vmem:[%s2 + $0x4] sm:$0xf]
      %v1653 = vld [vmem:[%s2 + $0x8] sm:$0xf]
      %v1654 = vld [vmem:[%s2 + $0xc] sm:$0xf]
      %v1655 = vld [vmem:[%s2 + $0x10] sm:$0x3]
      %v1656 = vld [vmem:[%s6] sm:$0x1]
      %v1658 = vperm.slane %v1656, 0
      %v1665 = vunpack.c.l.b16 %v1651
      %v1666 = vunpack.c.l.b16 %v1652
      %v1667 = vunpack.c.l.b16 %v1653
      %v1668 = vunpack.c.l.b16 %v1654
      %v1669 = vunpack.c.l.b16 %v1655
      %v1670 = vpack.c.b16 %v1666, %v1665
      %v1671 = vpack.c.b16 %v1668, %v1667
      %v1672 = vpack.c.b16 %v1669, %v1669
      %vm1675 = vcmask 293888
      %v1676 = vsel %vm1675, %v1616, 0
      %v1678 = vsel %vm1675, %v1618, 0
      %v1680 = vsel %vm1675, %v1620, 0
      %v1682 = vsel %vm1675, %v1622, 0
      %v1684 = vsel %vm1675, %v1624, 0
      %v1686 = vsel %vm1675, %v1626, 0
      %v1688 = vsel %vm1675, %v1628, 0
      %v1690 = vsel %vm1675, %v1630, 0
      %v1692 = vsel %vm1675, %v1632, 0
      %v1694 = vsel %vm1675, %v1634, 0
      %v1696 = vsel %vm1675, %v1636, 0
      %v1698 = vsel %vm1675, %v1638, 0
      %v1700 = vsel %vm1675, %v1640, 0
      %v1702 = vsel %vm1675, %v1642, 0
      %v1704 = vsel %vm1675, %v1644, 0
      %v1706 = vsel %vm1675, %v1646, 0
      %v1708 = vsel %vm1675, %v1648, 0
      %v1710 = vsel %vm1675, %v1650, 0
      %vm1712 = vcmask 1041408
      %v1714 = vsel %vm1712, %v1672, 0
      %1716 = vmatpush.bf16.msra.mxu0 0
      %1717 = vmatpush.bf16.msra.mxu0 0
      %1718 = vmatpush.bf16.msra.mxu0 0
      %1719 = vmatpush.bf16.msra.mxu0 0
      %1720 = vmatpush.bf16.msra.mxu0 0
      %1721 = vmatpush.bf16.msra.mxu0 %v1714
      %1722 = vmatpush.bf16.msra.mxu0 %v1671
      %1723 = vmatpush.bf16.msra.mxu0 %v1670
      %1724 = vmatmul.bf16.gmra.mxu0 %v1676
      %v1725 = vpop.f32.mrf.mxu0
      %v1726 = vadd.f32 %v1658, %v1725
      %v1727 = vpop.f32.mrf.mxu0
      %v1728 = vadd.f32 %v1658, %v1727
      %1729 = vmatmul.bf16.gmra.mxu0 %v1678
      %v1730 = vpop.f32.mrf.mxu0
      %v1731 = vadd.f32 %v1658, %v1730
      %v1732 = vpop.f32.mrf.mxu0
      %v1733 = vadd.f32 %v1658, %v1732
      %1734 = vmatmul.bf16.gmra.mxu0 %v1680
      %v1735 = vpop.f32.mrf.mxu0
      %v1736 = vadd.f32 %v1658, %v1735
      %v1737 = vpop.f32.mrf.mxu0
      %v1738 = vadd.f32 %v1658, %v1737
      %1739 = vmatmul.bf16.gmra.mxu0 %v1682
      %v1740 = vpop.f32.mrf.mxu0
      %v1741 = vadd.f32 %v1658, %v1740
      %v1742 = vpop.f32.mrf.mxu0
      %v1743 = vadd.f32 %v1658, %v1742
      %1744 = vmatmul.bf16.gmra.mxu0 %v1684
      %v1745 = vpop.f32.mrf.mxu0
      %v1746 = vadd.f32 %v1658, %v1745
      %v1747 = vpop.f32.mrf.mxu0
      %v1748 = vadd.f32 %v1658, %v1747
      %1749 = vmatmul.bf16.gmra.mxu0 %v1686
      %v1750 = vpop.f32.mrf.mxu0
      %v1751 = vadd.f32 %v1658, %v1750
      %v1752 = vpop.f32.mrf.mxu0
      %v1753 = vadd.f32 %v1658, %v1752
      %1754 = vmatmul.bf16.gmra.mxu0 %v1688
      %v1755 = vpop.f32.mrf.mxu0
      %v1756 = vadd.f32 %v1658, %v1755
      %v1757 = vpop.f32.mrf.mxu0
      %v1758 = vadd.f32 %v1658, %v1757
      %1759 = vmatmul.bf16.gmra.mxu0 %v1690
      %v1760 = vpop.f32.mrf.mxu0
      %v1761 = vadd.f32 %v1658, %v1760
      %v1762 = vpop.f32.mrf.mxu0
      %v1763 = vadd.f32 %v1658, %v1762
      %1764 = vmatmul.bf16.gmra.mxu0 %v1692
      %v1765 = vpop.f32.mrf.mxu0
      %v1766 = vadd.f32 %v1658, %v1765
      %v1767 = vpop.f32.mrf.mxu0
      %v1768 = vadd.f32 %v1658, %v1767
      %1769 = vmatmul.bf16.gmra.mxu0 %v1694
      %v1770 = vpop.f32.mrf.mxu0
      %v1771 = vadd.f32 %v1658, %v1770
      %v1772 = vpop.f32.mrf.mxu0
      %v1773 = vadd.f32 %v1658, %v1772
      %1774 = vmatmul.bf16.gmra.mxu0 %v1696
      %v1775 = vpop.f32.mrf.mxu0
      %v1776 = vadd.f32 %v1658, %v1775
      %v1777 = vpop.f32.mrf.mxu0
      %v1778 = vadd.f32 %v1658, %v1777
      %1779 = vmatmul.bf16.gmra.mxu0 %v1698
      %v1780 = vpop.f32.mrf.mxu0
      %v1781 = vadd.f32 %v1658, %v1780
      %v1782 = vpop.f32.mrf.mxu0
      %v1783 = vadd.f32 %v1658, %v1782
      %1784 = vmatmul.bf16.gmra.mxu0 %v1700
      %v1785 = vpop.f32.mrf.mxu0
      %v1786 = vadd.f32 %v1658, %v1785
      %v1787 = vpop.f32.mrf.mxu0
      %v1788 = vadd.f32 %v1658, %v1787
      %1789 = vmatmul.bf16.gmra.mxu0 %v1702
      %v1790 = vpop.f32.mrf.mxu0
      %v1791 = vadd.f32 %v1658, %v1790
      %v1792 = vpop.f32.mrf.mxu0
      %v1793 = vadd.f32 %v1658, %v1792
      %1794 = vmatmul.bf16.gmra.mxu0 %v1704
      %v1795 = vpop.f32.mrf.mxu0
      %v1796 = vadd.f32 %v1658, %v1795
      %v1797 = vpop.f32.mrf.mxu0
      %v1798 = vadd.f32 %v1658, %v1797
      %1799 = vmatmul.bf16.gmra.mxu0 %v1706
      %v1800 = vpop.f32.mrf.mxu0
      %v1801 = vadd.f32 %v1658, %v1800
      %v1802 = vpop.f32.mrf.mxu0
      %v1803 = vadd.f32 %v1658, %v1802
      %1804 = vmatmul.bf16.gmra.mxu0 %v1708
      %v1805 = vpop.f32.mrf.mxu0
      %v1806 = vadd.f32 %v1658, %v1805
      %v1807 = vpop.f32.mrf.mxu0
      %v1808 = vadd.f32 %v1658, %v1807
      %1809 = vmatmul.bf16.gmra.mxu0 %v1710
      %v1810 = vpop.f32.mrf.mxu0
      %v1811 = vadd.f32 %v1658, %v1810
      %v1812 = vpop.f32.mrf.mxu0
      %v1813 = vadd.f32 %v1658, %v1812
      %1814 = vdwg.mxu0
      %1816 = vset.pattern.permute.xlu0 0
      %1817 = vperm.xlu0 %1816, %v334
      %v1818 = vpop.permute.xlu0 %1817
      %1821 = vset.pattern.permute.xlu0 0
      %1822 = vperm.xlu0 %1821, %v335
      %v1823 = vpop.permute.xlu0 %1822
      %1826 = vset.pattern.permute.xlu0 0
      %1827 = vperm.xlu0 %1826, %v336
      %v1828 = vpop.permute.xlu0 %1827
      %1831 = vset.pattern.permute.xlu0 0
      %1832 = vperm.xlu0 %1831, %v337
      %v1833 = vpop.permute.xlu0 %1832
      %1836 = vset.pattern.permute.xlu0 0
      %1837 = vperm.xlu0 %1836, %v338
      %v1838 = vpop.permute.xlu0 %1837
      %1841 = vset.pattern.permute.xlu0 0
      %1842 = vperm.xlu0 %1841, %v339
      %v1843 = vpop.permute.xlu0 %1842
      %1846 = vset.pattern.permute.xlu0 0
      %1847 = vperm.xlu0 %1846, %v340
      %v1848 = vpop.permute.xlu0 %1847
      %1851 = vset.pattern.permute.xlu0 0
      %1852 = vperm.xlu0 %1851, %v341
      %v1853 = vpop.permute.xlu0 %1852
      %1856 = vset.pattern.permute.xlu0 0
      %1857 = vperm.xlu0 %1856, %v342
      %v1858 = vpop.permute.xlu0 %1857
      %1861 = vset.pattern.permute.xlu0 0
      %1862 = vperm.xlu0 %1861, %v343
      %v1863 = vpop.permute.xlu0 %1862
      %1866 = vset.pattern.permute.xlu0 0
      %1867 = vperm.xlu0 %1866, %v344
      %v1868 = vpop.permute.xlu0 %1867
      %1871 = vset.pattern.permute.xlu0 0
      %1872 = vperm.xlu0 %1871, %v345
      %v1873 = vpop.permute.xlu0 %1872
      %1876 = vset.pattern.permute.xlu0 0
      %1877 = vperm.xlu0 %1876, %v346
      %v1878 = vpop.permute.xlu0 %1877
      %1881 = vset.pattern.permute.xlu0 0
      %1882 = vperm.xlu0 %1881, %v347
      %v1883 = vpop.permute.xlu0 %1882
      %1886 = vset.pattern.permute.xlu0 0
      %1887 = vperm.xlu0 %1886, %v348
      %v1888 = vpop.permute.xlu0 %1887
      %1891 = vset.pattern.permute.xlu0 0
      %1892 = vperm.xlu0 %1891, %v349
      %v1893 = vpop.permute.xlu0 %1892
      %1896 = vset.pattern.permute.xlu0 0
      %1897 = vperm.xlu0 %1896, %v350
      %v1898 = vpop.permute.xlu0 %1897
      %1901 = vset.pattern.permute.xlu0 0
      %1902 = vperm.xlu0 %1901, %v351
      %v1903 = vpop.permute.xlu0 %1902
      %1906 = vset.pattern.permute.xlu0 0
      %1907 = vperm.xlu0 %1906, %v352
      %v1908 = vpop.permute.xlu0 %1907
      %1911 = vset.pattern.permute.xlu0 0
      %1912 = vperm.xlu0 %1911, %v353
      %v1913 = vpop.permute.xlu0 %1912
      %1916 = vset.pattern.permute.xlu0 0
      %1917 = vperm.xlu0 %1916, %v354
      %v1918 = vpop.permute.xlu0 %1917
      %1921 = vset.pattern.permute.xlu0 0
      %1922 = vperm.xlu0 %1921, %v355
      %v1923 = vpop.permute.xlu0 %1922
      %1926 = vset.pattern.permute.xlu0 0
      %1927 = vperm.xlu0 %1926, %v356
      %v1928 = vpop.permute.xlu0 %1927
      %1931 = vset.pattern.permute.xlu0 0
      %1932 = vperm.xlu0 %1931, %v357
      %v1933 = vpop.permute.xlu0 %1932
      %1936 = vset.pattern.permute.xlu0 0
      %1937 = vperm.xlu0 %1936, %v358
      %v1938 = vpop.permute.xlu0 %1937
      %1941 = vset.pattern.permute.xlu0 0
      %1942 = vperm.xlu0 %1941, %v359
      %v1943 = vpop.permute.xlu0 %1942
      %1946 = vset.pattern.permute.xlu0 0
      %1947 = vperm.xlu0 %1946, %v360
      %v1948 = vpop.permute.xlu0 %1947
      %1951 = vset.pattern.permute.xlu0 0
      %1952 = vperm.xlu0 %1951, %v361
      %v1953 = vpop.permute.xlu0 %1952
      %1956 = vset.pattern.permute.xlu0 0
      %1957 = vperm.xlu0 %1956, %v362
      %v1958 = vpop.permute.xlu0 %1957
      %1961 = vset.pattern.permute.xlu0 0
      %1962 = vperm.xlu0 %1961, %v363
      %v1963 = vpop.permute.xlu0 %1962
      %1966 = vset.pattern.permute.xlu0 0
      %1967 = vperm.xlu0 %1966, %v364
      %v1968 = vpop.permute.xlu0 %1967
      %1971 = vset.pattern.permute.xlu0 0
      %1972 = vperm.xlu0 %1971, %v365
      %v1973 = vpop.permute.xlu0 %1972
      %1976 = vset.pattern.permute.xlu0 0
      %1977 = vperm.xlu0 %1976, %v366
      %v1978 = vpop.permute.xlu0 %1977
      %1981 = vset.pattern.permute.xlu0 0
      %1982 = vperm.xlu0 %1981, %v367
      %v1983 = vpop.permute.xlu0 %1982
      %1986 = vset.pattern.permute.xlu0 0
      %1987 = vperm.xlu0 %1986, %v368
      %v1988 = vpop.permute.xlu0 %1987
      %1991 = vset.pattern.permute.xlu0 0
      %1992 = vperm.xlu0 %1991, %v369
      %v1993 = vpop.permute.xlu0 %1992
      %v1995 = vmul.f32 %v1726, %v1818
      %v1996 = vmul.f32 %v1728, %v1823
      %v1997 = vmul.f32 %v1731, %v1828
      %v1998 = vmul.f32 %v1733, %v1833
      %v1999 = vmul.f32 %v1736, %v1838
      %v2000 = vmul.f32 %v1738, %v1843
      %v2001 = vmul.f32 %v1741, %v1848
      %v2002 = vmul.f32 %v1743, %v1853
      %v2003 = vmul.f32 %v1746, %v1858
      %v2004 = vmul.f32 %v1748, %v1863
      %v2005 = vmul.f32 %v1751, %v1868
      %v2006 = vmul.f32 %v1753, %v1873
      %v2007 = vmul.f32 %v1756, %v1878
      %v2008 = vmul.f32 %v1758, %v1883
      %v2009 = vmul.f32 %v1761, %v1888
      %v2010 = vmul.f32 %v1763, %v1893
      %v2011 = vmul.f32 %v1766, %v1898
      %v2012 = vmul.f32 %v1768, %v1903
      %v2013 = vmul.f32 %v1771, %v1908
      %v2014 = vmul.f32 %v1773, %v1913
      %v2015 = vmul.f32 %v1776, %v1918
      %v2016 = vmul.f32 %v1778, %v1923
      %v2017 = vmul.f32 %v1781, %v1928
      %v2018 = vmul.f32 %v1783, %v1933
      %v2019 = vmul.f32 %v1786, %v1938
      %v2020 = vmul.f32 %v1788, %v1943
      %v2021 = vmul.f32 %v1791, %v1948
      %v2022 = vmul.f32 %v1793, %v1953
      %v2023 = vmul.f32 %v1796, %v1958
      %v2024 = vmul.f32 %v1798, %v1963
      %v2025 = vmul.f32 %v1801, %v1968
      %v2026 = vmul.f32 %v1803, %v1973
      %v2027 = vmul.f32 %v1806, %v1978
      %v2028 = vmul.f32 %v1808, %v1983
      %v2029 = vmul.f32 %v1811, %v1988
      %v2030 = vmul.f32 %v1813, %v1993
      %v2031 = vpack.c.bf16 %v1995, %v1995
      %v2032 = vpack.c.bf16 %v1996, %v1996
      %v2033 = vpack.c.bf16 %v1997, %v1997
      %v2034 = vpack.c.bf16 %v1998, %v1998
      %v2035 = vpack.c.bf16 %v1999, %v1999
      %v2036 = vpack.c.bf16 %v2000, %v2000
      %v2037 = vpack.c.bf16 %v2001, %v2001
      %v2038 = vpack.c.bf16 %v2002, %v2002
      %v2039 = vpack.c.bf16 %v2003, %v2003
      %v2040 = vpack.c.bf16 %v2004, %v2004
      %v2041 = vpack.c.bf16 %v2005, %v2005
      %v2042 = vpack.c.bf16 %v2006, %v2006
      %v2043 = vpack.c.bf16 %v2007, %v2007
      %v2044 = vpack.c.bf16 %v2008, %v2008
      %v2045 = vpack.c.bf16 %v2009, %v2009
      %v2046 = vpack.c.bf16 %v2010, %v2010
      %v2047 = vpack.c.bf16 %v2011, %v2011
      %v2048 = vpack.c.bf16 %v2012, %v2012
      %v2049 = vpack.c.bf16 %v2013, %v2013
      %v2050 = vpack.c.bf16 %v2014, %v2014
      %v2051 = vpack.c.bf16 %v2015, %v2015
      %v2052 = vpack.c.bf16 %v2016, %v2016
      %v2053 = vpack.c.bf16 %v2017, %v2017
      %v2054 = vpack.c.bf16 %v2018, %v2018
      %v2055 = vpack.c.bf16 %v2019, %v2019
      %v2056 = vpack.c.bf16 %v2020, %v2020
      %v2057 = vpack.c.bf16 %v2021, %v2021
      %v2058 = vpack.c.bf16 %v2022, %v2022
      %v2059 = vpack.c.bf16 %v2023, %v2023
      %v2060 = vpack.c.bf16 %v2024, %v2024
      %v2061 = vpack.c.bf16 %v2025, %v2025
      %v2062 = vpack.c.bf16 %v2026, %v2026
      %v2063 = vpack.c.bf16 %v2027, %v2027
      %v2064 = vpack.c.bf16 %v2028, %v2028
      %v2065 = vpack.c.bf16 %v2029, %v2029
      %v2066 = vpack.c.bf16 %v2030, %v2030
      %2067 = vst.msk [vmem:[#allocation2 + $0x10] sm:$0xf] %vm412, %v2031
      %2068 = vst.msk [vmem:[#allocation2 + $0x14] sm:$0xf] %vm412, %v2032
      %2069 = vst.msk [vmem:[#allocation2 + $0x18] sm:$0xf] %vm412, %v2033
      %2070 = vst.msk [vmem:[#allocation2 + $0x1c] sm:$0xf] %vm412, %v2034
      %2071 = vst.msk [vmem:[#allocation2 + $0x20] sm:$0xf] %vm412, %v2035
      %2072 = vst.msk [vmem:[#allocation2 + $0x24] sm:$0xf] %vm412, %v2036
      %2073 = vst.msk [vmem:[#allocation2 + $0x28] sm:$0xf] %vm412, %v2037
      %2074 = vst.msk [vmem:[#allocation2 + $0x2c] sm:$0xf] %vm412, %v2038
      %2075 = vst.msk [vmem:[#allocation2 + $0x30] sm:$0xf] %vm412, %v2039
      %2076 = vst.msk [vmem:[#allocation2 + $0x34] sm:$0xf] %vm412, %v2040
      %2077 = vst.msk [vmem:[#allocation2 + $0x38] sm:$0xf] %vm412, %v2041
      %2078 = vst.msk [vmem:[#allocation2 + $0x3c] sm:$0xf] %vm412, %v2042
      %2079 = vst.msk [vmem:[#allocation2 + $0x40] sm:$0xf] %vm412, %v2043
      %2080 = vst.msk [vmem:[#allocation2 + $0x44] sm:$0xf] %vm412, %v2044
      %2081 = vst.msk [vmem:[#allocation2 + $0x48] sm:$0xf] %vm412, %v2045
      %2082 = vst.msk [vmem:[#allocation2 + $0x4c] sm:$0xf] %vm412, %v2046
      %2083 = vst.msk [vmem:[#allocation2 + $0x50] sm:$0xf] %vm412, %v2047
      %2084 = vst.msk [vmem:[#allocation2 + $0x54] sm:$0xf] %vm412, %v2048
      %2085 = vst.msk [vmem:[#allocation2 + $0x58] sm:$0xf] %vm412, %v2049
      %2086 = vst.msk [vmem:[#allocation2 + $0x5c] sm:$0xf] %vm412, %v2050
      %2087 = vst.msk [vmem:[#allocation2 + $0x60] sm:$0xf] %vm412, %v2051
      %2088 = vst.msk [vmem:[#allocation2 + $0x64] sm:$0xf] %vm412, %v2052
      %2089 = vst.msk [vmem:[#allocation2 + $0x68] sm:$0xf] %vm412, %v2053
      %2090 = vst.msk [vmem:[#allocation2 + $0x6c] sm:$0xf] %vm412, %v2054
      %2091 = vst.msk [vmem:[#allocation2 + $0x70] sm:$0xf] %vm412, %v2055
      %2092 = vst.msk [vmem:[#allocation2 + $0x74] sm:$0xf] %vm412, %v2056
      %2093 = vst.msk [vmem:[#allocation2 + $0x78] sm:$0xf] %vm412, %v2057
      %2094 = vst.msk [vmem:[#allocation2 + $0x7c] sm:$0xf] %vm412, %v2058
      %2095 = vst.msk [vmem:[#allocation2 + $0x80] sm:$0xf] %vm412, %v2059
      %2096 = vst.msk [vmem:[#allocation2 + $0x84] sm:$0xf] %vm412, %v2060
      %2097 = vst.msk [vmem:[#allocation2 + $0x88] sm:$0xf] %vm412, %v2061
      %2098 = vst.msk [vmem:[#allocation2 + $0x8c] sm:$0xf] %vm412, %v2062
      %2099 = vst.msk [vmem:[#allocation2 + $0x90] sm:$0xf] %vm412, %v2063
      %2100 = vst.msk [vmem:[#allocation2 + $0x94] sm:$0xf] %vm412, %v2064
      %2101 = vst.msk [vmem:[#allocation2 + $0x98] sm:$0xf] %vm412, %v2065
      %2102 = vst.msk [vmem:[#allocation2 + $0x9c] sm:$0xf] %vm412, %v2066
      %v2103 = vld [vmem:[#allocation2 + $0x4] sm:$0xc]
      %v2104 = vld [vmem:[#allocation2 + $0x8] sm:$0xf]
      %v2105 = vld [vmem:[#allocation2 + $0xc] sm:$0xf]
      %v2106 = vld [vmem:[#allocation2 + $0x10] sm:$0xf]
      %v2107 = vld [vmem:[#allocation2 + $0x14] sm:$0xf]
      %v2108 = vld [vmem:[#allocation2 + $0x18] sm:$0xf]
      %v2109 = vld [vmem:[#allocation2 + $0x1c] sm:$0xf]
      %v2110 = vld [vmem:[#allocation2 + $0x20] sm:$0xf]
      %v2111 = vld [vmem:[#allocation2 + $0x24] sm:$0xf]
      %v2112 = vld [vmem:[#allocation2 + $0x28] sm:$0xf]
      %v2113 = vld [vmem:[#allocation2 + $0x2c] sm:$0xf]
      %v2114 = vld [vmem:[#allocation2 + $0x30] sm:$0xf]
      %v2115 = vld [vmem:[#allocation2 + $0x34] sm:$0xf]
      %v2116 = vld [vmem:[#allocation2 + $0x38] sm:$0xf]
      %v2117 = vld [vmem:[#allocation2 + $0x3c] sm:$0xf]
      %v2118 = vld [vmem:[#allocation2 + $0x40] sm:$0xf]
      %v2119 = vld [vmem:[#allocation2 + $0x44] sm:$0xf]
      %v2120 = vld [vmem:[#allocation2 + $0x48] sm:$0xf]
      %v2121 = vld [vmem:[#allocation2 + $0x4c] sm:$0xf]
      %v2122 = vld [vmem:[#allocation2 + $0x50] sm:$0xf]
      %v2123 = vld [vmem:[#allocation2 + $0x54] sm:$0xf]
      %v2124 = vld [vmem:[#allocation2 + $0x58] sm:$0xf]
      %v2125 = vld [vmem:[#allocation2 + $0x5c] sm:$0xf]
      %v2126 = vld [vmem:[#allocation2 + $0x60] sm:$0xf]
      %v2127 = vld [vmem:[#allocation2 + $0x64] sm:$0xf]
      %v2128 = vld [vmem:[#allocation2 + $0x68] sm:$0xf]
      %v2129 = vld [vmem:[#allocation2 + $0x6c] sm:$0xf]
      %v2130 = vld [vmem:[#allocation2 + $0x70] sm:$0xf]
      %v2131 = vld [vmem:[#allocation2 + $0x74] sm:$0xf]
      %v2132 = vld [vmem:[#allocation2 + $0x78] sm:$0xf]
      %v2133 = vld [vmem:[#allocation2 + $0x7c] sm:$0xf]
      %v2134 = vld [vmem:[#allocation2 + $0x80] sm:$0xf]
      %v2135 = vld [vmem:[#allocation2 + $0x84] sm:$0xf]
      %v2136 = vld [vmem:[#allocation2 + $0x88] sm:$0xf]
      %v2137 = vld [vmem:[#allocation2 + $0x8c] sm:$0xf]
      %v2138 = vld [vmem:[#allocation2 + $0x90] sm:$0xf]
      %v2139 = vld [vmem:[#allocation2 + $0x94] sm:$0x7]
      %v2140 = vld [vmem:[#allocation2 + $0x4] sm:$0x8]
      %v2141 = vld [vmem:[#allocation2 + $0x94] sm:$0xf]
      %v2142 = vld [vmem:[#allocation2 + $0xc] sm:$0x8]
      %v2143 = vld [vmem:[#allocation2 + $0x98] sm:$0xf]
      %v2144 = vld [vmem:[#allocation2 + $0x9c] sm:$0xf]
      %v2145 = vld [vmem:[#allocation2 + $0xa0] sm:$0x1]
      %v2146 = vld [vmem:[#allocation2 + $0xa0] sm:$0xf]
      %v2147 = vld [vmem:[#allocation2 + $0xa4] sm:$0xf]
      %v2148 = vld [vmem:[#allocation2 + $0xa8] sm:$0x1]
      %v2149 = vld [vmem:[#allocation2 + $0x18] sm:$0xe]
      %v2150 = vld [vmem:[#allocation2 + $0xa8] sm:$0x3]
      %v2188 = vunpack.c.l.b16 %v2103
      %v2189 = vunpack.c.l.b16 %v2104
      %v2190 = vunpack.c.l.b16 %v2105
      %v2191 = vunpack.c.l.b16 %v2106
      %v2192 = vunpack.c.l.b16 %v2107
      %v2193 = vunpack.c.l.b16 %v2108
      %v2194 = vunpack.c.l.b16 %v2109
      %v2195 = vunpack.c.l.b16 %v2110
      %v2196 = vunpack.c.l.b16 %v2111
      %v2197 = vunpack.c.l.b16 %v2112
      %v2198 = vunpack.c.l.b16 %v2113
      %v2199 = vunpack.c.l.b16 %v2114
      %v2200 = vunpack.c.l.b16 %v2115
      %v2201 = vunpack.c.l.b16 %v2116
      %v2202 = vunpack.c.l.b16 %v2117
      %v2203 = vunpack.c.l.b16 %v2118
      %v2204 = vunpack.c.l.b16 %v2119
      %v2205 = vunpack.c.l.b16 %v2120
      %v2206 = vunpack.c.l.b16 %v2121
      %v2207 = vunpack.c.l.b16 %v2122
      %v2208 = vunpack.c.l.b16 %v2123
      %v2209 = vunpack.c.l.b16 %v2124
      %v2210 = vunpack.c.l.b16 %v2125
      %v2211 = vunpack.c.l.b16 %v2126
      %v2212 = vunpack.c.l.b16 %v2127
      %v2213 = vunpack.c.l.b16 %v2128
      %v2214 = vunpack.c.l.b16 %v2129
      %v2215 = vunpack.c.l.b16 %v2130
      %v2216 = vunpack.c.l.b16 %v2131
      %v2217 = vunpack.c.l.b16 %v2132
      %v2218 = vunpack.c.l.b16 %v2133
      %v2219 = vunpack.c.l.b16 %v2134
      %v2220 = vunpack.c.l.b16 %v2135
      %v2221 = vunpack.c.l.b16 %v2136
      %v2222 = vunpack.c.l.b16 %v2137
      %v2223 = vunpack.c.l.b16 %v2138
      %v2224 = vunpack.c.l.b16 %v2139
      %v2225 = vpack.c.b16 %v2189, %v2188
      %v2226 = vpack.c.b16 %v2191, %v2190
      %v2227 = vpack.c.b16 %v2193, %v2192
      %v2228 = vpack.c.b16 %v2195, %v2194
      %v2229 = vpack.c.b16 %v2197, %v2196
      %v2230 = vpack.c.b16 %v2199, %v2198
      %v2231 = vpack.c.b16 %v2201, %v2200
      %v2232 = vpack.c.b16 %v2203, %v2202
      %v2233 = vpack.c.b16 %v2205, %v2204
      %v2234 = vpack.c.b16 %v2207, %v2206
      %v2235 = vpack.c.b16 %v2209, %v2208
      %v2236 = vpack.c.b16 %v2211, %v2210
      %v2237 = vpack.c.b16 %v2213, %v2212
      %v2238 = vpack.c.b16 %v2215, %v2214
      %v2239 = vpack.c.b16 %v2217, %v2216
      %v2240 = vpack.c.b16 %v2219, %v2218
      %v2241 = vpack.c.b16 %v2221, %v2220
      %v2242 = vpack.c.b16 %v2223, %v2222
      %v2243 = vpack.c.b16 %v2224, %v2224
      %v2245 = vunpack.c.l.b16 %v2140
      %v2246 = vpack.c.b16 %v2189, %v2245
      %v2248 = vshrl.u32 %v2246, 16
      %v2250 = vshll.u32 %v2246, 16
      %v2252 = vrot.slane %v2250, 1
      %v2253 = vor.u32 %v2248, %v2252
      %v2255 = vshll.u32 %v2226, 16
      %v2257 = vrot.slane %v2255, 1
      %v2258 = vsel %vm573, %v2253, %v2257
      %v2259 = vshrl.u32 %v2226, 16
      %v2261 = vor.u32 %v2259, %v2257
      %v2263 = vshll.u32 %v2227, 16
      %v2265 = vrot.slane %v2263, 1
      %v2266 = vsel %vm573, %v2261, %v2265
      %v2267 = vshrl.u32 %v2227, 16
      %v2269 = vor.u32 %v2267, %v2265
      %v2271 = vshll.u32 %v2228, 16
      %v2273 = vrot.slane %v2271, 1
      %v2274 = vsel %vm573, %v2269, %v2273
      %v2275 = vshrl.u32 %v2228, 16
      %v2277 = vor.u32 %v2275, %v2273
      %v2279 = vshll.u32 %v2229, 16
      %v2281 = vrot.slane %v2279, 1
      %v2282 = vsel %vm573, %v2277, %v2281
      %v2283 = vshrl.u32 %v2229, 16
      %v2285 = vor.u32 %v2283, %v2281
      %v2287 = vshll.u32 %v2230, 16
      %v2289 = vrot.slane %v2287, 1
      %v2290 = vsel %vm573, %v2285, %v2289
      %v2291 = vshrl.u32 %v2230, 16
      %v2293 = vor.u32 %v2291, %v2289
      %v2295 = vshll.u32 %v2231, 16
      %v2297 = vrot.slane %v2295, 1
      %v2298 = vsel %vm573, %v2293, %v2297
      %v2299 = vshrl.u32 %v2231, 16
      %v2301 = vor.u32 %v2299, %v2297
      %v2303 = vshll.u32 %v2232, 16
      %v2305 = vrot.slane %v2303, 1
      %v2306 = vsel %vm573, %v2301, %v2305
      %v2307 = vshrl.u32 %v2232, 16
      %v2309 = vor.u32 %v2307, %v2305
      %v2311 = vshll.u32 %v2233, 16
      %v2313 = vrot.slane %v2311, 1
      %v2314 = vsel %vm573, %v2309, %v2313
      %v2315 = vshrl.u32 %v2233, 16
      %v2317 = vor.u32 %v2315, %v2313
      %v2319 = vshll.u32 %v2234, 16
      %v2321 = vrot.slane %v2319, 1
      %v2322 = vsel %vm573, %v2317, %v2321
      %v2323 = vshrl.u32 %v2234, 16
      %v2325 = vor.u32 %v2323, %v2321
      %v2327 = vshll.u32 %v2235, 16
      %v2329 = vrot.slane %v2327, 1
      %v2330 = vsel %vm573, %v2325, %v2329
      %v2331 = vshrl.u32 %v2235, 16
      %v2333 = vor.u32 %v2331, %v2329
      %v2335 = vshll.u32 %v2236, 16
      %v2337 = vrot.slane %v2335, 1
      %v2338 = vsel %vm573, %v2333, %v2337
      %v2339 = vshrl.u32 %v2236, 16
      %v2341 = vor.u32 %v2339, %v2337
      %v2343 = vshll.u32 %v2237, 16
      %v2345 = vrot.slane %v2343, 1
      %v2346 = vsel %vm573, %v2341, %v2345
      %v2347 = vshrl.u32 %v2237, 16
      %v2349 = vor.u32 %v2347, %v2345
      %v2351 = vshll.u32 %v2238, 16
      %v2353 = vrot.slane %v2351, 1
      %v2354 = vsel %vm573, %v2349, %v2353
      %v2355 = vshrl.u32 %v2238, 16
      %v2357 = vor.u32 %v2355, %v2353
      %v2359 = vshll.u32 %v2239, 16
      %v2361 = vrot.slane %v2359, 1
      %v2362 = vsel %vm573, %v2357, %v2361
      %v2363 = vshrl.u32 %v2239, 16
      %v2365 = vor.u32 %v2363, %v2361
      %v2367 = vshll.u32 %v2240, 16
      %v2369 = vrot.slane %v2367, 1
      %v2370 = vsel %vm573, %v2365, %v2369
      %v2371 = vshrl.u32 %v2240, 16
      %v2373 = vor.u32 %v2371, %v2369
      %v2375 = vshll.u32 %v2241, 16
      %v2377 = vrot.slane %v2375, 1
      %v2378 = vsel %vm573, %v2373, %v2377
      %v2379 = vshrl.u32 %v2241, 16
      %v2381 = vor.u32 %v2379, %v2377
      %v2383 = vshll.u32 %v2242, 16
      %v2385 = vrot.slane %v2383, 1
      %v2386 = vsel %vm573, %v2381, %v2385
      %v2387 = vshrl.u32 %v2242, 16
      %v2389 = vor.u32 %v2387, %v2385
      %v2391 = vshll.u32 %v2243, 16
      %v2393 = vrot.slane %v2391, 1
      %v2394 = vsel %vm573, %v2389, %v2393
      %v2395 = vshrl.u32 %v2243, 16
      %v2397 = vor.u32 %v2395, %v2393
      %2398 = vrot.lane.b32.xlu0 %v2258, 8
      %v2399 = vpop.permute.xlu0 %2398
      %2400 = vrot.lane.b32.xlu0 %v2266, 8
      %v2401 = vpop.permute.xlu0 %2400
      %2402 = vrot.lane.b32.xlu0 %v2274, 8
      %v2403 = vpop.permute.xlu0 %2402
      %2404 = vrot.lane.b32.xlu0 %v2282, 8
      %v2405 = vpop.permute.xlu0 %2404
      %2406 = vrot.lane.b32.xlu0 %v2290, 8
      %v2407 = vpop.permute.xlu0 %2406
      %2408 = vrot.lane.b32.xlu0 %v2298, 8
      %v2409 = vpop.permute.xlu0 %2408
      %2410 = vrot.lane.b32.xlu0 %v2306, 8
      %v2411 = vpop.permute.xlu0 %2410
      %2412 = vrot.lane.b32.xlu0 %v2314, 8
      %v2413 = vpop.permute.xlu0 %2412
      %2414 = vrot.lane.b32.xlu0 %v2322, 8
      %v2415 = vpop.permute.xlu0 %2414
      %2416 = vrot.lane.b32.xlu0 %v2330, 8
      %v2417 = vpop.permute.xlu0 %2416
      %2418 = vrot.lane.b32.xlu0 %v2338, 8
      %v2419 = vpop.permute.xlu0 %2418
      %2420 = vrot.lane.b32.xlu0 %v2346, 8
      %v2421 = vpop.permute.xlu0 %2420
      %2422 = vrot.lane.b32.xlu0 %v2354, 8
      %v2423 = vpop.permute.xlu0 %2422
      %2424 = vrot.lane.b32.xlu0 %v2362, 8
      %v2425 = vpop.permute.xlu0 %2424
      %2426 = vrot.lane.b32.xlu0 %v2370, 8
      %v2427 = vpop.permute.xlu0 %2426
      %2428 = vrot.lane.b32.xlu0 %v2378, 8
      %v2429 = vpop.permute.xlu0 %2428
      %2430 = vrot.lane.b32.xlu0 %v2386, 8
      %v2431 = vpop.permute.xlu0 %2430
      %2432 = vrot.lane.b32.xlu0 %v2394, 8
      %v2433 = vpop.permute.xlu0 %2432
      %2434 = vrot.lane.b32.xlu0 %v2397, 8
      %v2435 = vpop.permute.xlu0 %2434
      %v2437 = vunpack.c.l.b16 %v2141
      %v2438 = vpack.c.b16 %v2437, %v2437
      %v2439 = vrot.slane %v2246, 1
      %v2440 = vrot.slane %v2226, 1
      %v2441 = vsel %vm761, %v2439, %v2440
      %v2442 = vrot.slane %v2227, 1
      %v2443 = vsel %vm761, %v2440, %v2442
      %v2444 = vrot.slane %v2228, 1
      %v2445 = vsel %vm761, %v2442, %v2444
      %v2446 = vrot.slane %v2229, 1
      %v2447 = vsel %vm761, %v2444, %v2446
      %v2448 = vrot.slane %v2230, 1
      %v2449 = vsel %vm761, %v2446, %v2448
      %v2450 = vrot.slane %v2231, 1
      %v2451 = vsel %vm761, %v2448, %v2450
      %v2452 = vrot.slane %v2232, 1
      %v2453 = vsel %vm761, %v2450, %v2452
      %v2454 = vrot.slane %v2233, 1
      %v2455 = vsel %vm761, %v2452, %v2454
      %v2456 = vrot.slane %v2234, 1
      %v2457 = vsel %vm761, %v2454, %v2456
      %v2458 = vrot.slane %v2235, 1
      %v2459 = vsel %vm761, %v2456, %v2458
      %v2460 = vrot.slane %v2236, 1
      %v2461 = vsel %vm761, %v2458, %v2460
      %v2462 = vrot.slane %v2237, 1
      %v2463 = vsel %vm761, %v2460, %v2462
      %v2464 = vrot.slane %v2238, 1
      %v2465 = vsel %vm761, %v2462, %v2464
      %v2466 = vrot.slane %v2239, 1
      %v2467 = vsel %vm761, %v2464, %v2466
      %v2468 = vrot.slane %v2240, 1
      %v2469 = vsel %vm761, %v2466, %v2468
      %v2470 = vrot.slane %v2241, 1
      %v2471 = vsel %vm761, %v2468, %v2470
      %v2472 = vrot.slane %v2242, 1
      %v2473 = vsel %vm761, %v2470, %v2472
      %v2474 = vrot.slane %v2438, 1
      %v2475 = vsel %vm761, %v2472, %v2474
      %2476 = vrot.lane.b32.xlu0 %v2441, 16
      %v2477 = vpop.permute.xlu0 %2476
      %2478 = vrot.lane.b32.xlu0 %v2443, 16
      %v2479 = vpop.permute.xlu0 %2478
      %2480 = vrot.lane.b32.xlu0 %v2445, 16
      %v2481 = vpop.permute.xlu0 %2480
      %2482 = vrot.lane.b32.xlu0 %v2447, 16
      %v2483 = vpop.permute.xlu0 %2482
      %2484 = vrot.lane.b32.xlu0 %v2449, 16
      %v2485 = vpop.permute.xlu0 %2484
      %2486 = vrot.lane.b32.xlu0 %v2451, 16
      %v2487 = vpop.permute.xlu0 %2486
      %2488 = vrot.lane.b32.xlu0 %v2453, 16
      %v2489 = vpop.permute.xlu0 %2488
      %2490 = vrot.lane.b32.xlu0 %v2455, 16
      %v2491 = vpop.permute.xlu0 %2490
      %2492 = vrot.lane.b32.xlu0 %v2457, 16
      %v2493 = vpop.permute.xlu0 %2492
      %2494 = vrot.lane.b32.xlu0 %v2459, 16
      %v2495 = vpop.permute.xlu0 %2494
      %2496 = vrot.lane.b32.xlu0 %v2461, 16
      %v2497 = vpop.permute.xlu0 %2496
      %2498 = vrot.lane.b32.xlu0 %v2463, 16
      %v2499 = vpop.permute.xlu0 %2498
      %2500 = vrot.lane.b32.xlu0 %v2465, 16
      %v2501 = vpop.permute.xlu0 %2500
      %2502 = vrot.lane.b32.xlu0 %v2467, 16
      %v2503 = vpop.permute.xlu0 %2502
      %2504 = vrot.lane.b32.xlu0 %v2469, 16
      %v2505 = vpop.permute.xlu0 %2504
      %2506 = vrot.lane.b32.xlu0 %v2471, 16
      %v2507 = vpop.permute.xlu0 %2506
      %2508 = vrot.lane.b32.xlu0 %v2473, 16
      %v2509 = vpop.permute.xlu0 %2508
      %2510 = vrot.lane.b32.xlu0 %v2475, 16
      %v2511 = vpop.permute.xlu0 %2510
      %2512 = vrot.lane.b32.xlu0 %v2474, 16
      %v2513 = vpop.permute.xlu0 %2512
      %v2517 = vunpack.c.l.b16 %v2142
      %v2518 = vunpack.c.l.b16 %v2143
      %v2519 = vunpack.c.l.b16 %v2144
      %v2520 = vpack.c.b16 %v2191, %v2517
      %v2521 = vpack.c.b16 %v2518, %v2437
      %v2522 = vpack.c.b16 %v2519, %v2519
      %v2523 = vrot.slane %v2520, 1
      %v2524 = vsel %vm761, %v2523, %v2442
      %v2525 = vrot.slane %v2521, 1
      %v2526 = vsel %vm761, %v2472, %v2525
      %v2527 = vrot.slane %v2522, 1
      %v2528 = vsel %vm761, %v2525, %v2527
      %2529 = vrot.lane.b32.xlu0 %v2524, 24
      %v2530 = vpop.permute.xlu0 %2529
      %2531 = vrot.lane.b32.xlu0 %v2445, 24
      %v2532 = vpop.permute.xlu0 %2531
      %2533 = vrot.lane.b32.xlu0 %v2447, 24
      %v2534 = vpop.permute.xlu0 %2533
      %2535 = vrot.lane.b32.xlu0 %v2449, 24
      %v2536 = vpop.permute.xlu0 %2535
      %2537 = vrot.lane.b32.xlu0 %v2451, 24
      %v2538 = vpop.permute.xlu0 %2537
      %2539 = vrot.lane.b32.xlu0 %v2453, 24
      %v2540 = vpop.permute.xlu0 %2539
      %2541 = vrot.lane.b32.xlu0 %v2455, 24
      %v2542 = vpop.permute.xlu0 %2541
      %2543 = vrot.lane.b32.xlu0 %v2457, 24
      %v2544 = vpop.permute.xlu0 %2543
      %2545 = vrot.lane.b32.xlu0 %v2459, 24
      %v2546 = vpop.permute.xlu0 %2545
      %2547 = vrot.lane.b32.xlu0 %v2461, 24
      %v2548 = vpop.permute.xlu0 %2547
      %2549 = vrot.lane.b32.xlu0 %v2463, 24
      %v2550 = vpop.permute.xlu0 %2549
      %2551 = vrot.lane.b32.xlu0 %v2465, 24
      %v2552 = vpop.permute.xlu0 %2551
      %2553 = vrot.lane.b32.xlu0 %v2467, 24
      %v2554 = vpop.permute.xlu0 %2553
      %2555 = vrot.lane.b32.xlu0 %v2469, 24
      %v2556 = vpop.permute.xlu0 %2555
      %2557 = vrot.lane.b32.xlu0 %v2471, 24
      %v2558 = vpop.permute.xlu0 %2557
      %2559 = vrot.lane.b32.xlu0 %v2473, 24
      %v2560 = vpop.permute.xlu0 %2559
      %2561 = vrot.lane.b32.xlu0 %v2526, 24
      %v2562 = vpop.permute.xlu0 %2561
      %2563 = vrot.lane.b32.xlu0 %v2528, 24
      %v2564 = vpop.permute.xlu0 %2563
      %2565 = vrot.lane.b32.xlu0 %v2527, 24
      %v2566 = vpop.permute.xlu0 %2565
      %v2567 = vpack.c.b16 %v2192, %v2191
      %v2568 = vpack.c.b16 %v2194, %v2193
      %v2569 = vpack.c.b16 %v2196, %v2195
      %v2570 = vpack.c.b16 %v2198, %v2197
      %v2571 = vpack.c.b16 %v2200, %v2199
      %v2572 = vpack.c.b16 %v2202, %v2201
      %v2573 = vpack.c.b16 %v2204, %v2203
      %v2574 = vpack.c.b16 %v2206, %v2205
      %v2575 = vpack.c.b16 %v2208, %v2207
      %v2576 = vpack.c.b16 %v2210, %v2209
      %v2577 = vpack.c.b16 %v2212, %v2211
      %v2578 = vpack.c.b16 %v2214, %v2213
      %v2579 = vpack.c.b16 %v2216, %v2215
      %v2580 = vpack.c.b16 %v2218, %v2217
      %v2581 = vpack.c.b16 %v2220, %v2219
      %v2582 = vpack.c.b16 %v2222, %v2221
      %v2583 = vpack.c.b16 %v2437, %v2223
      %v2584 = vpack.c.b16 %v2519, %v2518
      %vm2585 = vsmask.f32 2304
      %v2587 = vshrl.u32 %v2567, 16
      %v2589 = vrot.slane %v2587, 5
      %v2590 = vshll.u32 %v2567, 16
      %v2592 = vrot.slane %v2590, 6
      %v2593 = vor.u32 %v2589, %v2592
      %v2595 = vshrl.u32 %v2568, 16
      %v2597 = vrot.slane %v2595, 5
      %v2598 = vshll.u32 %v2568, 16
      %v2600 = vrot.slane %v2598, 6
      %v2601 = vor.u32 %v2597, %v2600
      %v2602 = vsel %vm2585, %v2593, %v2601
      %v2604 = vshrl.u32 %v2569, 16
      %v2606 = vrot.slane %v2604, 5
      %v2607 = vshll.u32 %v2569, 16
      %v2609 = vrot.slane %v2607, 6
      %v2610 = vor.u32 %v2606, %v2609
      %v2611 = vsel %vm2585, %v2601, %v2610
      %v2613 = vshrl.u32 %v2570, 16
      %v2615 = vrot.slane %v2613, 5
      %v2616 = vshll.u32 %v2570, 16
      %v2618 = vrot.slane %v2616, 6
      %v2619 = vor.u32 %v2615, %v2618
      %v2620 = vsel %vm2585, %v2610, %v2619
      %v2622 = vshrl.u32 %v2571, 16
      %v2624 = vrot.slane %v2622, 5
      %v2625 = vshll.u32 %v2571, 16
      %v2627 = vrot.slane %v2625, 6
      %v2628 = vor.u32 %v2624, %v2627
      %v2629 = vsel %vm2585, %v2619, %v2628
      %v2631 = vshrl.u32 %v2572, 16
      %v2633 = vrot.slane %v2631, 5
      %v2634 = vshll.u32 %v2572, 16
      %v2636 = vrot.slane %v2634, 6
      %v2637 = vor.u32 %v2633, %v2636
      %v2638 = vsel %vm2585, %v2628, %v2637
      %v2640 = vshrl.u32 %v2573, 16
      %v2642 = vrot.slane %v2640, 5
      %v2643 = vshll.u32 %v2573, 16
      %v2645 = vrot.slane %v2643, 6
      %v2646 = vor.u32 %v2642, %v2645
      %v2647 = vsel %vm2585, %v2637, %v2646
      %v2649 = vshrl.u32 %v2574, 16
      %v2651 = vrot.slane %v2649, 5
      %v2652 = vshll.u32 %v2574, 16
      %v2654 = vrot.slane %v2652, 6
      %v2655 = vor.u32 %v2651, %v2654
      %v2656 = vsel %vm2585, %v2646, %v2655
      %v2658 = vshrl.u32 %v2575, 16
      %v2660 = vrot.slane %v2658, 5
      %v2661 = vshll.u32 %v2575, 16
      %v2663 = vrot.slane %v2661, 6
      %v2664 = vor.u32 %v2660, %v2663
      %v2665 = vsel %vm2585, %v2655, %v2664
      %v2667 = vshrl.u32 %v2576, 16
      %v2669 = vrot.slane %v2667, 5
      %v2670 = vshll.u32 %v2576, 16
      %v2672 = vrot.slane %v2670, 6
      %v2673 = vor.u32 %v2669, %v2672
      %v2674 = vsel %vm2585, %v2664, %v2673
      %v2676 = vshrl.u32 %v2577, 16
      %v2678 = vrot.slane %v2676, 5
      %v2679 = vshll.u32 %v2577, 16
      %v2681 = vrot.slane %v2679, 6
      %v2682 = vor.u32 %v2678, %v2681
      %v2683 = vsel %vm2585, %v2673, %v2682
      %v2685 = vshrl.u32 %v2578, 16
      %v2687 = vrot.slane %v2685, 5
      %v2688 = vshll.u32 %v2578, 16
      %v2690 = vrot.slane %v2688, 6
      %v2691 = vor.u32 %v2687, %v2690
      %v2692 = vsel %vm2585, %v2682, %v2691
      %v2694 = vshrl.u32 %v2579, 16
      %v2696 = vrot.slane %v2694, 5
      %v2697 = vshll.u32 %v2579, 16
      %v2699 = vrot.slane %v2697, 6
      %v2700 = vor.u32 %v2696, %v2699
      %v2701 = vsel %vm2585, %v2691, %v2700
      %v2703 = vshrl.u32 %v2580, 16
      %v2705 = vrot.slane %v2703, 5
      %v2706 = vshll.u32 %v2580, 16
      %v2708 = vrot.slane %v2706, 6
      %v2709 = vor.u32 %v2705, %v2708
      %v2710 = vsel %vm2585, %v2700, %v2709
      %v2712 = vshrl.u32 %v2581, 16
      %v2714 = vrot.slane %v2712, 5
      %v2715 = vshll.u32 %v2581, 16
      %v2717 = vrot.slane %v2715, 6
      %v2718 = vor.u32 %v2714, %v2717
      %v2719 = vsel %vm2585, %v2709, %v2718
      %v2721 = vshrl.u32 %v2582, 16
      %v2723 = vrot.slane %v2721, 5
      %v2724 = vshll.u32 %v2582, 16
      %v2726 = vrot.slane %v2724, 6
      %v2727 = vor.u32 %v2723, %v2726
      %v2728 = vsel %vm2585, %v2718, %v2727
      %v2730 = vshrl.u32 %v2583, 16
      %v2732 = vrot.slane %v2730, 5
      %v2733 = vshll.u32 %v2583, 16
      %v2735 = vrot.slane %v2733, 6
      %v2736 = vor.u32 %v2732, %v2735
      %v2737 = vsel %vm2585, %v2727, %v2736
      %v2739 = vshrl.u32 %v2584, 16
      %v2741 = vrot.slane %v2739, 5
      %v2742 = vshll.u32 %v2584, 16
      %v2744 = vrot.slane %v2742, 6
      %v2745 = vor.u32 %v2741, %v2744
      %v2746 = vsel %vm2585, %v2736, %v2745
      %2747 = vrot.lane.b32.xlu0 %v2593, 32
      %v2748 = vpop.permute.xlu0 %2747
      %2749 = vrot.lane.b32.xlu0 %v2602, 32
      %v2750 = vpop.permute.xlu0 %2749
      %2751 = vrot.lane.b32.xlu0 %v2611, 32
      %v2752 = vpop.permute.xlu0 %2751
      %2753 = vrot.lane.b32.xlu0 %v2620, 32
      %v2754 = vpop.permute.xlu0 %2753
      %2755 = vrot.lane.b32.xlu0 %v2629, 32
      %v2756 = vpop.permute.xlu0 %2755
      %2757 = vrot.lane.b32.xlu0 %v2638, 32
      %v2758 = vpop.permute.xlu0 %2757
      %2759 = vrot.lane.b32.xlu0 %v2647, 32
      %v2760 = vpop.permute.xlu0 %2759
      %2761 = vrot.lane.b32.xlu0 %v2656, 32
      %v2762 = vpop.permute.xlu0 %2761
      %2763 = vrot.lane.b32.xlu0 %v2665, 32
      %v2764 = vpop.permute.xlu0 %2763
      %2765 = vrot.lane.b32.xlu0 %v2674, 32
      %v2766 = vpop.permute.xlu0 %2765
      %2767 = vrot.lane.b32.xlu0 %v2683, 32
      %v2768 = vpop.permute.xlu0 %2767
      %2769 = vrot.lane.b32.xlu0 %v2692, 32
      %v2770 = vpop.permute.xlu0 %2769
      %2771 = vrot.lane.b32.xlu0 %v2701, 32
      %v2772 = vpop.permute.xlu0 %2771
      %2773 = vrot.lane.b32.xlu0 %v2710, 32
      %v2774 = vpop.permute.xlu0 %2773
      %2775 = vrot.lane.b32.xlu0 %v2719, 32
      %v2776 = vpop.permute.xlu0 %2775
      %2777 = vrot.lane.b32.xlu0 %v2728, 32
      %v2778 = vpop.permute.xlu0 %2777
      %2779 = vrot.lane.b32.xlu0 %v2737, 32
      %v2780 = vpop.permute.xlu0 %2779
      %2781 = vrot.lane.b32.xlu0 %v2746, 32
      %v2782 = vpop.permute.xlu0 %2781
      %2783 = vrot.lane.b32.xlu0 %v2745, 32
      %v2784 = vpop.permute.xlu0 %2783
      %v2786 = vunpack.c.l.b16 %v2145
      %v2787 = vpack.c.b16 %v2786, %v2786
      %vm2788 = vcmask 1041408
      %v2789 = vrot.slane %v2567, 6
      %v2790 = vrot.slane %v2568, 6
      %v2791 = vsel %vm2788, %v2789, %v2790
      %v2792 = vrot.slane %v2569, 6
      %v2793 = vsel %vm2788, %v2790, %v2792
      %v2794 = vrot.slane %v2570, 6
      %v2795 = vsel %vm2788, %v2792, %v2794
      %v2796 = vrot.slane %v2571, 6
      %v2797 = vsel %vm2788, %v2794, %v2796
      %v2798 = vrot.slane %v2572, 6
      %v2799 = vsel %vm2788, %v2796, %v2798
      %v2800 = vrot.slane %v2573, 6
      %v2801 = vsel %vm2788, %v2798, %v2800
      %v2802 = vrot.slane %v2574, 6
      %v2803 = vsel %vm2788, %v2800, %v2802
      %v2804 = vrot.slane %v2575, 6
      %v2805 = vsel %vm2788, %v2802, %v2804
      %v2806 = vrot.slane %v2576, 6
      %v2807 = vsel %vm2788, %v2804, %v2806
      %v2808 = vrot.slane %v2577, 6
      %v2809 = vsel %vm2788, %v2806, %v2808
      %v2810 = vrot.slane %v2578, 6
      %v2811 = vsel %vm2788, %v2808, %v2810
      %v2812 = vrot.slane %v2579, 6
      %v2813 = vsel %vm2788, %v2810, %v2812
      %v2814 = vrot.slane %v2580, 6
      %v2815 = vsel %vm2788, %v2812, %v2814
      %v2816 = vrot.slane %v2581, 6
      %v2817 = vsel %vm2788, %v2814, %v2816
      %v2818 = vrot.slane %v2582, 6
      %v2819 = vsel %vm2788, %v2816, %v2818
      %v2820 = vrot.slane %v2583, 6
      %v2821 = vsel %vm2788, %v2818, %v2820
      %v2822 = vrot.slane %v2584, 6
      %v2823 = vsel %vm2788, %v2820, %v2822
      %v2824 = vrot.slane %v2787, 6
      %v2825 = vsel %vm2788, %v2822, %v2824
      %2826 = vrot.lane.b32.xlu0 %v2789, 40
      %v2827 = vpop.permute.xlu0 %2826
      %2828 = vrot.lane.b32.xlu0 %v2791, 40
      %v2829 = vpop.permute.xlu0 %2828
      %2830 = vrot.lane.b32.xlu0 %v2793, 40
      %v2831 = vpop.permute.xlu0 %2830
      %2832 = vrot.lane.b32.xlu0 %v2795, 40
      %v2833 = vpop.permute.xlu0 %2832
      %2834 = vrot.lane.b32.xlu0 %v2797, 40
      %v2835 = vpop.permute.xlu0 %2834
      %2836 = vrot.lane.b32.xlu0 %v2799, 40
      %v2837 = vpop.permute.xlu0 %2836
      %2838 = vrot.lane.b32.xlu0 %v2801, 40
      %v2839 = vpop.permute.xlu0 %2838
      %2840 = vrot.lane.b32.xlu0 %v2803, 40
      %v2841 = vpop.permute.xlu0 %2840
      %2842 = vrot.lane.b32.xlu0 %v2805, 40
      %v2843 = vpop.permute.xlu0 %2842
      %2844 = vrot.lane.b32.xlu0 %v2807, 40
      %v2845 = vpop.permute.xlu0 %2844
      %2846 = vrot.lane.b32.xlu0 %v2809, 40
      %v2847 = vpop.permute.xlu0 %2846
      %2848 = vrot.lane.b32.xlu0 %v2811, 40
      %v2849 = vpop.permute.xlu0 %2848
      %2850 = vrot.lane.b32.xlu0 %v2813, 40
      %v2851 = vpop.permute.xlu0 %2850
      %2852 = vrot.lane.b32.xlu0 %v2815, 40
      %v2853 = vpop.permute.xlu0 %2852
      %2854 = vrot.lane.b32.xlu0 %v2817, 40
      %v2855 = vpop.permute.xlu0 %2854
      %2856 = vrot.lane.b32.xlu0 %v2819, 40
      %v2857 = vpop.permute.xlu0 %2856
      %2858 = vrot.lane.b32.xlu0 %v2821, 40
      %v2859 = vpop.permute.xlu0 %2858
      %2860 = vrot.lane.b32.xlu0 %v2823, 40
      %v2861 = vpop.permute.xlu0 %2860
      %2862 = vrot.lane.b32.xlu0 %v2825, 40
      %v2863 = vpop.permute.xlu0 %2862
      %v2867 = vunpack.c.l.b16 %v2146
      %v2868 = vunpack.c.l.b16 %v2147
      %v2869 = vunpack.c.l.b16 %v2148
      %v2870 = vpack.c.b16 %v2868, %v2867
      %v2871 = vpack.c.b16 %v2869, %v2869
      %v2872 = vrot.slane %v2870, 6
      %v2873 = vsel %vm2788, %v2822, %v2872
      %v2874 = vrot.slane %v2871, 6
      %v2875 = vsel %vm2788, %v2872, %v2874
      %2876 = vrot.lane.b32.xlu0 %v2790, 48
      %v2877 = vpop.permute.xlu0 %2876
      %2878 = vrot.lane.b32.xlu0 %v2793, 48
      %v2879 = vpop.permute.xlu0 %2878
      %2880 = vrot.lane.b32.xlu0 %v2795, 48
      %v2881 = vpop.permute.xlu0 %2880
      %2882 = vrot.lane.b32.xlu0 %v2797, 48
      %v2883 = vpop.permute.xlu0 %2882
      %2884 = vrot.lane.b32.xlu0 %v2799, 48
      %v2885 = vpop.permute.xlu0 %2884
      %2886 = vrot.lane.b32.xlu0 %v2801, 48
      %v2887 = vpop.permute.xlu0 %2886
      %2888 = vrot.lane.b32.xlu0 %v2803, 48
      %v2889 = vpop.permute.xlu0 %2888
      %2890 = vrot.lane.b32.xlu0 %v2805, 48
      %v2891 = vpop.permute.xlu0 %2890
      %2892 = vrot.lane.b32.xlu0 %v2807, 48
      %v2893 = vpop.permute.xlu0 %2892
      %2894 = vrot.lane.b32.xlu0 %v2809, 48
      %v2895 = vpop.permute.xlu0 %2894
      %2896 = vrot.lane.b32.xlu0 %v2811, 48
      %v2897 = vpop.permute.xlu0 %2896
      %2898 = vrot.lane.b32.xlu0 %v2813, 48
      %v2899 = vpop.permute.xlu0 %2898
      %2900 = vrot.lane.b32.xlu0 %v2815, 48
      %v2901 = vpop.permute.xlu0 %2900
      %2902 = vrot.lane.b32.xlu0 %v2817, 48
      %v2903 = vpop.permute.xlu0 %2902
      %2904 = vrot.lane.b32.xlu0 %v2819, 48
      %v2905 = vpop.permute.xlu0 %2904
      %2906 = vrot.lane.b32.xlu0 %v2821, 48
      %v2907 = vpop.permute.xlu0 %2906
      %2908 = vrot.lane.b32.xlu0 %v2823, 48
      %v2909 = vpop.permute.xlu0 %2908
      %2910 = vrot.lane.b32.xlu0 %v2873, 48
      %v2911 = vpop.permute.xlu0 %2910
      %2912 = vrot.lane.b32.xlu0 %v2875, 48
      %v2913 = vpop.permute.xlu0 %2912
      %v2915 = vunpack.c.l.b16 %v2149
      %v2916 = vpack.c.b16 %v2194, %v2915
      %vm2917 = vsmask.f32 1280
      %v2919 = vshrl.u32 %v2916, 16
      %v2921 = vrot.slane %v2919, 6
      %v2922 = vshll.u32 %v2916, 16
      %v2924 = vrot.slane %v2922, 7
      %v2925 = vor.u32 %v2921, %v2924
      %v2926 = vrot.slane %v2604, 6
      %v2927 = vrot.slane %v2607, 7
      %v2928 = vor.u32 %v2926, %v2927
      %v2929 = vsel %vm2917, %v2925, %v2928
      %v2930 = vrot.slane %v2613, 6
      %v2931 = vrot.slane %v2616, 7
      %v2932 = vor.u32 %v2930, %v2931
      %v2933 = vsel %vm2917, %v2928, %v2932
      %v2934 = vrot.slane %v2622, 6
      %v2935 = vrot.slane %v2625, 7
      %v2936 = vor.u32 %v2934, %v2935
      %v2937 = vsel %vm2917, %v2932, %v2936
      %v2938 = vrot.slane %v2631, 6
      %v2939 = vrot.slane %v2634, 7
      %v2940 = vor.u32 %v2938, %v2939
      %v2941 = vsel %vm2917, %v2936, %v2940
      %v2942 = vrot.slane %v2640, 6
      %v2943 = vrot.slane %v2643, 7
      %v2944 = vor.u32 %v2942, %v2943
      %v2945 = vsel %vm2917, %v2940, %v2944
      %v2946 = vrot.slane %v2649, 6
      %v2947 = vrot.slane %v2652, 7
      %v2948 = vor.u32 %v2946, %v2947
      %v2949 = vsel %vm2917, %v2944, %v2948
      %v2950 = vrot.slane %v2658, 6
      %v2951 = vrot.slane %v2661, 7
      %v2952 = vor.u32 %v2950, %v2951
      %v2953 = vsel %vm2917, %v2948, %v2952
      %v2954 = vrot.slane %v2667, 6
      %v2955 = vrot.slane %v2670, 7
      %v2956 = vor.u32 %v2954, %v2955
      %v2957 = vsel %vm2917, %v2952, %v2956
      %v2958 = vrot.slane %v2676, 6
      %v2959 = vrot.slane %v2679, 7
      %v2960 = vor.u32 %v2958, %v2959
      %v2961 = vsel %vm2917, %v2956, %v2960
      %v2962 = vrot.slane %v2685, 6
      %v2963 = vrot.slane %v2688, 7
      %v2964 = vor.u32 %v2962, %v2963
      %v2965 = vsel %vm2917, %v2960, %v2964
      %v2966 = vrot.slane %v2694, 6
      %v2967 = vrot.slane %v2697, 7
      %v2968 = vor.u32 %v2966, %v2967
      %v2969 = vsel %vm2917, %v2964, %v2968
      %v2970 = vrot.slane %v2703, 6
      %v2971 = vrot.slane %v2706, 7
      %v2972 = vor.u32 %v2970, %v2971
      %v2973 = vsel %vm2917, %v2968, %v2972
      %v2974 = vrot.slane %v2712, 6
      %v2975 = vrot.slane %v2715, 7
      %v2976 = vor.u32 %v2974, %v2975
      %v2977 = vsel %vm2917, %v2972, %v2976
      %v2978 = vrot.slane %v2721, 6
      %v2979 = vrot.slane %v2724, 7
      %v2980 = vor.u32 %v2978, %v2979
      %v2981 = vsel %vm2917, %v2976, %v2980
      %v2982 = vrot.slane %v2730, 6
      %v2983 = vrot.slane %v2733, 7
      %v2984 = vor.u32 %v2982, %v2983
      %v2985 = vsel %vm2917, %v2980, %v2984
      %v2986 = vrot.slane %v2739, 6
      %v2987 = vrot.slane %v2742, 7
      %v2988 = vor.u32 %v2986, %v2987
      %v2989 = vsel %vm2917, %v2984, %v2988
      %v2991 = vshrl.u32 %v2870, 16
      %v2993 = vrot.slane %v2991, 6
      %v2994 = vshll.u32 %v2870, 16
      %v2996 = vrot.slane %v2994, 7
      %v2997 = vor.u32 %v2993, %v2996
      %v2998 = vsel %vm2917, %v2988, %v2997
      %v3000 = vshrl.u32 %v2871, 16
      %v3002 = vrot.slane %v3000, 6
      %v3003 = vshll.u32 %v2871, 16
      %v3005 = vrot.slane %v3003, 7
      %v3006 = vor.u32 %v3002, %v3005
      %v3007 = vsel %vm2917, %v2997, %v3006
      %3008 = vrot.lane.b32.xlu0 %v2925, 56
      %v3009 = vpop.permute.xlu0 %3008
      %3010 = vrot.lane.b32.xlu0 %v2929, 56
      %v3011 = vpop.permute.xlu0 %3010
      %3012 = vrot.lane.b32.xlu0 %v2933, 56
      %v3013 = vpop.permute.xlu0 %3012
      %3014 = vrot.lane.b32.xlu0 %v2937, 56
      %v3015 = vpop.permute.xlu0 %3014
      %3016 = vrot.lane.b32.xlu0 %v2941, 56
      %v3017 = vpop.permute.xlu0 %3016
      %3018 = vrot.lane.b32.xlu0 %v2945, 56
      %v3019 = vpop.permute.xlu0 %3018
      %3020 = vrot.lane.b32.xlu0 %v2949, 56
      %v3021 = vpop.permute.xlu0 %3020
      %3022 = vrot.lane.b32.xlu0 %v2953, 56
      %v3023 = vpop.permute.xlu0 %3022
      %3024 = vrot.lane.b32.xlu0 %v2957, 56
      %v3025 = vpop.permute.xlu0 %3024
      %3026 = vrot.lane.b32.xlu0 %v2961, 56
      %v3027 = vpop.permute.xlu0 %3026
      %3028 = vrot.lane.b32.xlu0 %v2965, 56
      %v3029 = vpop.permute.xlu0 %3028
      %3030 = vrot.lane.b32.xlu0 %v2969, 56
      %v3031 = vpop.permute.xlu0 %3030
      %3032 = vrot.lane.b32.xlu0 %v2973, 56
      %v3033 = vpop.permute.xlu0 %3032
      %3034 = vrot.lane.b32.xlu0 %v2977, 56
      %v3035 = vpop.permute.xlu0 %3034
      %3036 = vrot.lane.b32.xlu0 %v2981, 56
      %v3037 = vpop.permute.xlu0 %3036
      %3038 = vrot.lane.b32.xlu0 %v2985, 56
      %v3039 = vpop.permute.xlu0 %3038
      %3040 = vrot.lane.b32.xlu0 %v2989, 56
      %v3041 = vpop.permute.xlu0 %3040
      %3042 = vrot.lane.b32.xlu0 %v2998, 56
      %v3043 = vpop.permute.xlu0 %3042
      %3044 = vrot.lane.b32.xlu0 %v3007, 56
      %v3045 = vpop.permute.xlu0 %3044
      %v3047 = vunpack.c.l.b16 %v2150
      %v3048 = vpack.c.b16 %v3047, %v3047
      %vm3049 = vcmask 1040384
      %v3050 = vrot.slane %v2916, 7
      %v3051 = vrot.slane %v2569, 7
      %v3052 = vsel %vm3049, %v3050, %v3051
      %v3053 = vrot.slane %v2570, 7
      %v3054 = vsel %vm3049, %v3051, %v3053
      %v3055 = vrot.slane %v2571, 7
      %v3056 = vsel %vm3049, %v3053, %v3055
      %v3057 = vrot.slane %v2572, 7
      %v3058 = vsel %vm3049, %v3055, %v3057
      %v3059 = vrot.slane %v2573, 7
      %v3060 = vsel %vm3049, %v3057, %v3059
      %v3061 = vrot.slane %v2574, 7
      %v3062 = vsel %vm3049, %v3059, %v3061
      %v3063 = vrot.slane %v2575, 7
      %v3064 = vsel %vm3049, %v3061, %v3063
      %v3065 = vrot.slane %v2576, 7
      %v3066 = vsel %vm3049, %v3063, %v3065
      %v3067 = vrot.slane %v2577, 7
      %v3068 = vsel %vm3049, %v3065, %v3067
      %v3069 = vrot.slane %v2578, 7
      %v3070 = vsel %vm3049, %v3067, %v3069
      %v3071 = vrot.slane %v2579, 7
      %v3072 = vsel %vm3049, %v3069, %v3071
      %v3073 = vrot.slane %v2580, 7
      %v3074 = vsel %vm3049, %v3071, %v3073
      %v3075 = vrot.slane %v2581, 7
      %v3076 = vsel %vm3049, %v3073, %v3075
      %v3077 = vrot.slane %v2582, 7
      %v3078 = vsel %vm3049, %v3075, %v3077
      %v3079 = vrot.slane %v2583, 7
      %v3080 = vsel %vm3049, %v3077, %v3079
      %v3081 = vrot.slane %v2584, 7
      %v3082 = vsel %vm3049, %v3079, %v3081
      %v3083 = vrot.slane %v2870, 7
      %v3084 = vsel %vm3049, %v3081, %v3083
      %v3085 = vrot.slane %v3048, 7
      %v3086 = vsel %vm3049, %v3083, %v3085
      %3087 = vrot.lane.b32.xlu0 %v3050, 64
      %v3088 = vpop.permute.xlu0 %3087
      %3089 = vrot.lane.b32.xlu0 %v3052, 64
      %v3090 = vpop.permute.xlu0 %3089
      %3091 = vrot.lane.b32.xlu0 %v3054, 64
      %v3092 = vpop.permute.xlu0 %3091
      %3093 = vrot.lane.b32.xlu0 %v3056, 64
      %v3094 = vpop.permute.xlu0 %3093
      %3095 = vrot.lane.b32.xlu0 %v3058, 64
      %v3096 = vpop.permute.xlu0 %3095
      %3097 = vrot.lane.b32.xlu0 %v3060, 64
      %v3098 = vpop.permute.xlu0 %3097
      %3099 = vrot.lane.b32.xlu0 %v3062, 64
      %v3100 = vpop.permute.xlu0 %3099
      %3101 = vrot.lane.b32.xlu0 %v3064, 64
      %v3102 = vpop.permute.xlu0 %3101
      %3103 = vrot.lane.b32.xlu0 %v3066, 64
      %v3104 = vpop.permute.xlu0 %3103
      %3105 = vrot.lane.b32.xlu0 %v3068, 64
      %v3106 = vpop.permute.xlu0 %3105
      %3107 = vrot.lane.b32.xlu0 %v3070, 64
      %v3108 = vpop.permute.xlu0 %3107
      %3109 = vrot.lane.b32.xlu0 %v3072, 64
      %v3110 = vpop.permute.xlu0 %3109
      %3111 = vrot.lane.b32.xlu0 %v3074, 64
      %v3112 = vpop.permute.xlu0 %3111
      %3113 = vrot.lane.b32.xlu0 %v3076, 64
      %v3114 = vpop.permute.xlu0 %3113
      %3115 = vrot.lane.b32.xlu0 %v3078, 64
      %v3116 = vpop.permute.xlu0 %3115
      %3117 = vrot.lane.b32.xlu0 %v3080, 64
      %v3118 = vpop.permute.xlu0 %3117
      %3119 = vrot.lane.b32.xlu0 %v3082, 64
      %v3120 = vpop.permute.xlu0 %3119
      %3121 = vrot.lane.b32.xlu0 %v3084, 64
      %v3122 = vpop.permute.xlu0 %3121
      %3123 = vrot.lane.b32.xlu0 %v3086, 64
      %v3124 = vpop.permute.xlu0 %3123
      %v3127 = vsel %vm1392, %v2225, %v2399
      %v3129 = vsel %vm1392, %v2226, %v2401
      %v3131 = vsel %vm1392, %v2227, %v2403
      %v3133 = vsel %vm1392, %v2228, %v2405
      %v3135 = vsel %vm1392, %v2229, %v2407
      %v3137 = vsel %vm1392, %v2230, %v2409
      %v3139 = vsel %vm1392, %v2231, %v2411
      %v3141 = vsel %vm1392, %v2232, %v2413
      %v3143 = vsel %vm1392, %v2233, %v2415
      %v3145 = vsel %vm1392, %v2234, %v2417
      %v3147 = vsel %vm1392, %v2235, %v2419
      %v3149 = vsel %vm1392, %v2236, %v2421
      %v3151 = vsel %vm1392, %v2237, %v2423
      %v3153 = vsel %vm1392, %v2238, %v2425
      %v3155 = vsel %vm1392, %v2239, %v2427
      %v3157 = vsel %vm1392, %v2240, %v2429
      %v3159 = vsel %vm1392, %v2241, %v2431
      %v3161 = vsel %vm1392, %v2242, %v2433
      %v3163 = vsel %vm1392, %v2243, %v2435
      %v3165 = vsel %vm1466, %v3127, %v2477
      %v3167 = vsel %vm1466, %v3129, %v2479
      %v3169 = vsel %vm1466, %v3131, %v2481
      %v3171 = vsel %vm1466, %v3133, %v2483
      %v3173 = vsel %vm1466, %v3135, %v2485
      %v3175 = vsel %vm1466, %v3137, %v2487
      %v3177 = vsel %vm1466, %v3139, %v2489
      %v3179 = vsel %vm1466, %v3141, %v2491
      %v3181 = vsel %vm1466, %v3143, %v2493
      %v3183 = vsel %vm1466, %v3145, %v2495
      %v3185 = vsel %vm1466, %v3147, %v2497
      %v3187 = vsel %vm1466, %v3149, %v2499
      %v3189 = vsel %vm1466, %v3151, %v2501
      %v3191 = vsel %vm1466, %v3153, %v2503
      %v3193 = vsel %vm1466, %v3155, %v2505
      %v3195 = vsel %vm1466, %v3157, %v2507
      %v3197 = vsel %vm1466, %v3159, %v2509
      %v3199 = vsel %vm1466, %v3161, %v2511
      %v3201 = vsel %vm1466, %v3163, %v2513
      %v3203 = vsel %vm1540, %v3165, %v2530
      %v3205 = vsel %vm1540, %v3167, %v2532
      %v3207 = vsel %vm1540, %v3169, %v2534
      %v3209 = vsel %vm1540, %v3171, %v2536
      %v3211 = vsel %vm1540, %v3173, %v2538
      %v3213 = vsel %vm1540, %v3175, %v2540
      %v3215 = vsel %vm1540, %v3177, %v2542
      %v3217 = vsel %vm1540, %v3179, %v2544
      %v3219 = vsel %vm1540, %v3181, %v2546
      %v3221 = vsel %vm1540, %v3183, %v2548
      %v3223 = vsel %vm1540, %v3185, %v2550
      %v3225 = vsel %vm1540, %v3187, %v2552
      %v3227 = vsel %vm1540, %v3189, %v2554
      %v3229 = vsel %vm1540, %v3191, %v2556
      %v3231 = vsel %vm1540, %v3193, %v2558
      %v3233 = vsel %vm1540, %v3195, %v2560
      %v3235 = vsel %vm1540, %v3197, %v2562
      %v3237 = vsel %vm1540, %v3199, %v2564
      %v3239 = vsel %vm1540, %v3201, %v2566
      %v3241 = vsel %vm1614, %v3203, %v2748
      %v3243 = vsel %vm1614, %v3205, %v2750
      %v3245 = vsel %vm1614, %v3207, %v2752
      %v3247 = vsel %vm1614, %v3209, %v2754
      %v3249 = vsel %vm1614, %v3211, %v2756
      %v3251 = vsel %vm1614, %v3213, %v2758
      %v3253 = vsel %vm1614, %v3215, %v2760
      %v3255 = vsel %vm1614, %v3217, %v2762
      %v3257 = vsel %vm1614, %v3219, %v2764
      %v3259 = vsel %vm1614, %v3221, %v2766
      %v3261 = vsel %vm1614, %v3223, %v2768
      %v3263 = vsel %vm1614, %v3225, %v2770
      %v3265 = vsel %vm1614, %v3227, %v2772
      %v3267 = vsel %vm1614, %v3229, %v2774
      %v3269 = vsel %vm1614, %v3231, %v2776
      %v3271 = vsel %vm1614, %v3233, %v2778
      %v3273 = vsel %vm1614, %v3235, %v2780
      %v3275 = vsel %vm1614, %v3237, %v2782
      %v3277 = vsel %vm1614, %v3239, %v2784
      %vm3278 = vcmask 326656
      %v3280 = vsel %vm3278, %v3241, %v2827
      %v3282 = vsel %vm3278, %v3243, %v2829
      %v3284 = vsel %vm3278, %v3245, %v2831
      %v3286 = vsel %vm3278, %v3247, %v2833
      %v3288 = vsel %vm3278, %v3249, %v2835
      %v3290 = vsel %vm3278, %v3251, %v2837
      %v3292 = vsel %vm3278, %v3253, %v2839
      %v3294 = vsel %vm3278, %v3255, %v2841
      %v3296 = vsel %vm3278, %v3257, %v2843
      %v3298 = vsel %vm3278, %v3259, %v2845
      %v3300 = vsel %vm3278, %v3261, %v2847
      %v3302 = vsel %vm3278, %v3263, %v2849
      %v3304 = vsel %vm3278, %v3265, %v2851
      %v3306 = vsel %vm3278, %v3267, %v2853
      %v3308 = vsel %vm3278, %v3269, %v2855
      %v3310 = vsel %vm3278, %v3271, %v2857
      %v3312 = vsel %vm3278, %v3273, %v2859
      %v3314 = vsel %vm3278, %v3275, %v2861
      %v3316 = vsel %vm3278, %v3277, %v2863
      %vm3317 = vcmask 392192
      %v3319 = vsel %vm3317, %v3280, %v2877
      %v3321 = vsel %vm3317, %v3282, %v2879
      %v3323 = vsel %vm3317, %v3284, %v2881
      %v3325 = vsel %vm3317, %v3286, %v2883
      %v3327 = vsel %vm3317, %v3288, %v2885
      %v3329 = vsel %vm3317, %v3290, %v2887
      %v3331 = vsel %vm3317, %v3292, %v2889
      %v3333 = vsel %vm3317, %v3294, %v2891
      %v3335 = vsel %vm3317, %v3296, %v2893
      %v3337 = vsel %vm3317, %v3298, %v2895
      %v3339 = vsel %vm3317, %v3300, %v2897
      %v3341 = vsel %vm3317, %v3302, %v2899
      %v3343 = vsel %vm3317, %v3304, %v2901
      %v3345 = vsel %vm3317, %v3306, %v2903
      %v3347 = vsel %vm3317, %v3308, %v2905
      %v3349 = vsel %vm3317, %v3310, %v2907
      %v3351 = vsel %vm3317, %v3312, %v2909
      %v3353 = vsel %vm3317, %v3314, %v2911
      %v3355 = vsel %vm3317, %v3316, %v2913
      %vm3356 = vcmask 457728
      %v3358 = vsel %vm3356, %v3319, %v3009
      %v3360 = vsel %vm3356, %v3321, %v3011
      %v3362 = vsel %vm3356, %v3323, %v3013
      %v3364 = vsel %vm3356, %v3325, %v3015
      %v3366 = vsel %vm3356, %v3327, %v3017
      %v3368 = vsel %vm3356, %v3329, %v3019
      %v3370 = vsel %vm3356, %v3331, %v3021
      %v3372 = vsel %vm3356, %v3333, %v3023
      %v3374 = vsel %vm3356, %v3335, %v3025
      %v3376 = vsel %vm3356, %v3337, %v3027
      %v3378 = vsel %vm3356, %v3339, %v3029
      %v3380 = vsel %vm3356, %v3341, %v3031
      %v3382 = vsel %vm3356, %v3343, %v3033
      %v3384 = vsel %vm3356, %v3345, %v3035
      %v3386 = vsel %vm3356, %v3347, %v3037
      %v3388 = vsel %vm3356, %v3349, %v3039
      %v3390 = vsel %vm3356, %v3351, %v3041
      %v3392 = vsel %vm3356, %v3353, %v3043
      %v3394 = vsel %vm3356, %v3355, %v3045
      %vm3395 = vcmask 523264
      %v3397 = vsel %vm3395, %v3358, %v3088
      %v3399 = vsel %vm3395, %v3360, %v3090
      %v3401 = vsel %vm3395, %v3362, %v3092
      %v3403 = vsel %vm3395, %v3364, %v3094
      %v3405 = vsel %vm3395, %v3366, %v3096
      %v3407 = vsel %vm3395, %v3368, %v3098
      %v3409 = vsel %vm3395, %v3370, %v3100
      %v3411 = vsel %vm3395, %v3372, %v3102
      %v3413 = vsel %vm3395, %v3374, %v3104
      %v3415 = vsel %vm3395, %v3376, %v3106
      %v3417 = vsel %vm3395, %v3378, %v3108
      %v3419 = vsel %vm3395, %v3380, %v3110
      %v3421 = vsel %vm3395, %v3382, %v3112
      %v3423 = vsel %vm3395, %v3384, %v3114
      %v3425 = vsel %vm3395, %v3386, %v3116
      %v3427 = vsel %vm3395, %v3388, %v3118
      %v3429 = vsel %vm3395, %v3390, %v3120
      %v3431 = vsel %vm3395, %v3392, %v3122
      %v3433 = vsel %vm3395, %v3394, %v3124
      %v3434 = vld [vmem:[%s3] sm:$0xf]
      %v3435 = vld [vmem:[%s3 + $0x4] sm:$0xf]
      %v3436 = vld [vmem:[%s3 + $0x8] sm:$0xf]
      %v3437 = vld [vmem:[%s3 + $0xc] sm:$0xf]
      %v3438 = vld [vmem:[%s3 + $0x10] sm:$0xf]
      %v3439 = vld [vmem:[%s3 + $0x14] sm:$0xf]
      %v3440 = vld [vmem:[%s3 + $0x18] sm:$0xf]
      %v3441 = vld [vmem:[%s3 + $0x1c] sm:$0xf]
      %v3442 = vld [vmem:[%s3 + $0x20] sm:$0xf]
      %v3443 = vld [vmem:[%s7] sm:$0x1]
      %v3445 = vperm.slane %v3443, 0
      %v3447 = vshrl.u32 %v3397, 16
      %v3449 = vrot.slane %v3447, 2
      %v3450 = vshll.u32 %v3397, 16
      %v3452 = vrot.slane %v3450, 3
      %v3453 = vor.u32 %v3449, %v3452
      %v3454 = vshrl.u32 %v3399, 16
      %v3456 = vrot.slane %v3454, 2
      %v3457 = vshll.u32 %v3399, 16
      %v3459 = vrot.slane %v3457, 3
      %v3460 = vor.u32 %v3456, %v3459
      %v3461 = vsel %vm1151, %v3453, %v3460
      %v3462 = vshrl.u32 %v3401, 16
      %v3464 = vrot.slane %v3462, 2
      %v3465 = vshll.u32 %v3401, 16
      %v3467 = vrot.slane %v3465, 3
      %v3468 = vor.u32 %v3464, %v3467
      %v3469 = vsel %vm1151, %v3460, %v3468
      %v3470 = vshrl.u32 %v3403, 16
      %v3472 = vrot.slane %v3470, 2
      %v3473 = vshll.u32 %v3403, 16
      %v3475 = vrot.slane %v3473, 3
      %v3476 = vor.u32 %v3472, %v3475
      %v3477 = vsel %vm1151, %v3468, %v3476
      %v3478 = vshrl.u32 %v3405, 16
      %v3480 = vrot.slane %v3478, 2
      %v3481 = vshll.u32 %v3405, 16
      %v3483 = vrot.slane %v3481, 3
      %v3484 = vor.u32 %v3480, %v3483
      %v3485 = vsel %vm1151, %v3476, %v3484
      %v3486 = vshrl.u32 %v3407, 16
      %v3488 = vrot.slane %v3486, 2
      %v3489 = vshll.u32 %v3407, 16
      %v3491 = vrot.slane %v3489, 3
      %v3492 = vor.u32 %v3488, %v3491
      %v3493 = vsel %vm1151, %v3484, %v3492
      %v3494 = vshrl.u32 %v3409, 16
      %v3496 = vrot.slane %v3494, 2
      %v3497 = vshll.u32 %v3409, 16
      %v3499 = vrot.slane %v3497, 3
      %v3500 = vor.u32 %v3496, %v3499
      %v3501 = vsel %vm1151, %v3492, %v3500
      %v3502 = vshrl.u32 %v3411, 16
      %v3504 = vrot.slane %v3502, 2
      %v3505 = vshll.u32 %v3411, 16
      %v3507 = vrot.slane %v3505, 3
      %v3508 = vor.u32 %v3504, %v3507
      %v3509 = vsel %vm1151, %v3500, %v3508
      %v3510 = vshrl.u32 %v3413, 16
      %v3512 = vrot.slane %v3510, 2
      %v3513 = vshll.u32 %v3413, 16
      %v3515 = vrot.slane %v3513, 3
      %v3516 = vor.u32 %v3512, %v3515
      %v3517 = vsel %vm1151, %v3508, %v3516
      %v3518 = vshrl.u32 %v3415, 16
      %v3520 = vrot.slane %v3518, 2
      %v3521 = vshll.u32 %v3415, 16
      %v3523 = vrot.slane %v3521, 3
      %v3524 = vor.u32 %v3520, %v3523
      %v3525 = vsel %vm1151, %v3516, %v3524
      %v3526 = vshrl.u32 %v3417, 16
      %v3528 = vrot.slane %v3526, 2
      %v3529 = vshll.u32 %v3417, 16
      %v3531 = vrot.slane %v3529, 3
      %v3532 = vor.u32 %v3528, %v3531
      %v3533 = vsel %vm1151, %v3524, %v3532
      %v3534 = vshrl.u32 %v3419, 16
      %v3536 = vrot.slane %v3534, 2
      %v3537 = vshll.u32 %v3419, 16
      %v3539 = vrot.slane %v3537, 3
      %v3540 = vor.u32 %v3536, %v3539
      %v3541 = vsel %vm1151, %v3532, %v3540
      %v3542 = vshrl.u32 %v3421, 16
      %v3544 = vrot.slane %v3542, 2
      %v3545 = vshll.u32 %v3421, 16
      %v3547 = vrot.slane %v3545, 3
      %v3548 = vor.u32 %v3544, %v3547
      %v3549 = vsel %vm1151, %v3540, %v3548
      %v3550 = vshrl.u32 %v3423, 16
      %v3552 = vrot.slane %v3550, 2
      %v3553 = vshll.u32 %v3423, 16
      %v3555 = vrot.slane %v3553, 3
      %v3556 = vor.u32 %v3552, %v3555
      %v3557 = vsel %vm1151, %v3548, %v3556
      %v3558 = vshrl.u32 %v3425, 16
      %v3560 = vrot.slane %v3558, 2
      %v3561 = vshll.u32 %v3425, 16
      %v3563 = vrot.slane %v3561, 3
      %v3564 = vor.u32 %v3560, %v3563
      %v3565 = vsel %vm1151, %v3556, %v3564
      %v3566 = vshrl.u32 %v3427, 16
      %v3568 = vrot.slane %v3566, 2
      %v3569 = vshll.u32 %v3427, 16
      %v3571 = vrot.slane %v3569, 3
      %v3572 = vor.u32 %v3568, %v3571
      %v3573 = vsel %vm1151, %v3564, %v3572
      %v3574 = vshrl.u32 %v3429, 16
      %v3576 = vrot.slane %v3574, 2
      %v3577 = vshll.u32 %v3429, 16
      %v3579 = vrot.slane %v3577, 3
      %v3580 = vor.u32 %v3576, %v3579
      %v3581 = vsel %vm1151, %v3572, %v3580
      %v3582 = vshrl.u32 %v3431, 16
      %v3584 = vrot.slane %v3582, 2
      %v3585 = vshll.u32 %v3431, 16
      %v3587 = vrot.slane %v3585, 3
      %v3588 = vor.u32 %v3584, %v3587
      %v3589 = vsel %vm1151, %v3580, %v3588
      %v3590 = vshrl.u32 %v3433, 16
      %v3592 = vrot.slane %v3590, 2
      %v3593 = vshll.u32 %v3433, 16
      %v3595 = vrot.slane %v3593, 3
      %v3596 = vor.u32 %v3592, %v3595
      %v3597 = vsel %vm1151, %v3588, %v3596
      %v3607 = vunpack.c.l.b16 %v3434
      %v3608 = vunpack.c.l.b16 %v3435
      %v3609 = vunpack.c.l.b16 %v3436
      %v3610 = vunpack.c.l.b16 %v3437
      %v3611 = vunpack.c.l.b16 %v3438
      %v3612 = vunpack.c.l.b16 %v3439
      %v3613 = vunpack.c.l.b16 %v3440
      %v3614 = vunpack.c.l.b16 %v3441
      %v3615 = vunpack.c.l.b16 %v3442
      %v3616 = vpack.c.b16 %v3608, %v3607
      %v3617 = vpack.c.b16 %v3610, %v3609
      %v3618 = vpack.c.b16 %v3612, %v3611
      %v3619 = vpack.c.b16 %v3614, %v3613
      %v3620 = vpack.c.b16 %v3615, %v3615
      %vm3625 = vcmask 588800
      %v3627 = vsel %vm3625, %v3461, 0
      %v3630 = vsel %vm3625, %v3469, 0
      %v3633 = vsel %vm3625, %v3477, 0
      %v3636 = vsel %vm3625, %v3485, 0
      %v3639 = vsel %vm3625, %v3493, 0
      %v3642 = vsel %vm3625, %v3501, 0
      %v3645 = vsel %vm3625, %v3509, 0
      %v3648 = vsel %vm3625, %v3517, 0
      %v3651 = vsel %vm3625, %v3525, 0
      %v3654 = vsel %vm3625, %v3533, 0
      %v3657 = vsel %vm3625, %v3541, 0
      %v3660 = vsel %vm3625, %v3549, 0
      %v3663 = vsel %vm3625, %v3557, 0
      %v3666 = vsel %vm3625, %v3565, 0
      %v3669 = vsel %vm3625, %v3573, 0
      %v3672 = vsel %vm3625, %v3581, 0
      %v3675 = vsel %vm3625, %v3589, 0
      %v3678 = vsel %vm3625, %v3597, 0
      %vm3680 = vcmask 1043456
      %v3682 = vsel %vm3680, %v3620, 0
      %3684 = vmatpush.bf16.msra.mxu0 0
      %3685 = vmatpush.bf16.msra.mxu0 0
      %3686 = vmatpush.bf16.msra.mxu0 0
      %3687 = vmatpush.bf16.msra.mxu0 %v3682
      %3688 = vmatpush.bf16.msra.mxu0 %v3619
      %3689 = vmatpush.bf16.msra.mxu0 %v3618
      %3690 = vmatpush.bf16.msra.mxu0 %v3617
      %3691 = vmatpush.bf16.msra.mxu0 %v3616
      %3692 = vmatmul.bf16.gmra.mxu0 %v3627
      %v3693 = vpop.f32.mrf.mxu0
      %v3694 = vadd.f32 %v3445, %v3693
      %v3695 = vpop.f32.mrf.mxu0
      %v3696 = vadd.f32 %v3445, %v3695
      %3697 = vmatmul.bf16.gmra.mxu0 %v3630
      %v3698 = vpop.f32.mrf.mxu0
      %v3699 = vadd.f32 %v3445, %v3698
      %v3700 = vpop.f32.mrf.mxu0
      %v3701 = vadd.f32 %v3445, %v3700
      %3702 = vmatmul.bf16.gmra.mxu0 %v3633
      %v3703 = vpop.f32.mrf.mxu0
      %v3704 = vadd.f32 %v3445, %v3703
      %v3705 = vpop.f32.mrf.mxu0
      %v3706 = vadd.f32 %v3445, %v3705
      %3707 = vmatmul.bf16.gmra.mxu0 %v3636
      %v3708 = vpop.f32.mrf.mxu0
      %v3709 = vadd.f32 %v3445, %v3708
      %v3710 = vpop.f32.mrf.mxu0
      %v3711 = vadd.f32 %v3445, %v3710
      %3712 = vmatmul.bf16.gmra.mxu0 %v3639
      %v3713 = vpop.f32.mrf.mxu0
      %v3714 = vadd.f32 %v3445, %v3713
      %v3715 = vpop.f32.mrf.mxu0
      %v3716 = vadd.f32 %v3445, %v3715
      %3717 = vmatmul.bf16.gmra.mxu0 %v3642
      %v3718 = vpop.f32.mrf.mxu0
      %v3719 = vadd.f32 %v3445, %v3718
      %v3720 = vpop.f32.mrf.mxu0
      %v3721 = vadd.f32 %v3445, %v3720
      %3722 = vmatmul.bf16.gmra.mxu0 %v3645
      %v3723 = vpop.f32.mrf.mxu0
      %v3724 = vadd.f32 %v3445, %v3723
      %v3725 = vpop.f32.mrf.mxu0
      %v3726 = vadd.f32 %v3445, %v3725
      %3727 = vmatmul.bf16.gmra.mxu0 %v3648
      %v3728 = vpop.f32.mrf.mxu0
      %v3729 = vadd.f32 %v3445, %v3728
      %v3730 = vpop.f32.mrf.mxu0
      %v3731 = vadd.f32 %v3445, %v3730
      %3732 = vmatmul.bf16.gmra.mxu0 %v3651
      %v3733 = vpop.f32.mrf.mxu0
      %v3734 = vadd.f32 %v3445, %v3733
      %v3735 = vpop.f32.mrf.mxu0
      %v3736 = vadd.f32 %v3445, %v3735
      %3737 = vmatmul.bf16.gmra.mxu0 %v3654
      %v3738 = vpop.f32.mrf.mxu0
      %v3739 = vadd.f32 %v3445, %v3738
      %v3740 = vpop.f32.mrf.mxu0
      %v3741 = vadd.f32 %v3445, %v3740
      %3742 = vmatmul.bf16.gmra.mxu0 %v3657
      %v3743 = vpop.f32.mrf.mxu0
      %v3744 = vadd.f32 %v3445, %v3743
      %v3745 = vpop.f32.mrf.mxu0
      %v3746 = vadd.f32 %v3445, %v3745
      %3747 = vmatmul.bf16.gmra.mxu0 %v3660
      %v3748 = vpop.f32.mrf.mxu0
      %v3749 = vadd.f32 %v3445, %v3748
      %v3750 = vpop.f32.mrf.mxu0
      %v3751 = vadd.f32 %v3445, %v3750
      %3752 = vmatmul.bf16.gmra.mxu0 %v3663
      %v3753 = vpop.f32.mrf.mxu0
      %v3754 = vadd.f32 %v3445, %v3753
      %v3755 = vpop.f32.mrf.mxu0
      %v3756 = vadd.f32 %v3445, %v3755
      %3757 = vmatmul.bf16.gmra.mxu0 %v3666
      %v3758 = vpop.f32.mrf.mxu0
      %v3759 = vadd.f32 %v3445, %v3758
      %v3760 = vpop.f32.mrf.mxu0
      %v3761 = vadd.f32 %v3445, %v3760
      %3762 = vmatmul.bf16.gmra.mxu0 %v3669
      %v3763 = vpop.f32.mrf.mxu0
      %v3764 = vadd.f32 %v3445, %v3763
      %v3765 = vpop.f32.mrf.mxu0
      %v3766 = vadd.f32 %v3445, %v3765
      %3767 = vmatmul.bf16.gmra.mxu0 %v3672
      %v3768 = vpop.f32.mrf.mxu0
      %v3769 = vadd.f32 %v3445, %v3768
      %v3770 = vpop.f32.mrf.mxu0
      %v3771 = vadd.f32 %v3445, %v3770
      %3772 = vmatmul.bf16.gmra.mxu0 %v3675
      %v3773 = vpop.f32.mrf.mxu0
      %v3774 = vadd.f32 %v3445, %v3773
      %v3775 = vpop.f32.mrf.mxu0
      %v3776 = vadd.f32 %v3445, %v3775
      %3777 = vmatmul.bf16.gmra.mxu0 %v3678
      %v3778 = vpop.f32.mrf.mxu0
      %v3779 = vadd.f32 %v3445, %v3778
      %v3780 = vpop.f32.mrf.mxu0
      %v3781 = vadd.f32 %v3445, %v3780
      %3782 = vdwg.mxu0
      %v3783 = vmul.f32 %v3694, %v1818
      %v3784 = vmul.f32 %v3696, %v1823
      %v3785 = vmul.f32 %v3699, %v1828
      %v3786 = vmul.f32 %v3701, %v1833
      %v3787 = vmul.f32 %v3704, %v1838
      %v3788 = vmul.f32 %v3706, %v1843
      %v3789 = vmul.f32 %v3709, %v1848
      %v3790 = vmul.f32 %v3711, %v1853
      %v3791 = vmul.f32 %v3714, %v1858
      %v3792 = vmul.f32 %v3716, %v1863
      %v3793 = vmul.f32 %v3719, %v1868
      %v3794 = vmul.f32 %v3721, %v1873
      %v3795 = vmul.f32 %v3724, %v1878
      %v3796 = vmul.f32 %v3726, %v1883
      %v3797 = vmul.f32 %v3729, %v1888
      %v3798 = vmul.f32 %v3731, %v1893
      %v3799 = vmul.f32 %v3734, %v1898
      %v3800 = vmul.f32 %v3736, %v1903
      %v3801 = vmul.f32 %v3739, %v1908
      %v3802 = vmul.f32 %v3741, %v1913
      %v3803 = vmul.f32 %v3744, %v1918
      %v3804 = vmul.f32 %v3746, %v1923
      %v3805 = vmul.f32 %v3749, %v1928
      %v3806 = vmul.f32 %v3751, %v1933
      %v3807 = vmul.f32 %v3754, %v1938
      %v3808 = vmul.f32 %v3756, %v1943
      %v3809 = vmul.f32 %v3759, %v1948
      %v3810 = vmul.f32 %v3761, %v1953
      %v3811 = vmul.f32 %v3764, %v1958
      %v3812 = vmul.f32 %v3766, %v1963
      %v3813 = vmul.f32 %v3769, %v1968
      %v3814 = vmul.f32 %v3771, %v1973
      %v3815 = vmul.f32 %v3774, %v1978
      %v3816 = vmul.f32 %v3776, %v1983
      %v3817 = vmul.f32 %v3779, %v1988
      %v3818 = vmul.f32 %v3781, %v1993
      %v3819 = vpack.c.bf16 %v3783, %v3783
      %v3820 = vpack.c.bf16 %v3784, %v3784
      %v3821 = vpack.c.bf16 %v3785, %v3785
      %v3822 = vpack.c.bf16 %v3786, %v3786
      %v3823 = vpack.c.bf16 %v3787, %v3787
      %v3824 = vpack.c.bf16 %v3788, %v3788
      %v3825 = vpack.c.bf16 %v3789, %v3789
      %v3826 = vpack.c.bf16 %v3790, %v3790
      %v3827 = vpack.c.bf16 %v3791, %v3791
      %v3828 = vpack.c.bf16 %v3792, %v3792
      %v3829 = vpack.c.bf16 %v3793, %v3793
      %v3830 = vpack.c.bf16 %v3794, %v3794
      %v3831 = vpack.c.bf16 %v3795, %v3795
      %v3832 = vpack.c.bf16 %v3796, %v3796
      %v3833 = vpack.c.bf16 %v3797, %v3797
      %v3834 = vpack.c.bf16 %v3798, %v3798
      %v3835 = vpack.c.bf16 %v3799, %v3799
      %v3836 = vpack.c.bf16 %v3800, %v3800
      %v3837 = vpack.c.bf16 %v3801, %v3801
      %v3838 = vpack.c.bf16 %v3802, %v3802
      %v3839 = vpack.c.bf16 %v3803, %v3803
      %v3840 = vpack.c.bf16 %v3804, %v3804
      %v3841 = vpack.c.bf16 %v3805, %v3805
      %v3842 = vpack.c.bf16 %v3806, %v3806
      %v3843 = vpack.c.bf16 %v3807, %v3807
      %v3844 = vpack.c.bf16 %v3808, %v3808
      %v3845 = vpack.c.bf16 %v3809, %v3809
      %v3846 = vpack.c.bf16 %v3810, %v3810
      %v3847 = vpack.c.bf16 %v3811, %v3811
      %v3848 = vpack.c.bf16 %v3812, %v3812
      %v3849 = vpack.c.bf16 %v3813, %v3813
      %v3850 = vpack.c.bf16 %v3814, %v3814
      %v3851 = vpack.c.bf16 %v3815, %v3815
      %v3852 = vpack.c.bf16 %v3816, %v3816
      %v3853 = vpack.c.bf16 %v3817, %v3817
      %v3854 = vpack.c.bf16 %v3818, %v3818
      %3855 = vst.msk [vmem:[#allocation2 + $0x10] sm:$0xf] %vm412, %v3819
      %3856 = vst.msk [vmem:[#allocation2 + $0x14] sm:$0xf] %vm412, %v3820
      %3857 = vst.msk [vmem:[#allocation2 + $0x18] sm:$0xf] %vm412, %v3821
      %3858 = vst.msk [vmem:[#allocation2 + $0x1c] sm:$0xf] %vm412, %v3822
      %3859 = vst.msk [vmem:[#allocation2 + $0x20] sm:$0xf] %vm412, %v3823
      %3860 = vst.msk [vmem:[#allocation2 + $0x24] sm:$0xf] %vm412, %v3824
      %3861 = vst.msk [vmem:[#allocation2 + $0x28] sm:$0xf] %vm412, %v3825
      %3862 = vst.msk [vmem:[#allocation2 + $0x2c] sm:$0xf] %vm412, %v3826
      %3863 = vst.msk [vmem:[#allocation2 + $0x30] sm:$0xf] %vm412, %v3827
      %3864 = vst.msk [vmem:[#allocation2 + $0x34] sm:$0xf] %vm412, %v3828
      %3865 = vst.msk [vmem:[#allocation2 + $0x38] sm:$0xf] %vm412, %v3829
      %3866 = vst.msk [vmem:[#allocation2 + $0x3c] sm:$0xf] %vm412, %v3830
      %3867 = vst.msk [vmem:[#allocation2 + $0x40] sm:$0xf] %vm412, %v3831
      %3868 = vst.msk [vmem:[#allocation2 + $0x44] sm:$0xf] %vm412, %v3832
      %3869 = vst.msk [vmem:[#allocation2 + $0x48] sm:$0xf] %vm412, %v3833
      %3870 = vst.msk [vmem:[#allocation2 + $0x4c] sm:$0xf] %vm412, %v3834
      %3871 = vst.msk [vmem:[#allocation2 + $0x50] sm:$0xf] %vm412, %v3835
      %3872 = vst.msk [vmem:[#allocation2 + $0x54] sm:$0xf] %vm412, %v3836
      %3873 = vst.msk [vmem:[#allocation2 + $0x58] sm:$0xf] %vm412, %v3837
      %3874 = vst.msk [vmem:[#allocation2 + $0x5c] sm:$0xf] %vm412, %v3838
      %3875 = vst.msk [vmem:[#allocation2 + $0x60] sm:$0xf] %vm412, %v3839
      %3876 = vst.msk [vmem:[#allocation2 + $0x64] sm:$0xf] %vm412, %v3840
      %3877 = vst.msk [vmem:[#allocation2 + $0x68] sm:$0xf] %vm412, %v3841
      %3878 = vst.msk [vmem:[#allocation2 + $0x6c] sm:$0xf] %vm412, %v3842
      %3879 = vst.msk [vmem:[#allocation2 + $0x70] sm:$0xf] %vm412, %v3843
      %3880 = vst.msk [vmem:[#allocation2 + $0x74] sm:$0xf] %vm412, %v3844
      %3881 = vst.msk [vmem:[#allocation2 + $0x78] sm:$0xf] %vm412, %v3845
      %3882 = vst.msk [vmem:[#allocation2 + $0x7c] sm:$0xf] %vm412, %v3846
      %3883 = vst.msk [vmem:[#allocation2 + $0x80] sm:$0xf] %vm412, %v3847
      %3884 = vst.msk [vmem:[#allocation2 + $0x84] sm:$0xf] %vm412, %v3848
      %3885 = vst.msk [vmem:[#allocation2 + $0x88] sm:$0xf] %vm412, %v3849
      %3886 = vst.msk [vmem:[#allocation2 + $0x8c] sm:$0xf] %vm412, %v3850
      %3887 = vst.msk [vmem:[#allocation2 + $0x90] sm:$0xf] %vm412, %v3851
      %3888 = vst.msk [vmem:[#allocation2 + $0x94] sm:$0xf] %vm412, %v3852
      %3889 = vst.msk [vmem:[#allocation2 + $0x98] sm:$0xf] %vm412, %v3853
      %3890 = vst.msk [vmem:[#allocation2 + $0x9c] sm:$0xf] %vm412, %v3854
      %v3891 = vld [vmem:[#allocation2 + $0x4] sm:$0xc]
      %v3892 = vld [vmem:[#allocation2 + $0x8] sm:$0xf]
      %v3893 = vld [vmem:[#allocation2 + $0xc] sm:$0xf]
      %v3894 = vld [vmem:[#allocation2 + $0x10] sm:$0xf]
      %v3895 = vld [vmem:[#allocation2 + $0x14] sm:$0xf]
      %v3896 = vld [vmem:[#allocation2 + $0x18] sm:$0xf]
      %v3897 = vld [vmem:[#allocation2 + $0x1c] sm:$0xf]
      %v3898 = vld [vmem:[#allocation2 + $0x20] sm:$0xf]
      %v3899 = vld [vmem:[#allocation2 + $0x24] sm:$0xf]
      %v3900 = vld [vmem:[#allocation2 + $0x28] sm:$0xf]
      %v3901 = vld [vmem:[#allocation2 + $0x2c] sm:$0xf]
      %v3902 = vld [vmem:[#allocation2 + $0x30] sm:$0xf]
      %v3903 = vld [vmem:[#allocation2 + $0x34] sm:$0xf]
      %v3904 = vld [vmem:[#allocation2 + $0x38] sm:$0xf]
      %v3905 = vld [vmem:[#allocation2 + $0x3c] sm:$0xf]
      %v3906 = vld [vmem:[#allocation2 + $0x40] sm:$0xf]
      %v3907 = vld [vmem:[#allocation2 + $0x44] sm:$0xf]
      %v3908 = vld [vmem:[#allocation2 + $0x48] sm:$0xf]
      %v3909 = vld [vmem:[#allocation2 + $0x4c] sm:$0xf]
      %v3910 = vld [vmem:[#allocation2 + $0x50] sm:$0xf]
      %v3911 = vld [vmem:[#allocation2 + $0x54] sm:$0xf]
      %v3912 = vld [vmem:[#allocation2 + $0x58] sm:$0xf]
      %v3913 = vld [vmem:[#allocation2 + $0x5c] sm:$0xf]
      %v3914 = vld [vmem:[#allocation2 + $0x60] sm:$0xf]
      %v3915 = vld [vmem:[#allocation2 + $0x64] sm:$0xf]
      %v3916 = vld [vmem:[#allocation2 + $0x68] sm:$0xf]
      %v3917 = vld [vmem:[#allocation2 + $0x6c] sm:$0xf]
      %v3918 = vld [vmem:[#allocation2 + $0x70] sm:$0xf]
      %v3919 = vld [vmem:[#allocation2 + $0x74] sm:$0xf]
      %v3920 = vld [vmem:[#allocation2 + $0x78] sm:$0xf]
      %v3921 = vld [vmem:[#allocation2 + $0x7c] sm:$0xf]
      %v3922 = vld [vmem:[#allocation2 + $0x80] sm:$0xf]
      %v3923 = vld [vmem:[#allocation2 + $0x84] sm:$0xf]
      %v3924 = vld [vmem:[#allocation2 + $0x88] sm:$0xf]
      %v3925 = vld [vmem:[#allocation2 + $0x8c] sm:$0xf]
      %v3926 = vld [vmem:[#allocation2 + $0x90] sm:$0xf]
      %v3927 = vld [vmem:[#allocation2 + $0x94] sm:$0x7]
      %v3928 = vld [vmem:[#allocation2 + $0x4] sm:$0x8]
      %v3929 = vld [vmem:[#allocation2 + $0x94] sm:$0xf]
      %v3930 = vld [vmem:[#allocation2 + $0xc] sm:$0x8]
      %v3931 = vld [vmem:[#allocation2 + $0x98] sm:$0xf]
      %v3932 = vld [vmem:[#allocation2 + $0x9c] sm:$0xf]
      %v3933 = vld [vmem:[#allocation2 + $0xa0] sm:$0x1]
      %v3934 = vld [vmem:[#allocation2 + $0xa0] sm:$0xf]
      %v3935 = vld [vmem:[#allocation2 + $0xa4] sm:$0xf]
      %v3936 = vld [vmem:[#allocation2 + $0xa8] sm:$0x1]
      %v3937 = vld [vmem:[#allocation2 + $0x18] sm:$0xe]
      %v3938 = vld [vmem:[#allocation2 + $0xa8] sm:$0x3]
      %v3976 = vunpack.c.l.b16 %v3891
      %v3977 = vunpack.c.l.b16 %v3892
      %v3978 = vunpack.c.l.b16 %v3893
      %v3979 = vunpack.c.l.b16 %v3894
      %v3980 = vunpack.c.l.b16 %v3895
      %v3981 = vunpack.c.l.b16 %v3896
      %v3982 = vunpack.c.l.b16 %v3897
      %v3983 = vunpack.c.l.b16 %v3898
      %v3984 = vunpack.c.l.b16 %v3899
      %v3985 = vunpack.c.l.b16 %v3900
      %v3986 = vunpack.c.l.b16 %v3901
      %v3987 = vunpack.c.l.b16 %v3902
      %v3988 = vunpack.c.l.b16 %v3903
      %v3989 = vunpack.c.l.b16 %v3904
      %v3990 = vunpack.c.l.b16 %v3905
      %v3991 = vunpack.c.l.b16 %v3906
      %v3992 = vunpack.c.l.b16 %v3907
      %v3993 = vunpack.c.l.b16 %v3908
      %v3994 = vunpack.c.l.b16 %v3909
      %v3995 = vunpack.c.l.b16 %v3910
      %v3996 = vunpack.c.l.b16 %v3911
      %v3997 = vunpack.c.l.b16 %v3912
      %v3998 = vunpack.c.l.b16 %v3913
      %v3999 = vunpack.c.l.b16 %v3914
      %v4000 = vunpack.c.l.b16 %v3915
      %v4001 = vunpack.c.l.b16 %v3916
      %v4002 = vunpack.c.l.b16 %v3917
      %v4003 = vunpack.c.l.b16 %v3918
      %v4004 = vunpack.c.l.b16 %v3919
      %v4005 = vunpack.c.l.b16 %v3920
      %v4006 = vunpack.c.l.b16 %v3921
      %v4007 = vunpack.c.l.b16 %v3922
      %v4008 = vunpack.c.l.b16 %v3923
      %v4009 = vunpack.c.l.b16 %v3924
      %v4010 = vunpack.c.l.b16 %v3925
      %v4011 = vunpack.c.l.b16 %v3926
      %v4012 = vunpack.c.l.b16 %v3927
      %v4013 = vpack.c.b16 %v3977, %v3976
      %v4014 = vpack.c.b16 %v3979, %v3978
      %v4015 = vpack.c.b16 %v3981, %v3980
      %v4016 = vpack.c.b16 %v3983, %v3982
      %v4017 = vpack.c.b16 %v3985, %v3984
      %v4018 = vpack.c.b16 %v3987, %v3986
      %v4019 = vpack.c.b16 %v3989, %v3988
      %v4020 = vpack.c.b16 %v3991, %v3990
      %v4021 = vpack.c.b16 %v3993, %v3992
      %v4022 = vpack.c.b16 %v3995, %v3994
      %v4023 = vpack.c.b16 %v3997, %v3996
      %v4024 = vpack.c.b16 %v3999, %v3998
      %v4025 = vpack.c.b16 %v4001, %v4000
      %v4026 = vpack.c.b16 %v4003, %v4002
      %v4027 = vpack.c.b16 %v4005, %v4004
      %v4028 = vpack.c.b16 %v4007, %v4006
      %v4029 = vpack.c.b16 %v4009, %v4008
      %v4030 = vpack.c.b16 %v4011, %v4010
      %v4031 = vpack.c.b16 %v4012, %v4012
      %v4033 = vunpack.c.l.b16 %v3928
      %v4034 = vpack.c.b16 %v3977, %v4033
      %v4036 = vshrl.u32 %v4034, 16
      %v4038 = vshll.u32 %v4034, 16
      %v4040 = vrot.slane %v4038, 1
      %v4041 = vor.u32 %v4036, %v4040
      %v4043 = vshll.u32 %v4014, 16
      %v4045 = vrot.slane %v4043, 1
      %v4046 = vsel %vm573, %v4041, %v4045
      %v4047 = vshrl.u32 %v4014, 16
      %v4049 = vor.u32 %v4047, %v4045
      %v4051 = vshll.u32 %v4015, 16
      %v4053 = vrot.slane %v4051, 1
      %v4054 = vsel %vm573, %v4049, %v4053
      %v4055 = vshrl.u32 %v4015, 16
      %v4057 = vor.u32 %v4055, %v4053
      %v4059 = vshll.u32 %v4016, 16
      %v4061 = vrot.slane %v4059, 1
      %v4062 = vsel %vm573, %v4057, %v4061
      %v4063 = vshrl.u32 %v4016, 16
      %v4065 = vor.u32 %v4063, %v4061
      %v4067 = vshll.u32 %v4017, 16
      %v4069 = vrot.slane %v4067, 1
      %v4070 = vsel %vm573, %v4065, %v4069
      %v4071 = vshrl.u32 %v4017, 16
      %v4073 = vor.u32 %v4071, %v4069
      %v4075 = vshll.u32 %v4018, 16
      %v4077 = vrot.slane %v4075, 1
      %v4078 = vsel %vm573, %v4073, %v4077
      %v4079 = vshrl.u32 %v4018, 16
      %v4081 = vor.u32 %v4079, %v4077
      %v4083 = vshll.u32 %v4019, 16
      %v4085 = vrot.slane %v4083, 1
      %v4086 = vsel %vm573, %v4081, %v4085
      %v4087 = vshrl.u32 %v4019, 16
      %v4089 = vor.u32 %v4087, %v4085
      %v4091 = vshll.u32 %v4020, 16
      %v4093 = vrot.slane %v4091, 1
      %v4094 = vsel %vm573, %v4089, %v4093
      %v4095 = vshrl.u32 %v4020, 16
      %v4097 = vor.u32 %v4095, %v4093
      %v4099 = vshll.u32 %v4021, 16
      %v4101 = vrot.slane %v4099, 1
      %v4102 = vsel %vm573, %v4097, %v4101
      %v4103 = vshrl.u32 %v4021, 16
      %v4105 = vor.u32 %v4103, %v4101
      %v4107 = vshll.u32 %v4022, 16
      %v4109 = vrot.slane %v4107, 1
      %v4110 = vsel %vm573, %v4105, %v4109
      %v4111 = vshrl.u32 %v4022, 16
      %v4113 = vor.u32 %v4111, %v4109
      %v4115 = vshll.u32 %v4023, 16
      %v4117 = vrot.slane %v4115, 1
      %v4118 = vsel %vm573, %v4113, %v4117
      %v4119 = vshrl.u32 %v4023, 16
      %v4121 = vor.u32 %v4119, %v4117
      %v4123 = vshll.u32 %v4024, 16
      %v4125 = vrot.slane %v4123, 1
      %v4126 = vsel %vm573, %v4121, %v4125
      %v4127 = vshrl.u32 %v4024, 16
      %v4129 = vor.u32 %v4127, %v4125
      %v4131 = vshll.u32 %v4025, 16
      %v4133 = vrot.slane %v4131, 1
      %v4134 = vsel %vm573, %v4129, %v4133
      %v4135 = vshrl.u32 %v4025, 16
      %v4137 = vor.u32 %v4135, %v4133
      %v4139 = vshll.u32 %v4026, 16
      %v4141 = vrot.slane %v4139, 1
      %v4142 = vsel %vm573, %v4137, %v4141
      %v4143 = vshrl.u32 %v4026, 16
      %v4145 = vor.u32 %v4143, %v4141
      %v4147 = vshll.u32 %v4027, 16
      %v4149 = vrot.slane %v4147, 1
      %v4150 = vsel %vm573, %v4145, %v4149
      %v4151 = vshrl.u32 %v4027, 16
      %v4153 = vor.u32 %v4151, %v4149
      %v4155 = vshll.u32 %v4028, 16
      %v4157 = vrot.slane %v4155, 1
      %v4158 = vsel %vm573, %v4153, %v4157
      %v4159 = vshrl.u32 %v4028, 16
      %v4161 = vor.u32 %v4159, %v4157
      %v4163 = vshll.u32 %v4029, 16
      %v4165 = vrot.slane %v4163, 1
      %v4166 = vsel %vm573, %v4161, %v4165
      %v4167 = vshrl.u32 %v4029, 16
      %v4169 = vor.u32 %v4167, %v4165
      %v4171 = vshll.u32 %v4030, 16
      %v4173 = vrot.slane %v4171, 1
      %v4174 = vsel %vm573, %v4169, %v4173
      %v4175 = vshrl.u32 %v4030, 16
      %v4177 = vor.u32 %v4175, %v4173
      %v4179 = vshll.u32 %v4031, 16
      %v4181 = vrot.slane %v4179, 1
      %v4182 = vsel %vm573, %v4177, %v4181
      %v4183 = vshrl.u32 %v4031, 16
      %v4185 = vor.u32 %v4183, %v4181
      %4186 = vrot.lane.b32.xlu0 %v4046, 8
      %v4187 = vpop.permute.xlu0 %4186
      %4188 = vrot.lane.b32.xlu0 %v4054, 8
      %v4189 = vpop.permute.xlu0 %4188
      %4190 = vrot.lane.b32.xlu0 %v4062, 8
      %v4191 = vpop.permute.xlu0 %4190
      %4192 = vrot.lane.b32.xlu0 %v4070, 8
      %v4193 = vpop.permute.xlu0 %4192
      %4194 = vrot.lane.b32.xlu0 %v4078, 8
      %v4195 = vpop.permute.xlu0 %4194
      %4196 = vrot.lane.b32.xlu0 %v4086, 8
      %v4197 = vpop.permute.xlu0 %4196
      %4198 = vrot.lane.b32.xlu0 %v4094, 8
      %v4199 = vpop.permute.xlu0 %4198
      %4200 = vrot.lane.b32.xlu0 %v4102, 8
      %v4201 = vpop.permute.xlu0 %4200
      %4202 = vrot.lane.b32.xlu0 %v4110, 8
      %v4203 = vpop.permute.xlu0 %4202
      %4204 = vrot.lane.b32.xlu0 %v4118, 8
      %v4205 = vpop.permute.xlu0 %4204
      %4206 = vrot.lane.b32.xlu0 %v4126, 8
      %v4207 = vpop.permute.xlu0 %4206
      %4208 = vrot.lane.b32.xlu0 %v4134, 8
      %v4209 = vpop.permute.xlu0 %4208
      %4210 = vrot.lane.b32.xlu0 %v4142, 8
      %v4211 = vpop.permute.xlu0 %4210
      %4212 = vrot.lane.b32.xlu0 %v4150, 8
      %v4213 = vpop.permute.xlu0 %4212
      %4214 = vrot.lane.b32.xlu0 %v4158, 8
      %v4215 = vpop.permute.xlu0 %4214
      %4216 = vrot.lane.b32.xlu0 %v4166, 8
      %v4217 = vpop.permute.xlu0 %4216
      %4218 = vrot.lane.b32.xlu0 %v4174, 8
      %v4219 = vpop.permute.xlu0 %4218
      %4220 = vrot.lane.b32.xlu0 %v4182, 8
      %v4221 = vpop.permute.xlu0 %4220
      %4222 = vrot.lane.b32.xlu0 %v4185, 8
      %v4223 = vpop.permute.xlu0 %4222
      %v4225 = vunpack.c.l.b16 %v3929
      %v4226 = vpack.c.b16 %v4225, %v4225
      %v4227 = vrot.slane %v4034, 1
      %v4228 = vrot.slane %v4014, 1
      %v4229 = vsel %vm761, %v4227, %v4228
      %v4230 = vrot.slane %v4015, 1
      %v4231 = vsel %vm761, %v4228, %v4230
      %v4232 = vrot.slane %v4016, 1
      %v4233 = vsel %vm761, %v4230, %v4232
      %v4234 = vrot.slane %v4017, 1
      %v4235 = vsel %vm761, %v4232, %v4234
      %v4236 = vrot.slane %v4018, 1
      %v4237 = vsel %vm761, %v4234, %v4236
      %v4238 = vrot.slane %v4019, 1
      %v4239 = vsel %vm761, %v4236, %v4238
      %v4240 = vrot.slane %v4020, 1
      %v4241 = vsel %vm761, %v4238, %v4240
      %v4242 = vrot.slane %v4021, 1
      %v4243 = vsel %vm761, %v4240, %v4242
      %v4244 = vrot.slane %v4022, 1
      %v4245 = vsel %vm761, %v4242, %v4244
      %v4246 = vrot.slane %v4023, 1
      %v4247 = vsel %vm761, %v4244, %v4246
      %v4248 = vrot.slane %v4024, 1
      %v4249 = vsel %vm761, %v4246, %v4248
      %v4250 = vrot.slane %v4025, 1
      %v4251 = vsel %vm761, %v4248, %v4250
      %v4252 = vrot.slane %v4026, 1
      %v4253 = vsel %vm761, %v4250, %v4252
      %v4254 = vrot.slane %v4027, 1
      %v4255 = vsel %vm761, %v4252, %v4254
      %v4256 = vrot.slane %v4028, 1
      %v4257 = vsel %vm761, %v4254, %v4256
      %v4258 = vrot.slane %v4029, 1
      %v4259 = vsel %vm761, %v4256, %v4258
      %v4260 = vrot.slane %v4030, 1
      %v4261 = vsel %vm761, %v4258, %v4260
      %v4262 = vrot.slane %v4226, 1
      %v4263 = vsel %vm761, %v4260, %v4262
      %4264 = vrot.lane.b32.xlu0 %v4229, 16
      %v4265 = vpop.permute.xlu0 %4264
      %4266 = vrot.lane.b32.xlu0 %v4231, 16
      %v4267 = vpop.permute.xlu0 %4266
      %4268 = vrot.lane.b32.xlu0 %v4233, 16
      %v4269 = vpop.permute.xlu0 %4268
      %4270 = vrot.lane.b32.xlu0 %v4235, 16
      %v4271 = vpop.permute.xlu0 %4270
      %4272 = vrot.lane.b32.xlu0 %v4237, 16
      %v4273 = vpop.permute.xlu0 %4272
      %4274 = vrot.lane.b32.xlu0 %v4239, 16
      %v4275 = vpop.permute.xlu0 %4274
      %4276 = vrot.lane.b32.xlu0 %v4241, 16
      %v4277 = vpop.permute.xlu0 %4276
      %4278 = vrot.lane.b32.xlu0 %v4243, 16
      %v4279 = vpop.permute.xlu0 %4278
      %4280 = vrot.lane.b32.xlu0 %v4245, 16
      %v4281 = vpop.permute.xlu0 %4280
      %4282 = vrot.lane.b32.xlu0 %v4247, 16
      %v4283 = vpop.permute.xlu0 %4282
      %4284 = vrot.lane.b32.xlu0 %v4249, 16
      %v4285 = vpop.permute.xlu0 %4284
      %4286 = vrot.lane.b32.xlu0 %v4251, 16
      %v4287 = vpop.permute.xlu0 %4286
      %4288 = vrot.lane.b32.xlu0 %v4253, 16
      %v4289 = vpop.permute.xlu0 %4288
      %4290 = vrot.lane.b32.xlu0 %v4255, 16
      %v4291 = vpop.permute.xlu0 %4290
      %4292 = vrot.lane.b32.xlu0 %v4257, 16
      %v4293 = vpop.permute.xlu0 %4292
      %4294 = vrot.lane.b32.xlu0 %v4259, 16
      %v4295 = vpop.permute.xlu0 %4294
      %4296 = vrot.lane.b32.xlu0 %v4261, 16
      %v4297 = vpop.permute.xlu0 %4296
      %4298 = vrot.lane.b32.xlu0 %v4263, 16
      %v4299 = vpop.permute.xlu0 %4298
      %4300 = vrot.lane.b32.xlu0 %v4262, 16
      %v4301 = vpop.permute.xlu0 %4300
      %v4305 = vunpack.c.l.b16 %v3930
      %v4306 = vunpack.c.l.b16 %v3931
      %v4307 = vunpack.c.l.b16 %v3932
      %v4308 = vpack.c.b16 %v3979, %v4305
      %v4309 = vpack.c.b16 %v4306, %v4225
      %v4310 = vpack.c.b16 %v4307, %v4307
      %v4311 = vrot.slane %v4308, 1
      %v4312 = vsel %vm761, %v4311, %v4230
      %v4313 = vrot.slane %v4309, 1
      %v4314 = vsel %vm761, %v4260, %v4313
      %v4315 = vrot.slane %v4310, 1
      %v4316 = vsel %vm761, %v4313, %v4315
      %4317 = vrot.lane.b32.xlu0 %v4312, 24
      %v4318 = vpop.permute.xlu0 %4317
      %4319 = vrot.lane.b32.xlu0 %v4233, 24
      %v4320 = vpop.permute.xlu0 %4319
      %4321 = vrot.lane.b32.xlu0 %v4235, 24
      %v4322 = vpop.permute.xlu0 %4321
      %4323 = vrot.lane.b32.xlu0 %v4237, 24
      %v4324 = vpop.permute.xlu0 %4323
      %4325 = vrot.lane.b32.xlu0 %v4239, 24
      %v4326 = vpop.permute.xlu0 %4325
      %4327 = vrot.lane.b32.xlu0 %v4241, 24
      %v4328 = vpop.permute.xlu0 %4327
      %4329 = vrot.lane.b32.xlu0 %v4243, 24
      %v4330 = vpop.permute.xlu0 %4329
      %4331 = vrot.lane.b32.xlu0 %v4245, 24
      %v4332 = vpop.permute.xlu0 %4331
      %4333 = vrot.lane.b32.xlu0 %v4247, 24
      %v4334 = vpop.permute.xlu0 %4333
      %4335 = vrot.lane.b32.xlu0 %v4249, 24
      %v4336 = vpop.permute.xlu0 %4335
      %4337 = vrot.lane.b32.xlu0 %v4251, 24
      %v4338 = vpop.permute.xlu0 %4337
      %4339 = vrot.lane.b32.xlu0 %v4253, 24
      %v4340 = vpop.permute.xlu0 %4339
      %4341 = vrot.lane.b32.xlu0 %v4255, 24
      %v4342 = vpop.permute.xlu0 %4341
      %4343 = vrot.lane.b32.xlu0 %v4257, 24
      %v4344 = vpop.permute.xlu0 %4343
      %4345 = vrot.lane.b32.xlu0 %v4259, 24
      %v4346 = vpop.permute.xlu0 %4345
      %4347 = vrot.lane.b32.xlu0 %v4261, 24
      %v4348 = vpop.permute.xlu0 %4347
      %4349 = vrot.lane.b32.xlu0 %v4314, 24
      %v4350 = vpop.permute.xlu0 %4349
      %4351 = vrot.lane.b32.xlu0 %v4316, 24
      %v4352 = vpop.permute.xlu0 %4351
      %4353 = vrot.lane.b32.xlu0 %v4315, 24
      %v4354 = vpop.permute.xlu0 %4353
      %v4355 = vpack.c.b16 %v3980, %v3979
      %v4356 = vpack.c.b16 %v3982, %v3981
      %v4357 = vpack.c.b16 %v3984, %v3983
      %v4358 = vpack.c.b16 %v3986, %v3985
      %v4359 = vpack.c.b16 %v3988, %v3987
      %v4360 = vpack.c.b16 %v3990, %v3989
      %v4361 = vpack.c.b16 %v3992, %v3991
      %v4362 = vpack.c.b16 %v3994, %v3993
      %v4363 = vpack.c.b16 %v3996, %v3995
      %v4364 = vpack.c.b16 %v3998, %v3997
      %v4365 = vpack.c.b16 %v4000, %v3999
      %v4366 = vpack.c.b16 %v4002, %v4001
      %v4367 = vpack.c.b16 %v4004, %v4003
      %v4368 = vpack.c.b16 %v4006, %v4005
      %v4369 = vpack.c.b16 %v4008, %v4007
      %v4370 = vpack.c.b16 %v4010, %v4009
      %v4371 = vpack.c.b16 %v4225, %v4011
      %v4372 = vpack.c.b16 %v4307, %v4306
      %v4374 = vshrl.u32 %v4355, 16
      %v4376 = vrot.slane %v4374, 5
      %v4377 = vshll.u32 %v4355, 16
      %v4379 = vrot.slane %v4377, 6
      %v4380 = vor.u32 %v4376, %v4379
      %v4382 = vshrl.u32 %v4356, 16
      %v4384 = vrot.slane %v4382, 5
      %v4385 = vshll.u32 %v4356, 16
      %v4387 = vrot.slane %v4385, 6
      %v4388 = vor.u32 %v4384, %v4387
      %v4389 = vsel %vm2585, %v4380, %v4388
      %v4391 = vshrl.u32 %v4357, 16
      %v4393 = vrot.slane %v4391, 5
      %v4394 = vshll.u32 %v4357, 16
      %v4396 = vrot.slane %v4394, 6
      %v4397 = vor.u32 %v4393, %v4396
      %v4398 = vsel %vm2585, %v4388, %v4397
      %v4400 = vshrl.u32 %v4358, 16
      %v4402 = vrot.slane %v4400, 5
      %v4403 = vshll.u32 %v4358, 16
      %v4405 = vrot.slane %v4403, 6
      %v4406 = vor.u32 %v4402, %v4405
      %v4407 = vsel %vm2585, %v4397, %v4406
      %v4409 = vshrl.u32 %v4359, 16
      %v4411 = vrot.slane %v4409, 5
      %v4412 = vshll.u32 %v4359, 16
      %v4414 = vrot.slane %v4412, 6
      %v4415 = vor.u32 %v4411, %v4414
      %v4416 = vsel %vm2585, %v4406, %v4415
      %v4418 = vshrl.u32 %v4360, 16
      %v4420 = vrot.slane %v4418, 5
      %v4421 = vshll.u32 %v4360, 16
      %v4423 = vrot.slane %v4421, 6
      %v4424 = vor.u32 %v4420, %v4423
      %v4425 = vsel %vm2585, %v4415, %v4424
      %v4427 = vshrl.u32 %v4361, 16
      %v4429 = vrot.slane %v4427, 5
      %v4430 = vshll.u32 %v4361, 16
      %v4432 = vrot.slane %v4430, 6
      %v4433 = vor.u32 %v4429, %v4432
      %v4434 = vsel %vm2585, %v4424, %v4433
      %v4436 = vshrl.u32 %v4362, 16
      %v4438 = vrot.slane %v4436, 5
      %v4439 = vshll.u32 %v4362, 16
      %v4441 = vrot.slane %v4439, 6
      %v4442 = vor.u32 %v4438, %v4441
      %v4443 = vsel %vm2585, %v4433, %v4442
      %v4445 = vshrl.u32 %v4363, 16
      %v4447 = vrot.slane %v4445, 5
      %v4448 = vshll.u32 %v4363, 16
      %v4450 = vrot.slane %v4448, 6
      %v4451 = vor.u32 %v4447, %v4450
      %v4452 = vsel %vm2585, %v4442, %v4451
      %v4454 = vshrl.u32 %v4364, 16
      %v4456 = vrot.slane %v4454, 5
      %v4457 = vshll.u32 %v4364, 16
      %v4459 = vrot.slane %v4457, 6
      %v4460 = vor.u32 %v4456, %v4459
      %v4461 = vsel %vm2585, %v4451, %v4460
      %v4463 = vshrl.u32 %v4365, 16
      %v4465 = vrot.slane %v4463, 5
      %v4466 = vshll.u32 %v4365, 16
      %v4468 = vrot.slane %v4466, 6
      %v4469 = vor.u32 %v4465, %v4468
      %v4470 = vsel %vm2585, %v4460, %v4469
      %v4472 = vshrl.u32 %v4366, 16
      %v4474 = vrot.slane %v4472, 5
      %v4475 = vshll.u32 %v4366, 16
      %v4477 = vrot.slane %v4475, 6
      %v4478 = vor.u32 %v4474, %v4477
      %v4479 = vsel %vm2585, %v4469, %v4478
      %v4481 = vshrl.u32 %v4367, 16
      %v4483 = vrot.slane %v4481, 5
      %v4484 = vshll.u32 %v4367, 16
      %v4486 = vrot.slane %v4484, 6
      %v4487 = vor.u32 %v4483, %v4486
      %v4488 = vsel %vm2585, %v4478, %v4487
      %v4490 = vshrl.u32 %v4368, 16
      %v4492 = vrot.slane %v4490, 5
      %v4493 = vshll.u32 %v4368, 16
      %v4495 = vrot.slane %v4493, 6
      %v4496 = vor.u32 %v4492, %v4495
      %v4497 = vsel %vm2585, %v4487, %v4496
      %v4499 = vshrl.u32 %v4369, 16
      %v4501 = vrot.slane %v4499, 5
      %v4502 = vshll.u32 %v4369, 16
      %v4504 = vrot.slane %v4502, 6
      %v4505 = vor.u32 %v4501, %v4504
      %v4506 = vsel %vm2585, %v4496, %v4505
      %v4508 = vshrl.u32 %v4370, 16
      %v4510 = vrot.slane %v4508, 5
      %v4511 = vshll.u32 %v4370, 16
      %v4513 = vrot.slane %v4511, 6
      %v4514 = vor.u32 %v4510, %v4513
      %v4515 = vsel %vm2585, %v4505, %v4514
      %v4517 = vshrl.u32 %v4371, 16
      %v4519 = vrot.slane %v4517, 5
      %v4520 = vshll.u32 %v4371, 16
      %v4522 = vrot.slane %v4520, 6
      %v4523 = vor.u32 %v4519, %v4522
      %v4524 = vsel %vm2585, %v4514, %v4523
      %v4526 = vshrl.u32 %v4372, 16
      %v4528 = vrot.slane %v4526, 5
      %v4529 = vshll.u32 %v4372, 16
      %v4531 = vrot.slane %v4529, 6
      %v4532 = vor.u32 %v4528, %v4531
      %v4533 = vsel %vm2585, %v4523, %v4532
      %4534 = vrot.lane.b32.xlu0 %v4380, 32
      %v4535 = vpop.permute.xlu0 %4534
      %4536 = vrot.lane.b32.xlu0 %v4389, 32
      %v4537 = vpop.permute.xlu0 %4536
      %4538 = vrot.lane.b32.xlu0 %v4398, 32
      %v4539 = vpop.permute.xlu0 %4538
      %4540 = vrot.lane.b32.xlu0 %v4407, 32
      %v4541 = vpop.permute.xlu0 %4540
      %4542 = vrot.lane.b32.xlu0 %v4416, 32
      %v4543 = vpop.permute.xlu0 %4542
      %4544 = vrot.lane.b32.xlu0 %v4425, 32
      %v4545 = vpop.permute.xlu0 %4544
      %4546 = vrot.lane.b32.xlu0 %v4434, 32
      %v4547 = vpop.permute.xlu0 %4546
      %4548 = vrot.lane.b32.xlu0 %v4443, 32
      %v4549 = vpop.permute.xlu0 %4548
      %4550 = vrot.lane.b32.xlu0 %v4452, 32
      %v4551 = vpop.permute.xlu0 %4550
      %4552 = vrot.lane.b32.xlu0 %v4461, 32
      %v4553 = vpop.permute.xlu0 %4552
      %4554 = vrot.lane.b32.xlu0 %v4470, 32
      %v4555 = vpop.permute.xlu0 %4554
      %4556 = vrot.lane.b32.xlu0 %v4479, 32
      %v4557 = vpop.permute.xlu0 %4556
      %4558 = vrot.lane.b32.xlu0 %v4488, 32
      %v4559 = vpop.permute.xlu0 %4558
      %4560 = vrot.lane.b32.xlu0 %v4497, 32
      %v4561 = vpop.permute.xlu0 %4560
      %4562 = vrot.lane.b32.xlu0 %v4506, 32
      %v4563 = vpop.permute.xlu0 %4562
      %4564 = vrot.lane.b32.xlu0 %v4515, 32
      %v4565 = vpop.permute.xlu0 %4564
      %4566 = vrot.lane.b32.xlu0 %v4524, 32
      %v4567 = vpop.permute.xlu0 %4566
      %4568 = vrot.lane.b32.xlu0 %v4533, 32
      %v4569 = vpop.permute.xlu0 %4568
      %4570 = vrot.lane.b32.xlu0 %v4532, 32
      %v4571 = vpop.permute.xlu0 %4570
      %v4573 = vunpack.c.l.b16 %v3933
      %v4574 = vpack.c.b16 %v4573, %v4573
      %v4575 = vrot.slane %v4355, 6
      %v4576 = vrot.slane %v4356, 6
      %v4577 = vsel %vm2788, %v4575, %v4576
      %v4578 = vrot.slane %v4357, 6
      %v4579 = vsel %vm2788, %v4576, %v4578
      %v4580 = vrot.slane %v4358, 6
      %v4581 = vsel %vm2788, %v4578, %v4580
      %v4582 = vrot.slane %v4359, 6
      %v4583 = vsel %vm2788, %v4580, %v4582
      %v4584 = vrot.slane %v4360, 6
      %v4585 = vsel %vm2788, %v4582, %v4584
      %v4586 = vrot.slane %v4361, 6
      %v4587 = vsel %vm2788, %v4584, %v4586
      %v4588 = vrot.slane %v4362, 6
      %v4589 = vsel %vm2788, %v4586, %v4588
      %v4590 = vrot.slane %v4363, 6
      %v4591 = vsel %vm2788, %v4588, %v4590
      %v4592 = vrot.slane %v4364, 6
      %v4593 = vsel %vm2788, %v4590, %v4592
      %v4594 = vrot.slane %v4365, 6
      %v4595 = vsel %vm2788, %v4592, %v4594
      %v4596 = vrot.slane %v4366, 6
      %v4597 = vsel %vm2788, %v4594, %v4596
      %v4598 = vrot.slane %v4367, 6
      %v4599 = vsel %vm2788, %v4596, %v4598
      %v4600 = vrot.slane %v4368, 6
      %v4601 = vsel %vm2788, %v4598, %v4600
      %v4602 = vrot.slane %v4369, 6
      %v4603 = vsel %vm2788, %v4600, %v4602
      %v4604 = vrot.slane %v4370, 6
      %v4605 = vsel %vm2788, %v4602, %v4604
      %v4606 = vrot.slane %v4371, 6
      %v4607 = vsel %vm2788, %v4604, %v4606
      %v4608 = vrot.slane %v4372, 6
      %v4609 = vsel %vm2788, %v4606, %v4608
      %v4610 = vrot.slane %v4574, 6
      %v4611 = vsel %vm2788, %v4608, %v4610
      %4612 = vrot.lane.b32.xlu0 %v4575, 40
      %v4613 = vpop.permute.xlu0 %4612
      %4614 = vrot.lane.b32.xlu0 %v4577, 40
      %v4615 = vpop.permute.xlu0 %4614
      %4616 = vrot.lane.b32.xlu0 %v4579, 40
      %v4617 = vpop.permute.xlu0 %4616
      %4618 = vrot.lane.b32.xlu0 %v4581, 40
      %v4619 = vpop.permute.xlu0 %4618
      %4620 = vrot.lane.b32.xlu0 %v4583, 40
      %v4621 = vpop.permute.xlu0 %4620
      %4622 = vrot.lane.b32.xlu0 %v4585, 40
      %v4623 = vpop.permute.xlu0 %4622
      %4624 = vrot.lane.b32.xlu0 %v4587, 40
      %v4625 = vpop.permute.xlu0 %4624
      %4626 = vrot.lane.b32.xlu0 %v4589, 40
      %v4627 = vpop.permute.xlu0 %4626
      %4628 = vrot.lane.b32.xlu0 %v4591, 40
      %v4629 = vpop.permute.xlu0 %4628
      %4630 = vrot.lane.b32.xlu0 %v4593, 40
      %v4631 = vpop.permute.xlu0 %4630
      %4632 = vrot.lane.b32.xlu0 %v4595, 40
      %v4633 = vpop.permute.xlu0 %4632
      %4634 = vrot.lane.b32.xlu0 %v4597, 40
      %v4635 = vpop.permute.xlu0 %4634
      %4636 = vrot.lane.b32.xlu0 %v4599, 40
      %v4637 = vpop.permute.xlu0 %4636
      %4638 = vrot.lane.b32.xlu0 %v4601, 40
      %v4639 = vpop.permute.xlu0 %4638
      %4640 = vrot.lane.b32.xlu0 %v4603, 40
      %v4641 = vpop.permute.xlu0 %4640
      %4642 = vrot.lane.b32.xlu0 %v4605, 40
      %v4643 = vpop.permute.xlu0 %4642
      %4644 = vrot.lane.b32.xlu0 %v4607, 40
      %v4645 = vpop.permute.xlu0 %4644
      %4646 = vrot.lane.b32.xlu0 %v4609, 40
      %v4647 = vpop.permute.xlu0 %4646
      %4648 = vrot.lane.b32.xlu0 %v4611, 40
      %v4649 = vpop.permute.xlu0 %4648
      %v4653 = vunpack.c.l.b16 %v3934
      %v4654 = vunpack.c.l.b16 %v3935
      %v4655 = vunpack.c.l.b16 %v3936
      %v4656 = vpack.c.b16 %v4654, %v4653
      %v4657 = vpack.c.b16 %v4655, %v4655
      %v4658 = vrot.slane %v4656, 6
      %v4659 = vsel %vm2788, %v4608, %v4658
      %v4660 = vrot.slane %v4657, 6
      %v4661 = vsel %vm2788, %v4658, %v4660
      %4662 = vrot.lane.b32.xlu0 %v4576, 48
      %v4663 = vpop.permute.xlu0 %4662
      %4664 = vrot.lane.b32.xlu0 %v4579, 48
      %v4665 = vpop.permute.xlu0 %4664
      %4666 = vrot.lane.b32.xlu0 %v4581, 48
      %v4667 = vpop.permute.xlu0 %4666
      %4668 = vrot.lane.b32.xlu0 %v4583, 48
      %v4669 = vpop.permute.xlu0 %4668
      %4670 = vrot.lane.b32.xlu0 %v4585, 48
      %v4671 = vpop.permute.xlu0 %4670
      %4672 = vrot.lane.b32.xlu0 %v4587, 48
      %v4673 = vpop.permute.xlu0 %4672
      %4674 = vrot.lane.b32.xlu0 %v4589, 48
      %v4675 = vpop.permute.xlu0 %4674
      %4676 = vrot.lane.b32.xlu0 %v4591, 48
      %v4677 = vpop.permute.xlu0 %4676
      %4678 = vrot.lane.b32.xlu0 %v4593, 48
      %v4679 = vpop.permute.xlu0 %4678
      %4680 = vrot.lane.b32.xlu0 %v4595, 48
      %v4681 = vpop.permute.xlu0 %4680
      %4682 = vrot.lane.b32.xlu0 %v4597, 48
      %v4683 = vpop.permute.xlu0 %4682
      %4684 = vrot.lane.b32.xlu0 %v4599, 48
      %v4685 = vpop.permute.xlu0 %4684
      %4686 = vrot.lane.b32.xlu0 %v4601, 48
      %v4687 = vpop.permute.xlu0 %4686
      %4688 = vrot.lane.b32.xlu0 %v4603, 48
      %v4689 = vpop.permute.xlu0 %4688
      %4690 = vrot.lane.b32.xlu0 %v4605, 48
      %v4691 = vpop.permute.xlu0 %4690
      %4692 = vrot.lane.b32.xlu0 %v4607, 48
      %v4693 = vpop.permute.xlu0 %4692
      %4694 = vrot.lane.b32.xlu0 %v4609, 48
      %v4695 = vpop.permute.xlu0 %4694
      %4696 = vrot.lane.b32.xlu0 %v4659, 48
      %v4697 = vpop.permute.xlu0 %4696
      %4698 = vrot.lane.b32.xlu0 %v4661, 48
      %v4699 = vpop.permute.xlu0 %4698
      %v4701 = vunpack.c.l.b16 %v3937
      %v4702 = vpack.c.b16 %v3982, %v4701
      %v4704 = vshrl.u32 %v4702, 16
      %v4706 = vrot.slane %v4704, 6
      %v4707 = vshll.u32 %v4702, 16
      %v4709 = vrot.slane %v4707, 7
      %v4710 = vor.u32 %v4706, %v4709
      %v4711 = vrot.slane %v4391, 6
      %v4712 = vrot.slane %v4394, 7
      %v4713 = vor.u32 %v4711, %v4712
      %v4714 = vsel %vm2917, %v4710, %v4713
      %v4715 = vrot.slane %v4400, 6
      %v4716 = vrot.slane %v4403, 7
      %v4717 = vor.u32 %v4715, %v4716
      %v4718 = vsel %vm2917, %v4713, %v4717
      %v4719 = vrot.slane %v4409, 6
      %v4720 = vrot.slane %v4412, 7
      %v4721 = vor.u32 %v4719, %v4720
      %v4722 = vsel %vm2917, %v4717, %v4721
      %v4723 = vrot.slane %v4418, 6
      %v4724 = vrot.slane %v4421, 7
      %v4725 = vor.u32 %v4723, %v4724
      %v4726 = vsel %vm2917, %v4721, %v4725
      %v4727 = vrot.slane %v4427, 6
      %v4728 = vrot.slane %v4430, 7
      %v4729 = vor.u32 %v4727, %v4728
      %v4730 = vsel %vm2917, %v4725, %v4729
      %v4731 = vrot.slane %v4436, 6
      %v4732 = vrot.slane %v4439, 7
      %v4733 = vor.u32 %v4731, %v4732
      %v4734 = vsel %vm2917, %v4729, %v4733
      %v4735 = vrot.slane %v4445, 6
      %v4736 = vrot.slane %v4448, 7
      %v4737 = vor.u32 %v4735, %v4736
      %v4738 = vsel %vm2917, %v4733, %v4737
      %v4739 = vrot.slane %v4454, 6
      %v4740 = vrot.slane %v4457, 7
      %v4741 = vor.u32 %v4739, %v4740
      %v4742 = vsel %vm2917, %v4737, %v4741
      %v4743 = vrot.slane %v4463, 6
      %v4744 = vrot.slane %v4466, 7
      %v4745 = vor.u32 %v4743, %v4744
      %v4746 = vsel %vm2917, %v4741, %v4745
      %v4747 = vrot.slane %v4472, 6
      %v4748 = vrot.slane %v4475, 7
      %v4749 = vor.u32 %v4747, %v4748
      %v4750 = vsel %vm2917, %v4745, %v4749
      %v4751 = vrot.slane %v4481, 6
      %v4752 = vrot.slane %v4484, 7
      %v4753 = vor.u32 %v4751, %v4752
      %v4754 = vsel %vm2917, %v4749, %v4753
      %v4755 = vrot.slane %v4490, 6
      %v4756 = vrot.slane %v4493, 7
      %v4757 = vor.u32 %v4755, %v4756
      %v4758 = vsel %vm2917, %v4753, %v4757
      %v4759 = vrot.slane %v4499, 6
      %v4760 = vrot.slane %v4502, 7
      %v4761 = vor.u32 %v4759, %v4760
      %v4762 = vsel %vm2917, %v4757, %v4761
      %v4763 = vrot.slane %v4508, 6
      %v4764 = vrot.slane %v4511, 7
      %v4765 = vor.u32 %v4763, %v4764
      %v4766 = vsel %vm2917, %v4761, %v4765
      %v4767 = vrot.slane %v4517, 6
      %v4768 = vrot.slane %v4520, 7
      %v4769 = vor.u32 %v4767, %v4768
      %v4770 = vsel %vm2917, %v4765, %v4769
      %v4771 = vrot.slane %v4526, 6
      %v4772 = vrot.slane %v4529, 7
      %v4773 = vor.u32 %v4771, %v4772
      %v4774 = vsel %vm2917, %v4769, %v4773
      %v4776 = vshrl.u32 %v4656, 16
      %v4778 = vrot.slane %v4776, 6
      %v4779 = vshll.u32 %v4656, 16
      %v4781 = vrot.slane %v4779, 7
      %v4782 = vor.u32 %v4778, %v4781
      %v4783 = vsel %vm2917, %v4773, %v4782
      %v4785 = vshrl.u32 %v4657, 16
      %v4787 = vrot.slane %v4785, 6
      %v4788 = vshll.u32 %v4657, 16
      %v4790 = vrot.slane %v4788, 7
      %v4791 = vor.u32 %v4787, %v4790
      %v4792 = vsel %vm2917, %v4782, %v4791
      %4793 = vrot.lane.b32.xlu0 %v4710, 56
      %v4794 = vpop.permute.xlu0 %4793
      %4795 = vrot.lane.b32.xlu0 %v4714, 56
      %v4796 = vpop.permute.xlu0 %4795
      %4797 = vrot.lane.b32.xlu0 %v4718, 56
      %v4798 = vpop.permute.xlu0 %4797
      %4799 = vrot.lane.b32.xlu0 %v4722, 56
      %v4800 = vpop.permute.xlu0 %4799
      %4801 = vrot.lane.b32.xlu0 %v4726, 56
      %v4802 = vpop.permute.xlu0 %4801
      %4803 = vrot.lane.b32.xlu0 %v4730, 56
      %v4804 = vpop.permute.xlu0 %4803
      %4805 = vrot.lane.b32.xlu0 %v4734, 56
      %v4806 = vpop.permute.xlu0 %4805
      %4807 = vrot.lane.b32.xlu0 %v4738, 56
      %v4808 = vpop.permute.xlu0 %4807
      %4809 = vrot.lane.b32.xlu0 %v4742, 56
      %v4810 = vpop.permute.xlu0 %4809
      %4811 = vrot.lane.b32.xlu0 %v4746, 56
      %v4812 = vpop.permute.xlu0 %4811
      %4813 = vrot.lane.b32.xlu0 %v4750, 56
      %v4814 = vpop.permute.xlu0 %4813
      %4815 = vrot.lane.b32.xlu0 %v4754, 56
      %v4816 = vpop.permute.xlu0 %4815
      %4817 = vrot.lane.b32.xlu0 %v4758, 56
      %v4818 = vpop.permute.xlu0 %4817
      %4819 = vrot.lane.b32.xlu0 %v4762, 56
      %v4820 = vpop.permute.xlu0 %4819
      %4821 = vrot.lane.b32.xlu0 %v4766, 56
      %v4822 = vpop.permute.xlu0 %4821
      %4823 = vrot.lane.b32.xlu0 %v4770, 56
      %v4824 = vpop.permute.xlu0 %4823
      %4825 = vrot.lane.b32.xlu0 %v4774, 56
      %v4826 = vpop.permute.xlu0 %4825
      %4827 = vrot.lane.b32.xlu0 %v4783, 56
      %v4828 = vpop.permute.xlu0 %4827
      %4829 = vrot.lane.b32.xlu0 %v4792, 56
      %v4830 = vpop.permute.xlu0 %4829
      %v4832 = vunpack.c.l.b16 %v3938
      %v4833 = vpack.c.b16 %v4832, %v4832
      %v4834 = vrot.slane %v4702, 7
      %v4835 = vrot.slane %v4357, 7
      %v4836 = vsel %vm3049, %v4834, %v4835
      %v4837 = vrot.slane %v4358, 7
      %v4838 = vsel %vm3049, %v4835, %v4837
      %v4839 = vrot.slane %v4359, 7
      %v4840 = vsel %vm3049, %v4837, %v4839
      %v4841 = vrot.slane %v4360, 7
      %v4842 = vsel %vm3049, %v4839, %v4841
      %v4843 = vrot.slane %v4361, 7
      %v4844 = vsel %vm3049, %v4841, %v4843
      %v4845 = vrot.slane %v4362, 7
      %v4846 = vsel %vm3049, %v4843, %v4845
      %v4847 = vrot.slane %v4363, 7
      %v4848 = vsel %vm3049, %v4845, %v4847
      %v4849 = vrot.slane %v4364, 7
      %v4850 = vsel %vm3049, %v4847, %v4849
      %v4851 = vrot.slane %v4365, 7
      %v4852 = vsel %vm3049, %v4849, %v4851
      %v4853 = vrot.slane %v4366, 7
      %v4854 = vsel %vm3049, %v4851, %v4853
      %v4855 = vrot.slane %v4367, 7
      %v4856 = vsel %vm3049, %v4853, %v4855
      %v4857 = vrot.slane %v4368, 7
      %v4858 = vsel %vm3049, %v4855, %v4857
      %v4859 = vrot.slane %v4369, 7
      %v4860 = vsel %vm3049, %v4857, %v4859
      %v4861 = vrot.slane %v4370, 7
      %v4862 = vsel %vm3049, %v4859, %v4861
      %v4863 = vrot.slane %v4371, 7
      %v4864 = vsel %vm3049, %v4861, %v4863
      %v4865 = vrot.slane %v4372, 7
      %v4866 = vsel %vm3049, %v4863, %v4865
      %v4867 = vrot.slane %v4656, 7
      %v4868 = vsel %vm3049, %v4865, %v4867
      %v4869 = vrot.slane %v4833, 7
      %v4870 = vsel %vm3049, %v4867, %v4869
      %4871 = vrot.lane.b32.xlu0 %v4834, 64
      %v4872 = vpop.permute.xlu0 %4871
      %4873 = vrot.lane.b32.xlu0 %v4836, 64
      %v4874 = vpop.permute.xlu0 %4873
      %4875 = vrot.lane.b32.xlu0 %v4838, 64
      %v4876 = vpop.permute.xlu0 %4875
      %4877 = vrot.lane.b32.xlu0 %v4840, 64
      %v4878 = vpop.permute.xlu0 %4877
      %4879 = vrot.lane.b32.xlu0 %v4842, 64
      %v4880 = vpop.permute.xlu0 %4879
      %4881 = vrot.lane.b32.xlu0 %v4844, 64
      %v4882 = vpop.permute.xlu0 %4881
      %4883 = vrot.lane.b32.xlu0 %v4846, 64
      %v4884 = vpop.permute.xlu0 %4883
      %4885 = vrot.lane.b32.xlu0 %v4848, 64
      %v4886 = vpop.permute.xlu0 %4885
      %4887 = vrot.lane.b32.xlu0 %v4850, 64
      %v4888 = vpop.permute.xlu0 %4887
      %4889 = vrot.lane.b32.xlu0 %v4852, 64
      %v4890 = vpop.permute.xlu0 %4889
      %4891 = vrot.lane.b32.xlu0 %v4854, 64
      %v4892 = vpop.permute.xlu0 %4891
      %4893 = vrot.lane.b32.xlu0 %v4856, 64
      %v4894 = vpop.permute.xlu0 %4893
      %4895 = vrot.lane.b32.xlu0 %v4858, 64
      %v4896 = vpop.permute.xlu0 %4895
      %4897 = vrot.lane.b32.xlu0 %v4860, 64
      %v4898 = vpop.permute.xlu0 %4897
      %4899 = vrot.lane.b32.xlu0 %v4862, 64
      %v4900 = vpop.permute.xlu0 %4899
      %4901 = vrot.lane.b32.xlu0 %v4864, 64
      %v4902 = vpop.permute.xlu0 %4901
      %4903 = vrot.lane.b32.xlu0 %v4866, 64
      %v4904 = vpop.permute.xlu0 %4903
      %4905 = vrot.lane.b32.xlu0 %v4868, 64
      %v4906 = vpop.permute.xlu0 %4905
      %4907 = vrot.lane.b32.xlu0 %v4870, 64
      %v4908 = vpop.permute.xlu0 %4907
      %v4911 = vsel %vm1392, %v4013, %v4187
      %v4913 = vsel %vm1392, %v4014, %v4189
      %v4915 = vsel %vm1392, %v4015, %v4191
      %v4917 = vsel %vm1392, %v4016, %v4193
      %v4919 = vsel %vm1392, %v4017, %v4195
      %v4921 = vsel %vm1392, %v4018, %v4197
      %v4923 = vsel %vm1392, %v4019, %v4199
      %v4925 = vsel %vm1392, %v4020, %v4201
      %v4927 = vsel %vm1392, %v4021, %v4203
      %v4929 = vsel %vm1392, %v4022, %v4205
      %v4931 = vsel %vm1392, %v4023, %v4207
      %v4933 = vsel %vm1392, %v4024, %v4209
      %v4935 = vsel %vm1392, %v4025, %v4211
      %v4937 = vsel %vm1392, %v4026, %v4213
      %v4939 = vsel %vm1392, %v4027, %v4215
      %v4941 = vsel %vm1392, %v4028, %v4217
      %v4943 = vsel %vm1392, %v4029, %v4219
      %v4945 = vsel %vm1392, %v4030, %v4221
      %v4947 = vsel %vm1392, %v4031, %v4223
      %v4949 = vsel %vm1466, %v4911, %v4265
      %v4951 = vsel %vm1466, %v4913, %v4267
      %v4953 = vsel %vm1466, %v4915, %v4269
      %v4955 = vsel %vm1466, %v4917, %v4271
      %v4957 = vsel %vm1466, %v4919, %v4273
      %v4959 = vsel %vm1466, %v4921, %v4275
      %v4961 = vsel %vm1466, %v4923, %v4277
      %v4963 = vsel %vm1466, %v4925, %v4279
      %v4965 = vsel %vm1466, %v4927, %v4281
      %v4967 = vsel %vm1466, %v4929, %v4283
      %v4969 = vsel %vm1466, %v4931, %v4285
      %v4971 = vsel %vm1466, %v4933, %v4287
      %v4973 = vsel %vm1466, %v4935, %v4289
      %v4975 = vsel %vm1466, %v4937, %v4291
      %v4977 = vsel %vm1466, %v4939, %v4293
      %v4979 = vsel %vm1466, %v4941, %v4295
      %v4981 = vsel %vm1466, %v4943, %v4297
      %v4983 = vsel %vm1466, %v4945, %v4299
      %v4985 = vsel %vm1466, %v4947, %v4301
      %v4987 = vsel %vm1540, %v4949, %v4318
      %v4989 = vsel %vm1540, %v4951, %v4320
      %v4991 = vsel %vm1540, %v4953, %v4322
      %v4993 = vsel %vm1540, %v4955, %v4324
      %v4995 = vsel %vm1540, %v4957, %v4326
      %v4997 = vsel %vm1540, %v4959, %v4328
      %v4999 = vsel %vm1540, %v4961, %v4330
      %v5001 = vsel %vm1540, %v4963, %v4332
      %v5003 = vsel %vm1540, %v4965, %v4334
      %v5005 = vsel %vm1540, %v4967, %v4336
      %v5007 = vsel %vm1540, %v4969, %v4338
      %v5009 = vsel %vm1540, %v4971, %v4340
      %v5011 = vsel %vm1540, %v4973, %v4342
      %v5013 = vsel %vm1540, %v4975, %v4344
      %v5015 = vsel %vm1540, %v4977, %v4346
      %v5017 = vsel %vm1540, %v4979, %v4348
      %v5019 = vsel %vm1540, %v4981, %v4350
      %v5021 = vsel %vm1540, %v4983, %v4352
      %v5023 = vsel %vm1540, %v4985, %v4354
      %v5025 = vsel %vm1614, %v4987, %v4535
      %v5027 = vsel %vm1614, %v4989, %v4537
      %v5029 = vsel %vm1614, %v4991, %v4539
      %v5031 = vsel %vm1614, %v4993, %v4541
      %v5033 = vsel %vm1614, %v4995, %v4543
      %v5035 = vsel %vm1614, %v4997, %v4545
      %v5037 = vsel %vm1614, %v4999, %v4547
      %v5039 = vsel %vm1614, %v5001, %v4549
      %v5041 = vsel %vm1614, %v5003, %v4551
      %v5043 = vsel %vm1614, %v5005, %v4553
      %v5045 = vsel %vm1614, %v5007, %v4555
      %v5047 = vsel %vm1614, %v5009, %v4557
      %v5049 = vsel %vm1614, %v5011, %v4559
      %v5051 = vsel %vm1614, %v5013, %v4561
      %v5053 = vsel %vm1614, %v5015, %v4563
      %v5055 = vsel %vm1614, %v5017, %v4565
      %v5057 = vsel %vm1614, %v5019, %v4567
      %v5059 = vsel %vm1614, %v5021, %v4569
      %v5061 = vsel %vm1614, %v5023, %v4571
      %v5063 = vsel %vm3278, %v5025, %v4613
      %v5065 = vsel %vm3278, %v5027, %v4615
      %v5067 = vsel %vm3278, %v5029, %v4617
      %v5069 = vsel %vm3278, %v5031, %v4619
      %v5071 = vsel %vm3278, %v5033, %v4621
      %v5073 = vsel %vm3278, %v5035, %v4623
      %v5075 = vsel %vm3278, %v5037, %v4625
      %v5077 = vsel %vm3278, %v5039, %v4627
      %v5079 = vsel %vm3278, %v5041, %v4629
      %v5081 = vsel %vm3278, %v5043, %v4631
      %v5083 = vsel %vm3278, %v5045, %v4633
      %v5085 = vsel %vm3278, %v5047, %v4635
      %v5087 = vsel %vm3278, %v5049, %v4637
      %v5089 = vsel %vm3278, %v5051, %v4639
      %v5091 = vsel %vm3278, %v5053, %v4641
      %v5093 = vsel %vm3278, %v5055, %v4643
      %v5095 = vsel %vm3278, %v5057, %v4645
      %v5097 = vsel %vm3278, %v5059, %v4647
      %v5099 = vsel %vm3278, %v5061, %v4649
      %v5101 = vsel %vm3317, %v5063, %v4663
      %v5103 = vsel %vm3317, %v5065, %v4665
      %v5105 = vsel %vm3317, %v5067, %v4667
      %v5107 = vsel %vm3317, %v5069, %v4669
      %v5109 = vsel %vm3317, %v5071, %v4671
      %v5111 = vsel %vm3317, %v5073, %v4673
      %v5113 = vsel %vm3317, %v5075, %v4675
      %v5115 = vsel %vm3317, %v5077, %v4677
      %v5117 = vsel %vm3317, %v5079, %v4679
      %v5119 = vsel %vm3317, %v5081, %v4681
      %v5121 = vsel %vm3317, %v5083, %v4683
      %v5123 = vsel %vm3317, %v5085, %v4685
      %v5125 = vsel %vm3317, %v5087, %v4687
      %v5127 = vsel %vm3317, %v5089, %v4689
      %v5129 = vsel %vm3317, %v5091, %v4691
      %v5131 = vsel %vm3317, %v5093, %v4693
      %v5133 = vsel %vm3317, %v5095, %v4695
      %v5135 = vsel %vm3317, %v5097, %v4697
      %v5137 = vsel %vm3317, %v5099, %v4699
      %v5139 = vsel %vm3356, %v5101, %v4794
      %v5141 = vsel %vm3356, %v5103, %v4796
      %v5143 = vsel %vm3356, %v5105, %v4798
      %v5145 = vsel %vm3356, %v5107, %v4800
      %v5147 = vsel %vm3356, %v5109, %v4802
      %v5149 = vsel %vm3356, %v5111, %v4804
      %v5151 = vsel %vm3356, %v5113, %v4806
      %v5153 = vsel %vm3356, %v5115, %v4808
      %v5155 = vsel %vm3356, %v5117, %v4810
      %v5157 = vsel %vm3356, %v5119, %v4812
      %v5159 = vsel %vm3356, %v5121, %v4814
      %v5161 = vsel %vm3356, %v5123, %v4816
      %v5163 = vsel %vm3356, %v5125, %v4818
      %v5165 = vsel %vm3356, %v5127, %v4820
      %v5167 = vsel %vm3356, %v5129, %v4822
      %v5169 = vsel %vm3356, %v5131, %v4824
      %v5171 = vsel %vm3356, %v5133, %v4826
      %v5173 = vsel %vm3356, %v5135, %v4828
      %v5175 = vsel %vm3356, %v5137, %v4830
      %v5177 = vsel %vm3395, %v5139, %v4872
      %v5179 = vsel %vm3395, %v5141, %v4874
      %v5181 = vsel %vm3395, %v5143, %v4876
      %v5183 = vsel %vm3395, %v5145, %v4878
      %v5185 = vsel %vm3395, %v5147, %v4880
      %v5187 = vsel %vm3395, %v5149, %v4882
      %v5189 = vsel %vm3395, %v5151, %v4884
      %v5191 = vsel %vm3395, %v5153, %v4886
      %v5193 = vsel %vm3395, %v5155, %v4888
      %v5195 = vsel %vm3395, %v5157, %v4890
      %v5197 = vsel %vm3395, %v5159, %v4892
      %v5199 = vsel %vm3395, %v5161, %v4894
      %v5201 = vsel %vm3395, %v5163, %v4896
      %v5203 = vsel %vm3395, %v5165, %v4898
      %v5205 = vsel %vm3395, %v5167, %v4900
      %v5207 = vsel %vm3395, %v5169, %v4902
      %v5209 = vsel %vm3395, %v5171, %v4904
      %v5211 = vsel %vm3395, %v5173, %v4906
      %v5213 = vsel %vm3395, %v5175, %v4908
      %v5214 = vld [vmem:[%s4] sm:$0xf]
      %v5215 = vld [vmem:[%s4 + $0x4] sm:$0xf]
      %v5216 = vld [vmem:[%s4 + $0x8] sm:$0xf]
      %v5217 = vld [vmem:[%s4 + $0xc] sm:$0xf]
      %v5218 = vld [vmem:[%s4 + $0x10] sm:$0xf]
      %v5219 = vld [vmem:[%s4 + $0x14] sm:$0xf]
      %v5220 = vld [vmem:[%s4 + $0x18] sm:$0xf]
      %v5221 = vld [vmem:[%s4 + $0x1c] sm:$0xf]
      %v5222 = vld [vmem:[%s4 + $0x20] sm:$0xf]
      %v5223 = vld [vmem:[%s8] sm:$0x1]
      %v5225 = vperm.slane %v5223, 0
      %v5227 = vshrl.u32 %v5177, 16
      %v5229 = vrot.slane %v5227, 2
      %v5230 = vshll.u32 %v5177, 16
      %v5232 = vrot.slane %v5230, 3
      %v5233 = vor.u32 %v5229, %v5232
      %v5234 = vshrl.u32 %v5179, 16
      %v5236 = vrot.slane %v5234, 2
      %v5237 = vshll.u32 %v5179, 16
      %v5239 = vrot.slane %v5237, 3
      %v5240 = vor.u32 %v5236, %v5239
      %v5241 = vsel %vm1151, %v5233, %v5240
      %v5242 = vshrl.u32 %v5181, 16
      %v5244 = vrot.slane %v5242, 2
      %v5245 = vshll.u32 %v5181, 16
      %v5247 = vrot.slane %v5245, 3
      %v5248 = vor.u32 %v5244, %v5247
      %v5249 = vsel %vm1151, %v5240, %v5248
      %v5250 = vshrl.u32 %v5183, 16
      %v5252 = vrot.slane %v5250, 2
      %v5253 = vshll.u32 %v5183, 16
      %v5255 = vrot.slane %v5253, 3
      %v5256 = vor.u32 %v5252, %v5255
      %v5257 = vsel %vm1151, %v5248, %v5256
      %v5258 = vshrl.u32 %v5185, 16
      %v5260 = vrot.slane %v5258, 2
      %v5261 = vshll.u32 %v5185, 16
      %v5263 = vrot.slane %v5261, 3
      %v5264 = vor.u32 %v5260, %v5263
      %v5265 = vsel %vm1151, %v5256, %v5264
      %v5266 = vshrl.u32 %v5187, 16
      %v5268 = vrot.slane %v5266, 2
      %v5269 = vshll.u32 %v5187, 16
      %v5271 = vrot.slane %v5269, 3
      %v5272 = vor.u32 %v5268, %v5271
      %v5273 = vsel %vm1151, %v5264, %v5272
      %v5274 = vshrl.u32 %v5189, 16
      %v5276 = vrot.slane %v5274, 2
      %v5277 = vshll.u32 %v5189, 16
      %v5279 = vrot.slane %v5277, 3
      %v5280 = vor.u32 %v5276, %v5279
      %v5281 = vsel %vm1151, %v5272, %v5280
      %v5282 = vshrl.u32 %v5191, 16
      %v5284 = vrot.slane %v5282, 2
      %v5285 = vshll.u32 %v5191, 16
      %v5287 = vrot.slane %v5285, 3
      %v5288 = vor.u32 %v5284, %v5287
      %v5289 = vsel %vm1151, %v5280, %v5288
      %v5290 = vshrl.u32 %v5193, 16
      %v5292 = vrot.slane %v5290, 2
      %v5293 = vshll.u32 %v5193, 16
      %v5295 = vrot.slane %v5293, 3
      %v5296 = vor.u32 %v5292, %v5295
      %v5297 = vsel %vm1151, %v5288, %v5296
      %v5298 = vshrl.u32 %v5195, 16
      %v5300 = vrot.slane %v5298, 2
      %v5301 = vshll.u32 %v5195, 16
      %v5303 = vrot.slane %v5301, 3
      %v5304 = vor.u32 %v5300, %v5303
      %v5305 = vsel %vm1151, %v5296, %v5304
      %v5306 = vshrl.u32 %v5197, 16
      %v5308 = vrot.slane %v5306, 2
      %v5309 = vshll.u32 %v5197, 16
      %v5311 = vrot.slane %v5309, 3
      %v5312 = vor.u32 %v5308, %v5311
      %v5313 = vsel %vm1151, %v5304, %v5312
      %v5314 = vshrl.u32 %v5199, 16
      %v5316 = vrot.slane %v5314, 2
      %v5317 = vshll.u32 %v5199, 16
      %v5319 = vrot.slane %v5317, 3
      %v5320 = vor.u32 %v5316, %v5319
      %v5321 = vsel %vm1151, %v5312, %v5320
      %v5322 = vshrl.u32 %v5201, 16
      %v5324 = vrot.slane %v5322, 2
      %v5325 = vshll.u32 %v5201, 16
      %v5327 = vrot.slane %v5325, 3
      %v5328 = vor.u32 %v5324, %v5327
      %v5329 = vsel %vm1151, %v5320, %v5328
      %v5330 = vshrl.u32 %v5203, 16
      %v5332 = vrot.slane %v5330, 2
      %v5333 = vshll.u32 %v5203, 16
      %v5335 = vrot.slane %v5333, 3
      %v5336 = vor.u32 %v5332, %v5335
      %v5337 = vsel %vm1151, %v5328, %v5336
      %v5338 = vshrl.u32 %v5205, 16
      %v5340 = vrot.slane %v5338, 2
      %v5341 = vshll.u32 %v5205, 16
      %v5343 = vrot.slane %v5341, 3
      %v5344 = vor.u32 %v5340, %v5343
      %v5345 = vsel %vm1151, %v5336, %v5344
      %v5346 = vshrl.u32 %v5207, 16
      %v5348 = vrot.slane %v5346, 2
      %v5349 = vshll.u32 %v5207, 16
      %v5351 = vrot.slane %v5349, 3
      %v5352 = vor.u32 %v5348, %v5351
      %v5353 = vsel %vm1151, %v5344, %v5352
      %v5354 = vshrl.u32 %v5209, 16
      %v5356 = vrot.slane %v5354, 2
      %v5357 = vshll.u32 %v5209, 16
      %v5359 = vrot.slane %v5357, 3
      %v5360 = vor.u32 %v5356, %v5359
      %v5361 = vsel %vm1151, %v5352, %v5360
      %v5362 = vshrl.u32 %v5211, 16
      %v5364 = vrot.slane %v5362, 2
      %v5365 = vshll.u32 %v5211, 16
      %v5367 = vrot.slane %v5365, 3
      %v5368 = vor.u32 %v5364, %v5367
      %v5369 = vsel %vm1151, %v5360, %v5368
      %v5370 = vshrl.u32 %v5213, 16
      %v5372 = vrot.slane %v5370, 2
      %v5373 = vshll.u32 %v5213, 16
      %v5375 = vrot.slane %v5373, 3
      %v5376 = vor.u32 %v5372, %v5375
      %v5377 = vsel %vm1151, %v5368, %v5376
      %v5387 = vunpack.c.l.b16 %v5214
      %v5388 = vunpack.c.l.b16 %v5215
      %v5389 = vunpack.c.l.b16 %v5216
      %v5390 = vunpack.c.l.b16 %v5217
      %v5391 = vunpack.c.l.b16 %v5218
      %v5392 = vunpack.c.l.b16 %v5219
      %v5393 = vunpack.c.l.b16 %v5220
      %v5394 = vunpack.c.l.b16 %v5221
      %v5395 = vunpack.c.l.b16 %v5222
      %v5396 = vpack.c.b16 %v5388, %v5387
      %v5397 = vpack.c.b16 %v5390, %v5389
      %v5398 = vpack.c.b16 %v5392, %v5391
      %v5399 = vpack.c.b16 %v5394, %v5393
      %v5400 = vpack.c.b16 %v5395, %v5395
      %v5406 = vsel %vm3625, %v5241, 0
      %v5409 = vsel %vm3625, %v5249, 0
      %v5412 = vsel %vm3625, %v5257, 0
      %v5415 = vsel %vm3625, %v5265, 0
      %v5418 = vsel %vm3625, %v5273, 0
      %v5421 = vsel %vm3625, %v5281, 0
      %v5424 = vsel %vm3625, %v5289, 0
      %v5427 = vsel %vm3625, %v5297, 0
      %v5430 = vsel %vm3625, %v5305, 0
      %v5433 = vsel %vm3625, %v5313, 0
      %v5436 = vsel %vm3625, %v5321, 0
      %v5439 = vsel %vm3625, %v5329, 0
      %v5442 = vsel %vm3625, %v5337, 0
      %v5445 = vsel %vm3625, %v5345, 0
      %v5448 = vsel %vm3625, %v5353, 0
      %v5451 = vsel %vm3625, %v5361, 0
      %v5454 = vsel %vm3625, %v5369, 0
      %v5457 = vsel %vm3625, %v5377, 0
      %v5460 = vsel %vm3680, %v5400, 0
      %5462 = vmatpush.bf16.msra.mxu0 0
      %5463 = vmatpush.bf16.msra.mxu0 0
      %5464 = vmatpush.bf16.msra.mxu0 0
      %5465 = vmatpush.bf16.msra.mxu0 %v5460
      %5466 = vmatpush.bf16.msra.mxu0 %v5399
      %5467 = vmatpush.bf16.msra.mxu0 %v5398
      %5468 = vmatpush.bf16.msra.mxu0 %v5397
      %5469 = vmatpush.bf16.msra.mxu0 %v5396
      %5470 = vmatmul.bf16.gmra.mxu0 %v5406
      %v5471 = vpop.f32.mrf.mxu0
      %v5472 = vadd.f32 %v5225, %v5471
      %v5473 = vpop.f32.mrf.mxu0
      %v5474 = vadd.f32 %v5225, %v5473
      %5475 = vmatmul.bf16.gmra.mxu0 %v5409
      %v5476 = vpop.f32.mrf.mxu0
      %v5477 = vadd.f32 %v5225, %v5476
      %v5478 = vpop.f32.mrf.mxu0
      %v5479 = vadd.f32 %v5225, %v5478
      %5480 = vmatmul.bf16.gmra.mxu0 %v5412
      %v5481 = vpop.f32.mrf.mxu0
      %v5482 = vadd.f32 %v5225, %v5481
      %v5483 = vpop.f32.mrf.mxu0
      %v5484 = vadd.f32 %v5225, %v5483
      %5485 = vmatmul.bf16.gmra.mxu0 %v5415
      %v5486 = vpop.f32.mrf.mxu0
      %v5487 = vadd.f32 %v5225, %v5486
      %v5488 = vpop.f32.mrf.mxu0
      %v5489 = vadd.f32 %v5225, %v5488
      %5490 = vmatmul.bf16.gmra.mxu0 %v5418
      %v5491 = vpop.f32.mrf.mxu0
      %v5492 = vadd.f32 %v5225, %v5491
      %v5493 = vpop.f32.mrf.mxu0
      %v5494 = vadd.f32 %v5225, %v5493
      %5495 = vmatmul.bf16.gmra.mxu0 %v5421
      %v5496 = vpop.f32.mrf.mxu0
      %v5497 = vadd.f32 %v5225, %v5496
      %v5498 = vpop.f32.mrf.mxu0
      %v5499 = vadd.f32 %v5225, %v5498
      %5500 = vmatmul.bf16.gmra.mxu0 %v5424
      %v5501 = vpop.f32.mrf.mxu0
      %v5502 = vadd.f32 %v5225, %v5501
      %v5503 = vpop.f32.mrf.mxu0
      %v5504 = vadd.f32 %v5225, %v5503
      %5505 = vmatmul.bf16.gmra.mxu0 %v5427
      %v5506 = vpop.f32.mrf.mxu0
      %v5507 = vadd.f32 %v5225, %v5506
      %v5508 = vpop.f32.mrf.mxu0
      %v5509 = vadd.f32 %v5225, %v5508
      %5510 = vmatmul.bf16.gmra.mxu0 %v5430
      %v5511 = vpop.f32.mrf.mxu0
      %v5512 = vadd.f32 %v5225, %v5511
      %v5513 = vpop.f32.mrf.mxu0
      %v5514 = vadd.f32 %v5225, %v5513
      %5515 = vmatmul.bf16.gmra.mxu0 %v5433
      %v5516 = vpop.f32.mrf.mxu0
      %v5517 = vadd.f32 %v5225, %v5516
      %v5518 = vpop.f32.mrf.mxu0
      %v5519 = vadd.f32 %v5225, %v5518
      %5520 = vmatmul.bf16.gmra.mxu0 %v5436
      %v5521 = vpop.f32.mrf.mxu0
      %v5522 = vadd.f32 %v5225, %v5521
      %v5523 = vpop.f32.mrf.mxu0
      %v5524 = vadd.f32 %v5225, %v5523
      %5525 = vmatmul.bf16.gmra.mxu0 %v5439
      %v5526 = vpop.f32.mrf.mxu0
      %v5527 = vadd.f32 %v5225, %v5526
      %v5528 = vpop.f32.mrf.mxu0
      %v5529 = vadd.f32 %v5225, %v5528
      %5530 = vmatmul.bf16.gmra.mxu0 %v5442
      %v5531 = vpop.f32.mrf.mxu0
      %v5532 = vadd.f32 %v5225, %v5531
      %v5533 = vpop.f32.mrf.mxu0
      %v5534 = vadd.f32 %v5225, %v5533
      %5535 = vmatmul.bf16.gmra.mxu0 %v5445
      %v5536 = vpop.f32.mrf.mxu0
      %v5537 = vadd.f32 %v5225, %v5536
      %v5538 = vpop.f32.mrf.mxu0
      %v5539 = vadd.f32 %v5225, %v5538
      %5540 = vmatmul.bf16.gmra.mxu0 %v5448
      %v5541 = vpop.f32.mrf.mxu0
      %v5542 = vadd.f32 %v5225, %v5541
      %v5543 = vpop.f32.mrf.mxu0
      %v5544 = vadd.f32 %v5225, %v5543
      %5545 = vmatmul.bf16.gmra.mxu0 %v5451
      %v5546 = vpop.f32.mrf.mxu0
      %v5547 = vadd.f32 %v5225, %v5546
      %v5548 = vpop.f32.mrf.mxu0
      %v5549 = vadd.f32 %v5225, %v5548
      %5550 = vmatmul.bf16.gmra.mxu0 %v5454
      %v5551 = vpop.f32.mrf.mxu0
      %v5552 = vadd.f32 %v5225, %v5551
      %v5553 = vpop.f32.mrf.mxu0
      %v5554 = vadd.f32 %v5225, %v5553
      %5555 = vmatmul.bf16.gmra.mxu0 %v5457
      %v5556 = vpop.f32.mrf.mxu0
      %v5557 = vadd.f32 %v5225, %v5556
      %v5558 = vpop.f32.mrf.mxu0
      %v5559 = vadd.f32 %v5225, %v5558
      %5560 = vdwg.mxu0
      %v5561 = vld [vmem:[%s327 + $0x8] sm:$0xe]
      %v5562 = vld [vmem:[%s327 + $0xc] sm:$0xf]
      %v5563 = vld [vmem:[%s327 + $0x10] sm:$0xf]
      %v5564 = vld [vmem:[%s327 + $0x14] sm:$0xf]
      %v5565 = vld [vmem:[%s327 + $0x18] sm:$0xf]
      %v5566 = vld [vmem:[%s327 + $0x1c] sm:$0xf]
      %v5567 = vld [vmem:[%s327 + $0x20] sm:$0xf]
      %v5568 = vld [vmem:[%s327 + $0x24] sm:$0xf]
      %v5569 = vld [vmem:[%s327 + $0x28] sm:$0xf]
      %v5570 = vld [vmem:[%s327 + $0x2c] sm:$0xf]
      %v5571 = vld [vmem:[%s327 + $0x30] sm:$0xf]
      %v5572 = vld [vmem:[%s327 + $0x34] sm:$0xf]
      %v5573 = vld [vmem:[%s327 + $0x38] sm:$0xf]
      %v5574 = vld [vmem:[%s327 + $0x3c] sm:$0xf]
      %v5575 = vld [vmem:[%s327 + $0x40] sm:$0xf]
      %v5576 = vld [vmem:[%s327 + $0x44] sm:$0xf]
      %v5577 = vld [vmem:[%s327 + $0x48] sm:$0xf]
      %v5578 = vld [vmem:[%s327 + $0x4c] sm:$0xf]
      %v5579 = vld [vmem:[%s327 + $0x50] sm:$0xf]
      %v5580 = vld [vmem:[%s327 + $0x54] sm:$0xf]
      %v5581 = vld [vmem:[%s327 + $0x58] sm:$0xf]
      %v5582 = vld [vmem:[%s327 + $0x5c] sm:$0xf]
      %v5583 = vld [vmem:[%s327 + $0x60] sm:$0xf]
      %v5584 = vld [vmem:[%s327 + $0x64] sm:$0xf]
      %v5585 = vld [vmem:[%s327 + $0x68] sm:$0xf]
      %v5586 = vld [vmem:[%s327 + $0x6c] sm:$0xf]
      %v5587 = vld [vmem:[%s327 + $0x70] sm:$0xf]
      %v5588 = vld [vmem:[%s327 + $0x74] sm:$0xf]
      %v5589 = vld [vmem:[%s327 + $0x78] sm:$0xf]
      %v5590 = vld [vmem:[%s327 + $0x7c] sm:$0xf]
      %v5591 = vld [vmem:[%s327 + $0x80] sm:$0xf]
      %v5592 = vld [vmem:[%s327 + $0x84] sm:$0xf]
      %v5593 = vld [vmem:[%s327 + $0x88] sm:$0xf]
      %v5594 = vld [vmem:[%s327 + $0x8c] sm:$0xf]
      %v5595 = vld [vmem:[%s327 + $0x90] sm:$0xf]
      %v5596 = vld [vmem:[%s327 + $0x94] sm:$0xf]
      %v5597 = vld [vmem:[%s327 + $0x98] sm:$0x3]
      %v5598 = vld [vmem:[%s5] sm:$0x3]
      %v5636 = vunpack.c.l.b16 %v5561
      %v5637 = vunpack.c.l.b16 %v5562
      %v5638 = vunpack.c.l.b16 %v5563
      %v5639 = vunpack.c.l.b16 %v5564
      %v5640 = vunpack.c.l.b16 %v5565
      %v5641 = vunpack.c.l.b16 %v5566
      %v5642 = vunpack.c.l.b16 %v5567
      %v5643 = vunpack.c.l.b16 %v5568
      %v5644 = vunpack.c.l.b16 %v5569
      %v5645 = vunpack.c.l.b16 %v5570
      %v5646 = vunpack.c.l.b16 %v5571
      %v5647 = vunpack.c.l.b16 %v5572
      %v5648 = vunpack.c.l.b16 %v5573
      %v5649 = vunpack.c.l.b16 %v5574
      %v5650 = vunpack.c.l.b16 %v5575
      %v5651 = vunpack.c.l.b16 %v5576
      %v5652 = vunpack.c.l.b16 %v5577
      %v5653 = vunpack.c.l.b16 %v5578
      %v5654 = vunpack.c.l.b16 %v5579
      %v5655 = vunpack.c.l.b16 %v5580
      %v5656 = vunpack.c.l.b16 %v5581
      %v5657 = vunpack.c.l.b16 %v5582
      %v5658 = vunpack.c.l.b16 %v5583
      %v5659 = vunpack.c.l.b16 %v5584
      %v5660 = vunpack.c.l.b16 %v5585
      %v5661 = vunpack.c.l.b16 %v5586
      %v5662 = vunpack.c.l.b16 %v5587
      %v5663 = vunpack.c.l.b16 %v5588
      %v5664 = vunpack.c.l.b16 %v5589
      %v5665 = vunpack.c.l.b16 %v5590
      %v5666 = vunpack.c.l.b16 %v5591
      %v5667 = vunpack.c.l.b16 %v5592
      %v5668 = vunpack.c.l.b16 %v5593
      %v5669 = vunpack.c.l.b16 %v5594
      %v5670 = vunpack.c.l.b16 %v5595
      %v5671 = vunpack.c.l.b16 %v5596
      %v5672 = vunpack.c.l.b16 %v5597
      %v5673 = vpack.c.b16 %v5637, %v5636
      %v5674 = vpack.c.b16 %v5639, %v5638
      %v5675 = vpack.c.b16 %v5641, %v5640
      %v5676 = vpack.c.b16 %v5643, %v5642
      %v5677 = vpack.c.b16 %v5645, %v5644
      %v5678 = vpack.c.b16 %v5647, %v5646
      %v5679 = vpack.c.b16 %v5649, %v5648
      %v5680 = vpack.c.b16 %v5651, %v5650
      %v5681 = vpack.c.b16 %v5653, %v5652
      %v5682 = vpack.c.b16 %v5655, %v5654
      %v5683 = vpack.c.b16 %v5657, %v5656
      %v5684 = vpack.c.b16 %v5659, %v5658
      %v5685 = vpack.c.b16 %v5661, %v5660
      %v5686 = vpack.c.b16 %v5663, %v5662
      %v5687 = vpack.c.b16 %v5665, %v5664
      %v5688 = vpack.c.b16 %v5667, %v5666
      %v5689 = vpack.c.b16 %v5669, %v5668
      %v5690 = vpack.c.b16 %v5671, %v5670
      %v5691 = vpack.c.b16 %v5672, %v5672
      %v5693 = vshrl.u32 %v5673, 16
      %v5695 = vrot.slane %v5693, 1
      %v5696 = vshll.u32 %v5673, 16
      %v5698 = vrot.slane %v5696, 2
      %v5699 = vor.u32 %v5695, %v5698
      %v5701 = vshrl.u32 %v5674, 16
      %v5703 = vrot.slane %v5701, 1
      %v5704 = vshll.u32 %v5674, 16
      %v5706 = vrot.slane %v5704, 2
      %v5707 = vor.u32 %v5703, %v5706
      %v5708 = vsel %vm891, %v5699, %v5707
      %v5710 = vshrl.u32 %v5675, 16
      %v5712 = vrot.slane %v5710, 1
      %v5713 = vshll.u32 %v5675, 16
      %v5715 = vrot.slane %v5713, 2
      %v5716 = vor.u32 %v5712, %v5715
      %v5717 = vsel %vm891, %v5707, %v5716
      %v5719 = vshrl.u32 %v5676, 16
      %v5721 = vrot.slane %v5719, 1
      %v5722 = vshll.u32 %v5676, 16
      %v5724 = vrot.slane %v5722, 2
      %v5725 = vor.u32 %v5721, %v5724
      %v5726 = vsel %vm891, %v5716, %v5725
      %v5728 = vshrl.u32 %v5677, 16
      %v5730 = vrot.slane %v5728, 1
      %v5731 = vshll.u32 %v5677, 16
      %v5733 = vrot.slane %v5731, 2
      %v5734 = vor.u32 %v5730, %v5733
      %v5735 = vsel %vm891, %v5725, %v5734
      %v5737 = vshrl.u32 %v5678, 16
      %v5739 = vrot.slane %v5737, 1
      %v5740 = vshll.u32 %v5678, 16
      %v5742 = vrot.slane %v5740, 2
      %v5743 = vor.u32 %v5739, %v5742
      %v5744 = vsel %vm891, %v5734, %v5743
      %v5746 = vshrl.u32 %v5679, 16
      %v5748 = vrot.slane %v5746, 1
      %v5749 = vshll.u32 %v5679, 16
      %v5751 = vrot.slane %v5749, 2
      %v5752 = vor.u32 %v5748, %v5751
      %v5753 = vsel %vm891, %v5743, %v5752
      %v5755 = vshrl.u32 %v5680, 16
      %v5757 = vrot.slane %v5755, 1
      %v5758 = vshll.u32 %v5680, 16
      %v5760 = vrot.slane %v5758, 2
      %v5761 = vor.u32 %v5757, %v5760
      %v5762 = vsel %vm891, %v5752, %v5761
      %v5764 = vshrl.u32 %v5681, 16
      %v5766 = vrot.slane %v5764, 1
      %v5767 = vshll.u32 %v5681, 16
      %v5769 = vrot.slane %v5767, 2
      %v5770 = vor.u32 %v5766, %v5769
      %v5771 = vsel %vm891, %v5761, %v5770
      %v5773 = vshrl.u32 %v5682, 16
      %v5775 = vrot.slane %v5773, 1
      %v5776 = vshll.u32 %v5682, 16
      %v5778 = vrot.slane %v5776, 2
      %v5779 = vor.u32 %v5775, %v5778
      %v5780 = vsel %vm891, %v5770, %v5779
      %v5782 = vshrl.u32 %v5683, 16
      %v5784 = vrot.slane %v5782, 1
      %v5785 = vshll.u32 %v5683, 16
      %v5787 = vrot.slane %v5785, 2
      %v5788 = vor.u32 %v5784, %v5787
      %v5789 = vsel %vm891, %v5779, %v5788
      %v5791 = vshrl.u32 %v5684, 16
      %v5793 = vrot.slane %v5791, 1
      %v5794 = vshll.u32 %v5684, 16
      %v5796 = vrot.slane %v5794, 2
      %v5797 = vor.u32 %v5793, %v5796
      %v5798 = vsel %vm891, %v5788, %v5797
      %v5800 = vshrl.u32 %v5685, 16
      %v5802 = vrot.slane %v5800, 1
      %v5803 = vshll.u32 %v5685, 16
      %v5805 = vrot.slane %v5803, 2
      %v5806 = vor.u32 %v5802, %v5805
      %v5807 = vsel %vm891, %v5797, %v5806
      %v5809 = vshrl.u32 %v5686, 16
      %v5811 = vrot.slane %v5809, 1
      %v5812 = vshll.u32 %v5686, 16
      %v5814 = vrot.slane %v5812, 2
      %v5815 = vor.u32 %v5811, %v5814
      %v5816 = vsel %vm891, %v5806, %v5815
      %v5818 = vshrl.u32 %v5687, 16
      %v5820 = vrot.slane %v5818, 1
      %v5821 = vshll.u32 %v5687, 16
      %v5823 = vrot.slane %v5821, 2
      %v5824 = vor.u32 %v5820, %v5823
      %v5825 = vsel %vm891, %v5815, %v5824
      %v5827 = vshrl.u32 %v5688, 16
      %v5829 = vrot.slane %v5827, 1
      %v5830 = vshll.u32 %v5688, 16
      %v5832 = vrot.slane %v5830, 2
      %v5833 = vor.u32 %v5829, %v5832
      %v5834 = vsel %vm891, %v5824, %v5833
      %v5836 = vshrl.u32 %v5689, 16
      %v5838 = vrot.slane %v5836, 1
      %v5839 = vshll.u32 %v5689, 16
      %v5841 = vrot.slane %v5839, 2
      %v5842 = vor.u32 %v5838, %v5841
      %v5843 = vsel %vm891, %v5833, %v5842
      %v5845 = vshrl.u32 %v5690, 16
      %v5847 = vrot.slane %v5845, 1
      %v5848 = vshll.u32 %v5690, 16
      %v5850 = vrot.slane %v5848, 2
      %v5851 = vor.u32 %v5847, %v5850
      %v5852 = vsel %vm891, %v5842, %v5851
      %v5854 = vshrl.u32 %v5691, 16
      %v5856 = vrot.slane %v5854, 1
      %v5857 = vshll.u32 %v5691, 16
      %v5859 = vrot.slane %v5857, 2
      %v5860 = vor.u32 %v5856, %v5859
      %v5861 = vsel %vm891, %v5851, %v5860
      %v5863 = vsel %vm1355, %v5708, 0
      %v5866 = vsel %vm1355, %v5717, 0
      %v5869 = vsel %vm1355, %v5726, 0
      %v5872 = vsel %vm1355, %v5735, 0
      %v5875 = vsel %vm1355, %v5744, 0
      %v5878 = vsel %vm1355, %v5753, 0
      %v5881 = vsel %vm1355, %v5762, 0
      %v5884 = vsel %vm1355, %v5771, 0
      %v5887 = vsel %vm1355, %v5780, 0
      %v5890 = vsel %vm1355, %v5789, 0
      %v5893 = vsel %vm1355, %v5798, 0
      %v5896 = vsel %vm1355, %v5807, 0
      %v5899 = vsel %vm1355, %v5816, 0
      %v5902 = vsel %vm1355, %v5825, 0
      %v5905 = vsel %vm1355, %v5834, 0
      %v5908 = vsel %vm1355, %v5843, 0
      %v5911 = vsel %vm1355, %v5852, 0
      %v5914 = vsel %vm1355, %v5861, 0
      %v5917 = vsel %vm1712, %v5598, 0
      %5919 = vmatpush.bf16.msra.mxu0 0
      %5920 = vmatpush.bf16.msra.mxu0 0
      %5921 = vmatpush.bf16.msra.mxu0 0
      %5922 = vmatpush.bf16.msra.mxu0 0
      %5923 = vmatpush.bf16.msra.mxu0 0
      %5924 = vmatpush.bf16.msra.mxu0 0
      %5925 = vmatpush.bf16.msra.mxu0 0
      %5926 = vmatpush.bf16.msra.mxu0 %v5917
      %5927 = vmatmul.bf16.gmra.mxu0 %v5863
      %v5928 = vpop.f32.mrf.mxu0
      %v5929 = vadd.f32 0.0, %v5928
      %v5930 = vpop.f32.mrf.mxu0
      %v5931 = vadd.f32 0.0, %v5930
      %5932 = vmatmul.bf16.gmra.mxu0 %v5866
      %v5933 = vpop.f32.mrf.mxu0
      %v5934 = vadd.f32 0.0, %v5933
      %v5935 = vpop.f32.mrf.mxu0
      %v5936 = vadd.f32 0.0, %v5935
      %5937 = vmatmul.bf16.gmra.mxu0 %v5869
      %v5938 = vpop.f32.mrf.mxu0
      %v5939 = vadd.f32 0.0, %v5938
      %v5940 = vpop.f32.mrf.mxu0
      %v5941 = vadd.f32 0.0, %v5940
      %5942 = vmatmul.bf16.gmra.mxu0 %v5872
      %v5943 = vpop.f32.mrf.mxu0
      %v5944 = vadd.f32 0.0, %v5943
      %v5945 = vpop.f32.mrf.mxu0
      %v5946 = vadd.f32 0.0, %v5945
      %5947 = vmatmul.bf16.gmra.mxu0 %v5875
      %v5948 = vpop.f32.mrf.mxu0
      %v5949 = vadd.f32 0.0, %v5948
      %v5950 = vpop.f32.mrf.mxu0
      %v5951 = vadd.f32 0.0, %v5950
      %5952 = vmatmul.bf16.gmra.mxu0 %v5878
      %v5953 = vpop.f32.mrf.mxu0
      %v5954 = vadd.f32 0.0, %v5953
      %v5955 = vpop.f32.mrf.mxu0
      %v5956 = vadd.f32 0.0, %v5955
      %5957 = vmatmul.bf16.gmra.mxu0 %v5881
      %v5958 = vpop.f32.mrf.mxu0
      %v5959 = vadd.f32 0.0, %v5958
      %v5960 = vpop.f32.mrf.mxu0
      %v5961 = vadd.f32 0.0, %v5960
      %5962 = vmatmul.bf16.gmra.mxu0 %v5884
      %v5963 = vpop.f32.mrf.mxu0
      %v5964 = vadd.f32 0.0, %v5963
      %v5965 = vpop.f32.mrf.mxu0
      %v5966 = vadd.f32 0.0, %v5965
      %5967 = vmatmul.bf16.gmra.mxu0 %v5887
      %v5968 = vpop.f32.mrf.mxu0
      %v5969 = vadd.f32 0.0, %v5968
      %v5970 = vpop.f32.mrf.mxu0
      %v5971 = vadd.f32 0.0, %v5970
      %5972 = vmatmul.bf16.gmra.mxu0 %v5890
      %v5973 = vpop.f32.mrf.mxu0
      %v5974 = vadd.f32 0.0, %v5973
      %v5975 = vpop.f32.mrf.mxu0
      %v5976 = vadd.f32 0.0, %v5975
      %5977 = vmatmul.bf16.gmra.mxu0 %v5893
      %v5978 = vpop.f32.mrf.mxu0
      %v5979 = vadd.f32 0.0, %v5978
      %v5980 = vpop.f32.mrf.mxu0
      %v5981 = vadd.f32 0.0, %v5980
      %5982 = vmatmul.bf16.gmra.mxu0 %v5896
      %v5983 = vpop.f32.mrf.mxu0
      %v5984 = vadd.f32 0.0, %v5983
      %v5985 = vpop.f32.mrf.mxu0
      %v5986 = vadd.f32 0.0, %v5985
      %5987 = vmatmul.bf16.gmra.mxu0 %v5899
      %v5988 = vpop.f32.mrf.mxu0
      %v5989 = vadd.f32 0.0, %v5988
      %v5990 = vpop.f32.mrf.mxu0
      %v5991 = vadd.f32 0.0, %v5990
      %5992 = vmatmul.bf16.gmra.mxu0 %v5902
      %v5993 = vpop.f32.mrf.mxu0
      %v5994 = vadd.f32 0.0, %v5993
      %v5995 = vpop.f32.mrf.mxu0
      %v5996 = vadd.f32 0.0, %v5995
      %5997 = vmatmul.bf16.gmra.mxu0 %v5905
      %v5998 = vpop.f32.mrf.mxu0
      %v5999 = vadd.f32 0.0, %v5998
      %v6000 = vpop.f32.mrf.mxu0
      %v6001 = vadd.f32 0.0, %v6000
      %6002 = vmatmul.bf16.gmra.mxu0 %v5908
      %v6003 = vpop.f32.mrf.mxu0
      %v6004 = vadd.f32 0.0, %v6003
      %v6005 = vpop.f32.mrf.mxu0
      %v6006 = vadd.f32 0.0, %v6005
      %6007 = vmatmul.bf16.gmra.mxu0 %v5911
      %v6008 = vpop.f32.mrf.mxu0
      %v6009 = vadd.f32 0.0, %v6008
      %v6010 = vpop.f32.mrf.mxu0
      %v6011 = vadd.f32 0.0, %v6010
      %6012 = vmatmul.bf16.gmra.mxu0 %v5914
      %v6013 = vpop.f32.mrf.mxu0
      %v6014 = vadd.f32 0.0, %v6013
      %v6015 = vpop.f32.mrf.mxu0
      %v6016 = vadd.f32 0.0, %v6015
      %6017 = vdwg.mxu0
      %v6018 = vadd.f32 %v5472, %v5929
      %v6019 = vadd.f32 %v5474, %v5931
      %v6020 = vadd.f32 %v5477, %v5934
      %v6021 = vadd.f32 %v5479, %v5936
      %v6022 = vadd.f32 %v5482, %v5939
      %v6023 = vadd.f32 %v5484, %v5941
      %v6024 = vadd.f32 %v5487, %v5944
      %v6025 = vadd.f32 %v5489, %v5946
      %v6026 = vadd.f32 %v5492, %v5949
      %v6027 = vadd.f32 %v5494, %v5951
      %v6028 = vadd.f32 %v5497, %v5954
      %v6029 = vadd.f32 %v5499, %v5956
      %v6030 = vadd.f32 %v5502, %v5959
      %v6031 = vadd.f32 %v5504, %v5961
      %v6032 = vadd.f32 %v5507, %v5964
      %v6033 = vadd.f32 %v5509, %v5966
      %v6034 = vadd.f32 %v5512, %v5969
      %v6035 = vadd.f32 %v5514, %v5971
      %v6036 = vadd.f32 %v5517, %v5974
      %v6037 = vadd.f32 %v5519, %v5976
      %v6038 = vadd.f32 %v5522, %v5979
      %v6039 = vadd.f32 %v5524, %v5981
      %v6040 = vadd.f32 %v5527, %v5984
      %v6041 = vadd.f32 %v5529, %v5986
      %v6042 = vadd.f32 %v5532, %v5989
      %v6043 = vadd.f32 %v5534, %v5991
      %v6044 = vadd.f32 %v5537, %v5994
      %v6045 = vadd.f32 %v5539, %v5996
      %v6046 = vadd.f32 %v5542, %v5999
      %v6047 = vadd.f32 %v5544, %v6001
      %v6048 = vadd.f32 %v5547, %v6004
      %v6049 = vadd.f32 %v5549, %v6006
      %v6050 = vadd.f32 %v5552, %v6009
      %v6051 = vadd.f32 %v5554, %v6011
      %v6052 = vadd.f32 %v5557, %v6014
      %v6053 = vadd.f32 %v5559, %v6016
      %v6054 = vsel %vm370, 1, 0
      %v6055 = vsel %vm371, 1, 0
      %v6056 = vsel %vm372, 1, 0
      %v6057 = vsel %vm373, 1, 0
      %v6058 = vsel %vm374, 1, 0
      %v6059 = vsel %vm375, 1, 0
      %v6060 = vsel %vm376, 1, 0
      %v6061 = vsel %vm377, 1, 0
      %v6062 = vsel %vm378, 1, 0
      %v6063 = vsel %vm379, 1, 0
      %v6064 = vsel %vm380, 1, 0
      %v6065 = vsel %vm381, 1, 0
      %v6066 = vsel %vm382, 1, 0
      %v6067 = vsel %vm383, 1, 0
      %v6068 = vsel %vm384, 1, 0
      %v6069 = vsel %vm385, 1, 0
      %v6070 = vsel %vm386, 1, 0
      %v6071 = vsel %vm387, 1, 0
      %v6072 = vsel %vm388, 1, 0
      %v6073 = vsel %vm389, 1, 0
      %v6074 = vsel %vm390, 1, 0
      %v6075 = vsel %vm391, 1, 0
      %v6076 = vsel %vm392, 1, 0
      %v6077 = vsel %vm393, 1, 0
      %v6078 = vsel %vm394, 1, 0
      %v6079 = vsel %vm395, 1, 0
      %v6080 = vsel %vm396, 1, 0
      %v6081 = vsel %vm397, 1, 0
      %v6082 = vsel %vm398, 1, 0
      %v6083 = vsel %vm399, 1, 0
      %v6084 = vsel %vm400, 1, 0
      %v6085 = vsel %vm401, 1, 0
      %v6086 = vsel %vm402, 1, 0
      %v6087 = vsel %vm403, 1, 0
      %v6088 = vsel %vm404, 1, 0
      %v6089 = vsel %vm405, 1, 0
      %6090 = vset.pattern.permute.xlu0 0
      %6091 = vperm.xlu0 %6090, %v6054
      %v6092 = vpop.permute.xlu0 %6091
      %6093 = vset.pattern.permute.xlu0 0
      %6094 = vperm.xlu0 %6093, %v6055
      %v6095 = vpop.permute.xlu0 %6094
      %6096 = vset.pattern.permute.xlu0 0
      %6097 = vperm.xlu0 %6096, %v6056
      %v6098 = vpop.permute.xlu0 %6097
      %6099 = vset.pattern.permute.xlu0 0
      %6100 = vperm.xlu0 %6099, %v6057
      %v6101 = vpop.permute.xlu0 %6100
      %6102 = vset.pattern.permute.xlu0 0
      %6103 = vperm.xlu0 %6102, %v6058
      %v6104 = vpop.permute.xlu0 %6103
      %6105 = vset.pattern.permute.xlu0 0
      %6106 = vperm.xlu0 %6105, %v6059
      %v6107 = vpop.permute.xlu0 %6106
      %6108 = vset.pattern.permute.xlu0 0
      %6109 = vperm.xlu0 %6108, %v6060
      %v6110 = vpop.permute.xlu0 %6109
      %6111 = vset.pattern.permute.xlu0 0
      %6112 = vperm.xlu0 %6111, %v6061
      %v6113 = vpop.permute.xlu0 %6112
      %6114 = vset.pattern.permute.xlu0 0
      %6115 = vperm.xlu0 %6114, %v6062
      %v6116 = vpop.permute.xlu0 %6115
      %6117 = vset.pattern.permute.xlu0 0
      %6118 = vperm.xlu0 %6117, %v6063
      %v6119 = vpop.permute.xlu0 %6118
      %6120 = vset.pattern.permute.xlu0 0
      %6121 = vperm.xlu0 %6120, %v6064
      %v6122 = vpop.permute.xlu0 %6121
      %6123 = vset.pattern.permute.xlu0 0
      %6124 = vperm.xlu0 %6123, %v6065
      %v6125 = vpop.permute.xlu0 %6124
      %6126 = vset.pattern.permute.xlu0 0
      %6127 = vperm.xlu0 %6126, %v6066
      %v6128 = vpop.permute.xlu0 %6127
      %6129 = vset.pattern.permute.xlu0 0
      %6130 = vperm.xlu0 %6129, %v6067
      %v6131 = vpop.permute.xlu0 %6130
      %6132 = vset.pattern.permute.xlu0 0
      %6133 = vperm.xlu0 %6132, %v6068
      %v6134 = vpop.permute.xlu0 %6133
      %6135 = vset.pattern.permute.xlu0 0
      %6136 = vperm.xlu0 %6135, %v6069
      %v6137 = vpop.permute.xlu0 %6136
      %6138 = vset.pattern.permute.xlu0 0
      %6139 = vperm.xlu0 %6138, %v6070
      %v6140 = vpop.permute.xlu0 %6139
      %6141 = vset.pattern.permute.xlu0 0
      %6142 = vperm.xlu0 %6141, %v6071
      %v6143 = vpop.permute.xlu0 %6142
      %6144 = vset.pattern.permute.xlu0 0
      %6145 = vperm.xlu0 %6144, %v6072
      %v6146 = vpop.permute.xlu0 %6145
      %6147 = vset.pattern.permute.xlu0 0
      %6148 = vperm.xlu0 %6147, %v6073
      %v6149 = vpop.permute.xlu0 %6148
      %6150 = vset.pattern.permute.xlu0 0
      %6151 = vperm.xlu0 %6150, %v6074
      %v6152 = vpop.permute.xlu0 %6151
      %6153 = vset.pattern.permute.xlu0 0
      %6154 = vperm.xlu0 %6153, %v6075
      %v6155 = vpop.permute.xlu0 %6154
      %6156 = vset.pattern.permute.xlu0 0
      %6157 = vperm.xlu0 %6156, %v6076
      %v6158 = vpop.permute.xlu0 %6157
      %6159 = vset.pattern.permute.xlu0 0
      %6160 = vperm.xlu0 %6159, %v6077
      %v6161 = vpop.permute.xlu0 %6160
      %6162 = vset.pattern.permute.xlu0 0
      %6163 = vperm.xlu0 %6162, %v6078
      %v6164 = vpop.permute.xlu0 %6163
      %6165 = vset.pattern.permute.xlu0 0
      %6166 = vperm.xlu0 %6165, %v6079
      %v6167 = vpop.permute.xlu0 %6166
      %6168 = vset.pattern.permute.xlu0 0
      %6169 = vperm.xlu0 %6168, %v6080
      %v6170 = vpop.permute.xlu0 %6169
      %6171 = vset.pattern.permute.xlu0 0
      %6172 = vperm.xlu0 %6171, %v6081
      %v6173 = vpop.permute.xlu0 %6172
      %6174 = vset.pattern.permute.xlu0 0
      %6175 = vperm.xlu0 %6174, %v6082
      %v6176 = vpop.permute.xlu0 %6175
      %6177 = vset.pattern.permute.xlu0 0
      %6178 = vperm.xlu0 %6177, %v6083
      %v6179 = vpop.permute.xlu0 %6178
      %6180 = vset.pattern.permute.xlu0 0
      %6181 = vperm.xlu0 %6180, %v6084
      %v6182 = vpop.permute.xlu0 %6181
      %6183 = vset.pattern.permute.xlu0 0
      %6184 = vperm.xlu0 %6183, %v6085
      %v6185 = vpop.permute.xlu0 %6184
      %6186 = vset.pattern.permute.xlu0 0
      %6187 = vperm.xlu0 %6186, %v6086
      %v6188 = vpop.permute.xlu0 %6187
      %6189 = vset.pattern.permute.xlu0 0
      %6190 = vperm.xlu0 %6189, %v6087
      %v6191 = vpop.permute.xlu0 %6190
      %6192 = vset.pattern.permute.xlu0 0
      %6193 = vperm.xlu0 %6192, %v6088
      %v6194 = vpop.permute.xlu0 %6193
      %6195 = vset.pattern.permute.xlu0 0
      %6196 = vperm.xlu0 %6195, %v6089
      %v6197 = vpop.permute.xlu0 %6196
      %vm6198 = vcmp.eq.s32.totalorder %v6092, 1
      %vm6199 = vcmp.eq.s32.totalorder %v6095, 1
      %vm6200 = vcmp.eq.s32.totalorder %v6098, 1
      %vm6201 = vcmp.eq.s32.totalorder %v6101, 1
      %vm6202 = vcmp.eq.s32.totalorder %v6104, 1
      %vm6203 = vcmp.eq.s32.totalorder %v6107, 1
      %vm6204 = vcmp.eq.s32.totalorder %v6110, 1
      %vm6205 = vcmp.eq.s32.totalorder %v6113, 1
      %vm6206 = vcmp.eq.s32.totalorder %v6116, 1
      %vm6207 = vcmp.eq.s32.totalorder %v6119, 1
      %vm6208 = vcmp.eq.s32.totalorder %v6122, 1
      %vm6209 = vcmp.eq.s32.totalorder %v6125, 1
      %vm6210 = vcmp.eq.s32.totalorder %v6128, 1
      %vm6211 = vcmp.eq.s32.totalorder %v6131, 1
      %vm6212 = vcmp.eq.s32.totalorder %v6134, 1
      %vm6213 = vcmp.eq.s32.totalorder %v6137, 1
      %vm6214 = vcmp.eq.s32.totalorder %v6140, 1
      %vm6215 = vcmp.eq.s32.totalorder %v6143, 1
      %vm6216 = vcmp.eq.s32.totalorder %v6146, 1
      %vm6217 = vcmp.eq.s32.totalorder %v6149, 1
      %vm6218 = vcmp.eq.s32.totalorder %v6152, 1
      %vm6219 = vcmp.eq.s32.totalorder %v6155, 1
      %vm6220 = vcmp.eq.s32.totalorder %v6158, 1
      %vm6221 = vcmp.eq.s32.totalorder %v6161, 1
      %vm6222 = vcmp.eq.s32.totalorder %v6164, 1
      %vm6223 = vcmp.eq.s32.totalorder %v6167, 1
      %vm6224 = vcmp.eq.s32.totalorder %v6170, 1
      %vm6225 = vcmp.eq.s32.totalorder %v6173, 1
      %vm6226 = vcmp.eq.s32.totalorder %v6176, 1
      %vm6227 = vcmp.eq.s32.totalorder %v6179, 1
      %vm6228 = vcmp.eq.s32.totalorder %v6182, 1
      %vm6229 = vcmp.eq.s32.totalorder %v6185, 1
      %vm6230 = vcmp.eq.s32.totalorder %v6188, 1
      %vm6231 = vcmp.eq.s32.totalorder %v6191, 1
      %vm6232 = vcmp.eq.s32.totalorder %v6194, 1
      %vm6233 = vcmp.eq.s32.totalorder %v6197, 1
      %v6234 = vsel %vm6198, %v6018, -inf
      %v6235 = vsel %vm6199, %v6019, -inf
      %v6236 = vsel %vm6200, %v6020, -inf
      %v6237 = vsel %vm6201, %v6021, -inf
      %v6238 = vsel %vm6202, %v6022, -inf
      %v6239 = vsel %vm6203, %v6023, -inf
      %v6240 = vsel %vm6204, %v6024, -inf
      %v6241 = vsel %vm6205, %v6025, -inf
      %v6242 = vsel %vm6206, %v6026, -inf
      %v6243 = vsel %vm6207, %v6027, -inf
      %v6244 = vsel %vm6208, %v6028, -inf
      %v6245 = vsel %vm6209, %v6029, -inf
      %v6246 = vsel %vm6210, %v6030, -inf
      %v6247 = vsel %vm6211, %v6031, -inf
      %v6248 = vsel %vm6212, %v6032, -inf
      %v6249 = vsel %vm6213, %v6033, -inf
      %v6250 = vsel %vm6214, %v6034, -inf
      %v6251 = vsel %vm6215, %v6035, -inf
      %v6252 = vsel %vm6216, %v6036, -inf
      %v6253 = vsel %vm6217, %v6037, -inf
      %v6254 = vsel %vm6218, %v6038, -inf
      %v6255 = vsel %vm6219, %v6039, -inf
      %v6256 = vsel %vm6220, %v6040, -inf
      %v6257 = vsel %vm6221, %v6041, -inf
      %v6258 = vsel %vm6222, %v6042, -inf
      %v6259 = vsel %vm6223, %v6043, -inf
      %v6260 = vsel %vm6224, %v6044, -inf
      %v6261 = vsel %vm6225, %v6045, -inf
      %v6262 = vsel %vm6226, %v6046, -inf
      %v6263 = vsel %vm6227, %v6047, -inf
      %v6264 = vsel %vm6228, %v6048, -inf
      %v6265 = vsel %vm6229, %v6049, -inf
      %v6266 = vsel %vm6230, %v6050, -inf
      %v6267 = vsel %vm6231, %v6051, -inf
      %v6268 = vsel %vm6232, %v6052, -inf
      %v6269 = vsel %vm6233, %v6053, -inf
      %vm6306 = vcmask 1042432
      %v6307 = vrot.slane %v6234, 5
      %v6308 = vrot.slane %v6235, 5
      %v6309 = vsel %vm6306, %v6307, %v6308
      %v6310 = vrot.slane %v6236, 5
      %v6311 = vsel %vm6306, %v6308, %v6310
      %v6312 = vrot.slane %v6237, 5
      %v6313 = vsel %vm6306, %v6310, %v6312
      %v6314 = vrot.slane %v6238, 5
      %v6315 = vsel %vm6306, %v6312, %v6314
      %v6316 = vrot.slane %v6239, 5
      %v6317 = vsel %vm6306, %v6314, %v6316
      %v6318 = vrot.slane %v6240, 5
      %v6319 = vsel %vm6306, %v6316, %v6318
      %v6320 = vrot.slane %v6241, 5
      %v6321 = vsel %vm6306, %v6318, %v6320
      %v6322 = vrot.slane %v6242, 5
      %v6323 = vsel %vm6306, %v6320, %v6322
      %v6324 = vrot.slane %v6243, 5
      %v6325 = vsel %vm6306, %v6322, %v6324
      %v6326 = vrot.slane %v6244, 5
      %v6327 = vsel %vm6306, %v6324, %v6326
      %v6328 = vrot.slane %v6245, 5
      %v6329 = vsel %vm6306, %v6326, %v6328
      %v6330 = vrot.slane %v6246, 5
      %v6331 = vsel %vm6306, %v6328, %v6330
      %v6332 = vrot.slane %v6247, 5
      %v6333 = vsel %vm6306, %v6330, %v6332
      %v6334 = vrot.slane %v6248, 5
      %v6335 = vsel %vm6306, %v6332, %v6334
      %v6336 = vrot.slane %v6249, 5
      %v6337 = vsel %vm6306, %v6334, %v6336
      %v6338 = vrot.slane %v6250, 5
      %v6339 = vsel %vm6306, %v6336, %v6338
      %v6340 = vrot.slane %v6251, 5
      %v6341 = vsel %vm6306, %v6338, %v6340
      %v6342 = vrot.slane %v6252, 5
      %v6343 = vsel %vm6306, %v6340, %v6342
      %v6344 = vrot.slane %v6253, 5
      %v6345 = vsel %vm6306, %v6342, %v6344
      %v6346 = vrot.slane %v6254, 5
      %v6347 = vsel %vm6306, %v6344, %v6346
      %v6348 = vrot.slane %v6255, 5
      %v6349 = vsel %vm6306, %v6346, %v6348
      %v6350 = vrot.slane %v6256, 5
      %v6351 = vsel %vm6306, %v6348, %v6350
      %v6352 = vrot.slane %v6257, 5
      %v6353 = vsel %vm6306, %v6350, %v6352
      %v6354 = vrot.slane %v6258, 5
      %v6355 = vsel %vm6306, %v6352, %v6354
      %v6356 = vrot.slane %v6259, 5
      %v6357 = vsel %vm6306, %v6354, %v6356
      %v6358 = vrot.slane %v6260, 5
      %v6359 = vsel %vm6306, %v6356, %v6358
      %v6360 = vrot.slane %v6261, 5
      %v6361 = vsel %vm6306, %v6358, %v6360
      %v6362 = vrot.slane %v6262, 5
      %v6363 = vsel %vm6306, %v6360, %v6362
      %v6364 = vrot.slane %v6263, 5
      %v6365 = vsel %vm6306, %v6362, %v6364
      %v6366 = vrot.slane %v6264, 5
      %v6367 = vsel %vm6306, %v6364, %v6366
      %v6368 = vrot.slane %v6265, 5
      %v6369 = vsel %vm6306, %v6366, %v6368
      %v6370 = vrot.slane %v6266, 5
      %v6371 = vsel %vm6306, %v6368, %v6370
      %v6372 = vrot.slane %v6267, 5
      %v6373 = vsel %vm6306, %v6370, %v6372
      %v6374 = vrot.slane %v6268, 5
      %v6375 = vsel %vm6306, %v6372, %v6374
      %v6376 = vrot.slane %v6269, 5
      %v6377 = vsel %vm6306, %v6374, %v6376
      %v6415 = vsel %vm6306, -inf, %v6307
      %v6416 = vsel %vm6306, %v6376, -inf
      %v6420 = vrot.slane -inf, 2
      %v6421 = vrot.slane -inf, 4
      %v6422 = vrot.slane -inf, 6
      %v6423 = vrot.slane %v6415, 2
      %v6424 = vrot.slane %v6415, 4
      %v6425 = vrot.slane %v6415, 6
      %v6426 = vrot.slane %v6309, 2
      %v6427 = vrot.slane %v6309, 4
      %v6428 = vrot.slane %v6309, 6
      %v6429 = vrot.slane %v6311, 2
      %v6430 = vrot.slane %v6311, 4
      %v6431 = vrot.slane %v6311, 6
      %v6432 = vrot.slane %v6313, 2
      %v6433 = vrot.slane %v6313, 4
      %v6434 = vrot.slane %v6313, 6
      %v6435 = vrot.slane %v6315, 2
      %v6436 = vrot.slane %v6315, 4
      %v6437 = vrot.slane %v6315, 6
      %v6438 = vrot.slane %v6317, 2
      %v6439 = vrot.slane %v6317, 4
      %v6440 = vrot.slane %v6317, 6
      %v6441 = vrot.slane %v6319, 2
      %v6442 = vrot.slane %v6319, 4
      %v6443 = vrot.slane %v6319, 6
      %v6444 = vrot.slane %v6321, 2
      %v6445 = vrot.slane %v6321, 4
      %v6446 = vrot.slane %v6321, 6
      %v6447 = vrot.slane %v6323, 2
      %v6448 = vrot.slane %v6323, 4
      %v6449 = vrot.slane %v6323, 6
      %v6450 = vrot.slane %v6325, 2
      %v6451 = vrot.slane %v6325, 4
      %v6452 = vrot.slane %v6325, 6
      %v6453 = vrot.slane %v6327, 2
      %v6454 = vrot.slane %v6327, 4
      %v6455 = vrot.slane %v6327, 6
      %v6456 = vrot.slane %v6329, 2
      %v6457 = vrot.slane %v6329, 4
      %v6458 = vrot.slane %v6329, 6
      %v6459 = vrot.slane %v6331, 2
      %v6460 = vrot.slane %v6331, 4
      %v6461 = vrot.slane %v6331, 6
      %v6462 = vrot.slane %v6333, 2
      %v6463 = vrot.slane %v6333, 4
      %v6464 = vrot.slane %v6333, 6
      %v6465 = vrot.slane %v6335, 2
      %v6466 = vrot.slane %v6335, 4
      %v6467 = vrot.slane %v6335, 6
      %v6468 = vrot.slane %v6337, 2
      %v6469 = vrot.slane %v6337, 4
      %v6470 = vrot.slane %v6337, 6
      %v6471 = vrot.slane %v6339, 2
      %v6472 = vrot.slane %v6339, 4
      %v6473 = vrot.slane %v6339, 6
      %v6474 = vrot.slane %v6341, 2
      %v6475 = vrot.slane %v6341, 4
      %v6476 = vrot.slane %v6341, 6
      %v6477 = vrot.slane %v6343, 2
      %v6478 = vrot.slane %v6343, 4
      %v6479 = vrot.slane %v6343, 6
      %v6480 = vrot.slane %v6345, 2
      %v6481 = vrot.slane %v6345, 4
      %v6482 = vrot.slane %v6345, 6
      %v6483 = vrot.slane %v6347, 2
      %v6484 = vrot.slane %v6347, 4
      %v6485 = vrot.slane %v6347, 6
      %v6486 = vrot.slane %v6349, 2
      %v6487 = vrot.slane %v6349, 4
      %v6488 = vrot.slane %v6349, 6
      %v6489 = vrot.slane %v6351, 2
      %v6490 = vrot.slane %v6351, 4
      %v6491 = vrot.slane %v6351, 6
      %v6492 = vrot.slane %v6353, 2
      %v6493 = vrot.slane %v6353, 4
      %v6494 = vrot.slane %v6353, 6
      %v6495 = vrot.slane %v6355, 2
      %v6496 = vrot.slane %v6355, 4
      %v6497 = vrot.slane %v6355, 6
      %v6498 = vrot.slane %v6357, 2
      %v6499 = vrot.slane %v6357, 4
      %v6500 = vrot.slane %v6357, 6
      %v6501 = vrot.slane %v6359, 2
      %v6502 = vrot.slane %v6359, 4
      %v6503 = vrot.slane %v6359, 6
      %v6504 = vrot.slane %v6361, 2
      %v6505 = vrot.slane %v6361, 4
      %v6506 = vrot.slane %v6361, 6
      %v6507 = vrot.slane %v6363, 2
      %v6508 = vrot.slane %v6363, 4
      %v6509 = vrot.slane %v6363, 6
      %v6510 = vrot.slane %v6365, 2
      %v6511 = vrot.slane %v6365, 4
      %v6512 = vrot.slane %v6365, 6
      %v6513 = vrot.slane %v6367, 2
      %v6514 = vrot.slane %v6367, 4
      %v6515 = vrot.slane %v6367, 6
      %v6516 = vrot.slane %v6369, 2
      %v6517 = vrot.slane %v6369, 4
      %v6518 = vrot.slane %v6369, 6
      %v6519 = vrot.slane %v6371, 2
      %v6520 = vrot.slane %v6371, 4
      %v6521 = vrot.slane %v6371, 6
      %v6522 = vrot.slane %v6373, 2
      %v6523 = vrot.slane %v6373, 4
      %v6524 = vrot.slane %v6373, 6
      %v6525 = vrot.slane %v6375, 2
      %v6526 = vrot.slane %v6375, 4
      %v6527 = vrot.slane %v6375, 6
      %v6528 = vrot.slane %v6377, 2
      %v6529 = vrot.slane %v6377, 4
      %v6530 = vrot.slane %v6377, 6
      %v6531 = vrot.slane %v6416, 2
      %v6532 = vrot.slane %v6416, 4
      %v6533 = vrot.slane %v6416, 6
      %v6648 = vmax.f32 %v6420, %v6424
      %v6649 = vmax.f32 %v6421, %v6425
      %v6650 = vmax.f32 %v6422, %v6309
      %v6651 = vmax.f32 %v6420, %v6427
      %v6652 = vmax.f32 %v6421, %v6428
      %v6653 = vmax.f32 %v6422, %v6311
      %v6654 = vmax.f32 %v6415, %v6429
      %v6655 = vmax.f32 %v6430, %v6437
      %v6656 = vmax.f32 %v6431, %v6317
      %v6657 = vmax.f32 %v6313, %v6438
      %v6658 = vmax.f32 %v6432, %v6439
      %v6659 = vmax.f32 %v6433, %v6440
      %v6660 = vmax.f32 %v6434, %v6319
      %v6661 = vmax.f32 %v6315, %v6441
      %v6662 = vmax.f32 %v6435, %v6442
      %v6663 = vmax.f32 %v6436, %v6443
      %v6664 = vmax.f32 %v6321, %v6450
      %v6665 = vmax.f32 %v6444, %v6451
      %v6666 = vmax.f32 %v6445, %v6452
      %v6667 = vmax.f32 %v6446, %v6327
      %v6668 = vmax.f32 %v6323, %v6453
      %v6669 = vmax.f32 %v6447, %v6454
      %v6670 = vmax.f32 %v6448, %v6455
      %v6671 = vmax.f32 %v6449, %v6329
      %v6672 = vmax.f32 %v6325, %v6456
      %v6673 = vmax.f32 %v6457, %v6464
      %v6674 = vmax.f32 %v6458, %v6335
      %v6675 = vmax.f32 %v6331, %v6465
      %v6676 = vmax.f32 %v6459, %v6466
      %v6677 = vmax.f32 %v6460, %v6467
      %v6678 = vmax.f32 %v6461, %v6337
      %v6679 = vmax.f32 %v6333, %v6468
      %v6680 = vmax.f32 %v6462, %v6469
      %v6681 = vmax.f32 %v6463, %v6470
      %v6682 = vmax.f32 %v6339, %v6477
      %v6683 = vmax.f32 %v6471, %v6478
      %v6684 = vmax.f32 %v6472, %v6479
      %v6685 = vmax.f32 %v6473, %v6345
      %v6686 = vmax.f32 %v6341, %v6480
      %v6687 = vmax.f32 %v6474, %v6481
      %v6688 = vmax.f32 %v6475, %v6482
      %v6689 = vmax.f32 %v6476, %v6347
      %v6690 = vmax.f32 %v6343, %v6483
      %v6691 = vmax.f32 %v6484, %v6491
      %v6692 = vmax.f32 %v6485, %v6353
      %v6693 = vmax.f32 %v6349, %v6492
      %v6694 = vmax.f32 %v6486, %v6493
      %v6695 = vmax.f32 %v6487, %v6494
      %v6696 = vmax.f32 %v6488, %v6355
      %v6697 = vmax.f32 %v6351, %v6495
      %v6698 = vmax.f32 %v6489, %v6496
      %v6699 = vmax.f32 %v6490, %v6497
      %v6700 = vmax.f32 %v6357, %v6504
      %v6701 = vmax.f32 %v6498, %v6505
      %v6702 = vmax.f32 %v6499, %v6506
      %v6703 = vmax.f32 %v6500, %v6363
      %v6704 = vmax.f32 %v6359, %v6507
      %v6705 = vmax.f32 %v6501, %v6508
      %v6706 = vmax.f32 %v6502, %v6509
      %v6707 = vmax.f32 %v6503, %v6365
      %v6708 = vmax.f32 %v6361, %v6510
      %v6709 = vmax.f32 %v6511, %v6518
      %v6710 = vmax.f32 %v6512, %v6371
      %v6711 = vmax.f32 %v6367, %v6519
      %v6712 = vmax.f32 %v6513, %v6520
      %v6713 = vmax.f32 %v6514, %v6521
      %v6714 = vmax.f32 %v6515, %v6373
      %v6715 = vmax.f32 %v6369, %v6522
      %v6716 = vmax.f32 %v6516, %v6523
      %v6717 = vmax.f32 %v6517, %v6524
      %v6718 = vmax.f32 %v6375, %v6531
      %v6719 = vmax.f32 %v6525, %v6532
      %v6720 = vmax.f32 %v6526, %v6533
      %v6721 = vmax.f32 %v6377, %v6420
      %v6722 = vmax.f32 %v6528, %v6421
      %v6723 = vmax.f32 %v6529, %v6422
      %v6724 = vmax.f32 %v6416, %v6420
      %v6802 = vrot.slane %v6423, 7
      %v6803 = vrot.slane %v6802, 2
      %v6804 = vrot.slane %v6648, 7
      %v6805 = vrot.slane %v6804, 2
      %v6806 = vrot.slane %v6649, 7
      %v6807 = vrot.slane %v6806, 2
      %v6808 = vrot.slane %v6650, 7
      %v6809 = vrot.slane %v6808, 2
      %v6810 = vrot.slane %v6426, 7
      %v6811 = vrot.slane %v6810, 2
      %v6812 = vrot.slane %v6651, 7
      %v6813 = vrot.slane %v6812, 2
      %v6814 = vrot.slane %v6652, 7
      %v6815 = vrot.slane %v6814, 2
      %v6816 = vrot.slane %v6653, 7
      %v6817 = vrot.slane %v6816, 2
      %v6818 = vrot.slane %v6654, 7
      %v6819 = vrot.slane %v6818, 2
      %v6820 = vrot.slane %v6655, 7
      %v6821 = vrot.slane %v6820, 2
      %v6822 = vrot.slane %v6656, 7
      %v6823 = vrot.slane %v6822, 2
      %v6824 = vrot.slane %v6657, 7
      %v6825 = vrot.slane %v6824, 2
      %v6826 = vrot.slane %v6658, 7
      %v6827 = vrot.slane %v6826, 2
      %v6828 = vrot.slane %v6659, 7
      %v6829 = vrot.slane %v6828, 2
      %v6830 = vrot.slane %v6660, 7
      %v6831 = vrot.slane %v6830, 2
      %v6832 = vrot.slane %v6661, 7
      %v6833 = vrot.slane %v6832, 2
      %v6834 = vrot.slane %v6662, 7
      %v6835 = vrot.slane %v6834, 2
      %v6836 = vrot.slane %v6663, 7
      %v6837 = vrot.slane %v6836, 2
      %v6838 = vrot.slane %v6664, 7
      %v6839 = vrot.slane %v6838, 2
      %v6840 = vrot.slane %v6665, 7
      %v6841 = vrot.slane %v6840, 2
      %v6842 = vrot.slane %v6666, 7
      %v6843 = vrot.slane %v6842, 2
      %v6844 = vrot.slane %v6667, 7
      %v6845 = vrot.slane %v6844, 2
      %v6846 = vrot.slane %v6668, 7
      %v6847 = vrot.slane %v6846, 2
      %v6848 = vrot.slane %v6669, 7
      %v6849 = vrot.slane %v6848, 2
      %v6850 = vrot.slane %v6670, 7
      %v6851 = vrot.slane %v6850, 2
      %v6852 = vrot.slane %v6671, 7
      %v6853 = vrot.slane %v6852, 2
      %v6854 = vrot.slane %v6672, 7
      %v6855 = vrot.slane %v6854, 2
      %v6856 = vrot.slane %v6673, 7
      %v6857 = vrot.slane %v6856, 2
      %v6858 = vrot.slane %v6674, 7
      %v6859 = vrot.slane %v6858, 2
      %v6860 = vrot.slane %v6675, 7
      %v6861 = vrot.slane %v6860, 2
      %v6862 = vrot.slane %v6676, 7
      %v6863 = vrot.slane %v6862, 2
      %v6864 = vrot.slane %v6677, 7
      %v6865 = vrot.slane %v6864, 2
      %v6866 = vrot.slane %v6678, 7
      %v6867 = vrot.slane %v6866, 2
      %v6868 = vrot.slane %v6679, 7
      %v6869 = vrot.slane %v6868, 2
      %v6870 = vrot.slane %v6680, 7
      %v6871 = vrot.slane %v6870, 2
      %v6872 = vrot.slane %v6681, 7
      %v6873 = vrot.slane %v6872, 2
      %v6874 = vrot.slane %v6682, 7
      %v6875 = vrot.slane %v6874, 2
      %v6876 = vrot.slane %v6683, 7
      %v6877 = vrot.slane %v6876, 2
      %v6878 = vrot.slane %v6684, 7
      %v6879 = vrot.slane %v6878, 2
      %v6880 = vrot.slane %v6685, 7
      %v6881 = vrot.slane %v6880, 2
      %v6882 = vrot.slane %v6686, 7
      %v6883 = vrot.slane %v6882, 2
      %v6884 = vrot.slane %v6687, 7
      %v6885 = vrot.slane %v6884, 2
      %v6886 = vrot.slane %v6688, 7
      %v6887 = vrot.slane %v6886, 2
      %v6888 = vrot.slane %v6689, 7
      %v6889 = vrot.slane %v6888, 2
      %v6890 = vrot.slane %v6690, 7
      %v6891 = vrot.slane %v6890, 2
      %v6892 = vrot.slane %v6691, 7
      %v6893 = vrot.slane %v6892, 2
      %v6894 = vrot.slane %v6692, 7
      %v6895 = vrot.slane %v6894, 2
      %v6896 = vrot.slane %v6693, 7
      %v6897 = vrot.slane %v6896, 2
      %v6898 = vrot.slane %v6694, 7
      %v6899 = vrot.slane %v6898, 2
      %v6900 = vrot.slane %v6695, 7
      %v6901 = vrot.slane %v6900, 2
      %v6902 = vrot.slane %v6696, 7
      %v6903 = vrot.slane %v6902, 2
      %v6904 = vrot.slane %v6697, 7
      %v6905 = vrot.slane %v6904, 2
      %v6906 = vrot.slane %v6698, 7
      %v6907 = vrot.slane %v6906, 2
      %v6908 = vrot.slane %v6699, 7
      %v6909 = vrot.slane %v6908, 2
      %v6910 = vrot.slane %v6700, 7
      %v6911 = vrot.slane %v6910, 2
      %v6912 = vrot.slane %v6701, 7
      %v6913 = vrot.slane %v6912, 2
      %v6914 = vrot.slane %v6702, 7
      %v6915 = vrot.slane %v6914, 2
      %v6916 = vrot.slane %v6703, 7
      %v6917 = vrot.slane %v6916, 2
      %v6918 = vrot.slane %v6704, 7
      %v6919 = vrot.slane %v6918, 2
      %v6920 = vrot.slane %v6705, 7
      %v6921 = vrot.slane %v6920, 2
      %v6922 = vrot.slane %v6706, 7
      %v6923 = vrot.slane %v6922, 2
      %v6924 = vrot.slane %v6707, 7
      %v6925 = vrot.slane %v6924, 2
      %v6926 = vrot.slane %v6708, 7
      %v6927 = vrot.slane %v6926, 2
      %v6928 = vrot.slane %v6709, 7
      %v6929 = vrot.slane %v6928, 2
      %v6930 = vrot.slane %v6710, 7
      %v6931 = vrot.slane %v6930, 2
      %v6932 = vrot.slane %v6711, 7
      %v6933 = vrot.slane %v6932, 2
      %v6934 = vrot.slane %v6712, 7
      %v6935 = vrot.slane %v6934, 2
      %v6936 = vrot.slane %v6713, 7
      %v6937 = vrot.slane %v6936, 2
      %v6938 = vrot.slane %v6714, 7
      %v6939 = vrot.slane %v6938, 2
      %v6940 = vrot.slane %v6715, 7
      %v6941 = vrot.slane %v6940, 2
      %v6942 = vrot.slane %v6716, 7
      %v6943 = vrot.slane %v6942, 2
      %v6944 = vrot.slane %v6717, 7
      %v6945 = vrot.slane %v6944, 2
      %v6946 = vrot.slane %v6718, 7
      %v6947 = vrot.slane %v6946, 2
      %v6948 = vrot.slane %v6719, 7
      %v6949 = vrot.slane %v6948, 2
      %v6950 = vrot.slane %v6720, 7
      %v6951 = vrot.slane %v6950, 2
      %v6952 = vrot.slane %v6527, 7
      %v6953 = vrot.slane %v6952, 2
      %v6954 = vrot.slane %v6721, 7
      %v6955 = vrot.slane %v6954, 2
      %v6956 = vrot.slane %v6722, 7
      %v6957 = vrot.slane %v6956, 2
      %v6958 = vrot.slane %v6723, 7
      %v6959 = vrot.slane %v6958, 2
      %v6960 = vrot.slane %v6530, 7
      %v6961 = vrot.slane %v6960, 2
      %v6962 = vrot.slane %v6724, 7
      %v6963 = vrot.slane %v6962, 2
      %v7045 = vmax.f32 %v6423, %v6803
      %v7046 = vmax.f32 %v6648, %v6805
      %v7047 = vmax.f32 %v6649, %v6807
      %v7048 = vmax.f32 %v6650, %v6809
      %v7049 = vmax.f32 %v6426, %v6811
      %v7050 = vmax.f32 %v6651, %v6813
      %v7051 = vmax.f32 %v6652, %v6815
      %v7052 = vmax.f32 %v6653, %v6817
      %v7053 = vmax.f32 %v6654, %v6819
      %v7054 = vmax.f32 %v6655, %v6821
      %v7055 = vmax.f32 %v6656, %v6823
      %v7056 = vmax.f32 %v6657, %v6825
      %v7057 = vmax.f32 %v6658, %v6827
      %v7058 = vmax.f32 %v6659, %v6829
      %v7059 = vmax.f32 %v6660, %v6831
      %v7060 = vmax.f32 %v6661, %v6833
      %v7061 = vmax.f32 %v6662, %v6835
      %v7062 = vmax.f32 %v6663, %v6837
      %v7063 = vmax.f32 %v6664, %v6839
      %v7064 = vmax.f32 %v6665, %v6841
      %v7065 = vmax.f32 %v6666, %v6843
      %v7066 = vmax.f32 %v6667, %v6845
      %v7067 = vmax.f32 %v6668, %v6847
      %v7068 = vmax.f32 %v6669, %v6849
      %v7069 = vmax.f32 %v6670, %v6851
      %v7070 = vmax.f32 %v6671, %v6853
      %v7071 = vmax.f32 %v6672, %v6855
      %v7072 = vmax.f32 %v6673, %v6857
      %v7073 = vmax.f32 %v6674, %v6859
      %v7074 = vmax.f32 %v6675, %v6861
      %v7075 = vmax.f32 %v6676, %v6863
      %v7076 = vmax.f32 %v6677, %v6865
      %v7077 = vmax.f32 %v6678, %v6867
      %v7078 = vmax.f32 %v6679, %v6869
      %v7079 = vmax.f32 %v6680, %v6871
      %v7080 = vmax.f32 %v6681, %v6873
      %v7081 = vmax.f32 %v6682, %v6875
      %v7082 = vmax.f32 %v6683, %v6877
      %v7083 = vmax.f32 %v6684, %v6879
      %v7084 = vmax.f32 %v6685, %v6881
      %v7085 = vmax.f32 %v6686, %v6883
      %v7086 = vmax.f32 %v6687, %v6885
      %v7087 = vmax.f32 %v6688, %v6887
      %v7088 = vmax.f32 %v6689, %v6889
      %v7089 = vmax.f32 %v6690, %v6891
      %v7090 = vmax.f32 %v6691, %v6893
      %v7091 = vmax.f32 %v6692, %v6895
      %v7092 = vmax.f32 %v6693, %v6897
      %v7093 = vmax.f32 %v6694, %v6899
      %v7094 = vmax.f32 %v6695, %v6901
      %v7095 = vmax.f32 %v6696, %v6903
      %v7096 = vmax.f32 %v6697, %v6905
      %v7097 = vmax.f32 %v6698, %v6907
      %v7098 = vmax.f32 %v6699, %v6909
      %v7099 = vmax.f32 %v6700, %v6911
      %v7100 = vmax.f32 %v6701, %v6913
      %v7101 = vmax.f32 %v6702, %v6915
      %v7102 = vmax.f32 %v6703, %v6917
      %v7103 = vmax.f32 %v6704, %v6919
      %v7104 = vmax.f32 %v6705, %v6921
      %v7105 = vmax.f32 %v6706, %v6923
      %v7106 = vmax.f32 %v6707, %v6925
      %v7107 = vmax.f32 %v6708, %v6927
      %v7108 = vmax.f32 %v6709, %v6929
      %v7109 = vmax.f32 %v6710, %v6931
      %v7110 = vmax.f32 %v6711, %v6933
      %v7111 = vmax.f32 %v6712, %v6935
      %v7112 = vmax.f32 %v6713, %v6937
      %v7113 = vmax.f32 %v6714, %v6939
      %v7114 = vmax.f32 %v6715, %v6941
      %v7115 = vmax.f32 %v6716, %v6943
      %v7116 = vmax.f32 %v6717, %v6945
      %v7117 = vmax.f32 %v6718, %v6947
      %v7118 = vmax.f32 %v6719, %v6949
      %v7119 = vmax.f32 %v6720, %v6951
      %v7120 = vmax.f32 %v6527, %v6953
      %v7121 = vmax.f32 %v6721, %v6955
      %v7122 = vmax.f32 %v6722, %v6957
      %v7123 = vmax.f32 %v6723, %v6959
      %v7124 = vmax.f32 %v6530, %v6961
      %v7125 = vmax.f32 %v6724, %v6963
      %v7207 = vperm.slane %v7045, 0
      %v7208 = vperm.slane %v7046, 0
      %v7209 = vperm.slane %v7047, 0
      %v7210 = vperm.slane %v7048, 0
      %v7211 = vperm.slane %v7049, 0
      %v7212 = vperm.slane %v7050, 0
      %v7213 = vperm.slane %v7051, 0
      %v7214 = vperm.slane %v7052, 0
      %v7215 = vperm.slane %v7053, 0
      %v7216 = vperm.slane %v7054, 0
      %v7217 = vperm.slane %v7055, 0
      %v7218 = vperm.slane %v7056, 0
      %v7219 = vperm.slane %v7057, 0
      %v7220 = vperm.slane %v7058, 0
      %v7221 = vperm.slane %v7059, 0
      %v7222 = vperm.slane %v7060, 0
      %v7223 = vperm.slane %v7061, 0
      %v7224 = vperm.slane %v7062, 0
      %v7225 = vperm.slane %v7063, 0
      %v7226 = vperm.slane %v7064, 0
      %v7227 = vperm.slane %v7065, 0
      %v7228 = vperm.slane %v7066, 0
      %v7229 = vperm.slane %v7067, 0
      %v7230 = vperm.slane %v7068, 0
      %v7231 = vperm.slane %v7069, 0
      %v7232 = vperm.slane %v7070, 0
      %v7233 = vperm.slane %v7071, 0
      %v7234 = vperm.slane %v7072, 0
      %v7235 = vperm.slane %v7073, 0
      %v7236 = vperm.slane %v7074, 0
      %v7237 = vperm.slane %v7075, 0
      %v7238 = vperm.slane %v7076, 0
      %v7239 = vperm.slane %v7077, 0
      %v7240 = vperm.slane %v7078, 0
      %v7241 = vperm.slane %v7079, 0
      %v7242 = vperm.slane %v7080, 0
      %v7243 = vperm.slane %v7081, 0
      %v7244 = vperm.slane %v7082, 0
      %v7245 = vperm.slane %v7083, 0
      %v7246 = vperm.slane %v7084, 0
      %v7247 = vperm.slane %v7085, 0
      %v7248 = vperm.slane %v7086, 0
      %v7249 = vperm.slane %v7087, 0
      %v7250 = vperm.slane %v7088, 0
      %v7251 = vperm.slane %v7089, 0
      %v7252 = vperm.slane %v7090, 0
      %v7253 = vperm.slane %v7091, 0
      %v7254 = vperm.slane %v7092, 0
      %v7255 = vperm.slane %v7093, 0
      %v7256 = vperm.slane %v7094, 0
      %v7257 = vperm.slane %v7095, 0
      %v7258 = vperm.slane %v7096, 0
      %v7259 = vperm.slane %v7097, 0
      %v7260 = vperm.slane %v7098, 0
      %v7261 = vperm.slane %v7099, 0
      %v7262 = vperm.slane %v7100, 0
      %v7263 = vperm.slane %v7101, 0
      %v7264 = vperm.slane %v7102, 0
      %v7265 = vperm.slane %v7103, 0
      %v7266 = vperm.slane %v7104, 0
      %v7267 = vperm.slane %v7105, 0
      %v7268 = vperm.slane %v7106, 0
      %v7269 = vperm.slane %v7107, 0
      %v7270 = vperm.slane %v7108, 0
      %v7271 = vperm.slane %v7109, 0
      %v7272 = vperm.slane %v7110, 0
      %v7273 = vperm.slane %v7111, 0
      %v7274 = vperm.slane %v7112, 0
      %v7275 = vperm.slane %v7113, 0
      %v7276 = vperm.slane %v7114, 0
      %v7277 = vperm.slane %v7115, 0
      %v7278 = vperm.slane %v7116, 0
      %v7279 = vperm.slane %v7117, 0
      %v7280 = vperm.slane %v7118, 0
      %v7281 = vperm.slane %v7119, 0
      %v7282 = vperm.slane %v7120, 0
      %v7283 = vperm.slane %v7121, 0
      %v7284 = vperm.slane %v7122, 0
      %v7285 = vperm.slane %v7123, 0
      %v7286 = vperm.slane %v7124, 0
      %v7287 = vperm.slane %v7125, 0
      %vm7288 = vcmask 1041409
      %v7289 = vsel %vm7288, %v7208, %v7207
      %vm7290 = vcmask 1042434
      %v7291 = vsel %vm7290, %v7209, %v7289
      %vm7292 = vcmask 1043459
      %v7293 = vsel %vm7292, %v7210, %v7291
      %vm7294 = vcmask 1044484
      %v7295 = vsel %vm7294, %v7211, %v7293
      %vm7296 = vcmask 1045509
      %v7297 = vsel %vm7296, %v7212, %v7295
      %vm7298 = vcmask 1046534
      %v7299 = vsel %vm7298, %v7213, %v7297
      %vm7300 = vcmask 1047559
      %v7301 = vsel %vm7300, %v7214, %v7299
      %v7302 = vsel %vm7288, %v7217, %v7216
      %v7303 = vsel %vm7290, %v7218, %v7302
      %v7304 = vsel %vm7292, %v7219, %v7303
      %v7305 = vsel %vm7294, %v7220, %v7304
      %v7306 = vsel %vm7296, %v7221, %v7305
      %v7307 = vsel %vm7298, %v7222, %v7306
      %v7308 = vsel %vm7300, %v7223, %v7307
      %v7309 = vsel %vm7288, %v7226, %v7225
      %v7310 = vsel %vm7290, %v7227, %v7309
      %v7311 = vsel %vm7292, %v7228, %v7310
      %v7312 = vsel %vm7294, %v7229, %v7311
      %v7313 = vsel %vm7296, %v7230, %v7312
      %v7314 = vsel %vm7298, %v7231, %v7313
      %v7315 = vsel %vm7300, %v7232, %v7314
      %v7316 = vsel %vm7288, %v7235, %v7234
      %v7317 = vsel %vm7290, %v7236, %v7316
      %v7318 = vsel %vm7292, %v7237, %v7317
      %v7319 = vsel %vm7294, %v7238, %v7318
      %v7320 = vsel %vm7296, %v7239, %v7319
      %v7321 = vsel %vm7298, %v7240, %v7320
      %v7322 = vsel %vm7300, %v7241, %v7321
      %v7323 = vsel %vm7288, %v7244, %v7243
      %v7324 = vsel %vm7290, %v7245, %v7323
      %v7325 = vsel %vm7292, %v7246, %v7324
      %v7326 = vsel %vm7294, %v7247, %v7325
      %v7327 = vsel %vm7296, %v7248, %v7326
      %v7328 = vsel %vm7298, %v7249, %v7327
      %v7329 = vsel %vm7300, %v7250, %v7328
      %v7330 = vsel %vm7288, %v7253, %v7252
      %v7331 = vsel %vm7290, %v7254, %v7330
      %v7332 = vsel %vm7292, %v7255, %v7331
      %v7333 = vsel %vm7294, %v7256, %v7332
      %v7334 = vsel %vm7296, %v7257, %v7333
      %v7335 = vsel %vm7298, %v7258, %v7334
      %v7336 = vsel %vm7300, %v7259, %v7335
      %v7337 = vsel %vm7288, %v7262, %v7261
      %v7338 = vsel %vm7290, %v7263, %v7337
      %v7339 = vsel %vm7292, %v7264, %v7338
      %v7340 = vsel %vm7294, %v7265, %v7339
      %v7341 = vsel %vm7296, %v7266, %v7340
      %v7342 = vsel %vm7298, %v7267, %v7341
      %v7343 = vsel %vm7300, %v7268, %v7342
      %v7344 = vsel %vm7288, %v7271, %v7270
      %v7345 = vsel %vm7290, %v7272, %v7344
      %v7346 = vsel %vm7292, %v7273, %v7345
      %v7347 = vsel %vm7294, %v7274, %v7346
      %v7348 = vsel %vm7296, %v7275, %v7347
      %v7349 = vsel %vm7298, %v7276, %v7348
      %v7350 = vsel %vm7300, %v7277, %v7349
      %v7351 = vsel %vm7288, %v7280, %v7279
      %v7352 = vsel %vm7290, %v7281, %v7351
      %v7353 = vsel %vm7292, %v7282, %v7352
      %v7354 = vsel %vm7294, %v7283, %v7353
      %v7355 = vsel %vm7296, %v7284, %v7354
      %v7356 = vsel %vm7298, %v7285, %v7355
      %v7357 = vsel %vm7300, %v7286, %v7356
      %7376 = vst.msk [vmem:[%s332] sm:$0xff] %vm1392, %v7301
      %vm7377 = vcmask 57344
      %7378 = vst.msk [vmem:[%s332 + $0x8] sm:$0x1] %vm7377, %v7215
      %7379 = vst.msk [vmem:[%s332 + $0x10] sm:$0xff] %vm1392, %v7308
      %7380 = vst.msk [vmem:[%s332 + $0x18] sm:$0x1] %vm7377, %v7224
      %7381 = vst.msk [vmem:[%s332 + $0x20] sm:$0xff] %vm1392, %v7315
      %7382 = vst.msk [vmem:[%s332 + $0x28] sm:$0x1] %vm7377, %v7233
      %7383 = vst.msk [vmem:[%s332 + $0x30] sm:$0xff] %vm1392, %v7322
      %7384 = vst.msk [vmem:[%s332 + $0x38] sm:$0x1] %vm7377, %v7242
      %7385 = vst.msk [vmem:[%s332 + $0x40] sm:$0xff] %vm1392, %v7329
      %7386 = vst.msk [vmem:[%s332 + $0x48] sm:$0x1] %vm7377, %v7251
      %7387 = vst.msk [vmem:[%s332 + $0x50] sm:$0xff] %vm1392, %v7336
      %7388 = vst.msk [vmem:[%s332 + $0x58] sm:$0x1] %vm7377, %v7260
      %7389 = vst.msk [vmem:[%s332 + $0x60] sm:$0xff] %vm1392, %v7343
      %7390 = vst.msk [vmem:[%s332 + $0x68] sm:$0x1] %vm7377, %v7269
      %7391 = vst.msk [vmem:[%s332 + $0x70] sm:$0xff] %vm1392, %v7350
      %7392 = vst.msk [vmem:[%s332 + $0x78] sm:$0x1] %vm7377, %v7278
      %7393 = vst.msk [vmem:[%s332 + $0x80] sm:$0xff] %vm1392, %v7357
      %7394 = vst.msk [vmem:[%s332 + $0x88] sm:$0x1] %vm7377, %v7287
      %p7395 = scmp.lt.s32.totalorder %s20, 1
      %s7396 = scalar_select %p7395, %s20, 1
      %s7397 = smul.addr %s7396, 18
      %s7398 = smul.addr %s7397, 8
      %s7399 = scalar_lea.vmem %s9, %s7398
      // Predicated region
      $region57: #{tpu_custom_call.1} parent=55 // pred_check
        %p7400 = pneg %p232
      $region58: #{tpu_custom_call.1} parent=55 // pred_check_branch
        %7402 = sbr.rel (%p7400) target = $region60
      $region59: #{tpu_custom_call.1} parent=55 // pred_region
        _
      $region60: #{tpu_custom_call.1} parent=55 // pred_fallthru
        _
    $region56: #{tpu_custom_call.1} parent=5 // pred_fallthru
      _
    %p7403 = scmp.le.s32.totalorder 2, %s15
    // Predicated region
    $region61: #{tpu_custom_call.1} parent=5 // pred_check
      %p7404 = pneg %p7403
    $region62: #{tpu_custom_call.1} parent=5 // pred_check_branch
      %7406 = sbr.rel (%p7404) target = $region64
    $region63: #{tpu_custom_call.1} parent=5 // pred_region
      %s7407 = ssub.s32 %s15, 2
      // Predicated region
      $region65: #{tpu_custom_call.1} parent=63 // pred_check
        %p7408 = pneg %p238
      $region66: #{tpu_custom_call.1} parent=63 // pred_check_branch
        %7410 = sbr.rel (%p7408) target = $region68
      $region67: #{tpu_custom_call.1} parent=63 // pred_region
        %p7411 = scmp.lt.s32.totalorder %s21, 1
        %s7412 = scalar_select %p7411, %s21, 1
        %s7413 = smul.addr %s7412, 18
        %s7414 = smul.addr %s7413, 8
        %s7415 = scalar_lea.vmem %s9, %s7414
      $region68: #{tpu_custom_call.1} parent=63 // pred_fallthru
        _
    $region64: #{tpu_custom_call.1} parent=5 // pred_fallthru
      _
  $region6: #{tpu_custom_call.1} parent=0 // loop_footer
    %s19 = sadd.s32 1, %s15
  $region7: #{tpu_custom_call.1} parent=0 // loop_footer_branch
    %14 = sbr.rel target = $region3
  $region8: #{tpu_custom_call.1} parent=0 // loop_exit
    _

</llo_original>
